<compile_context>
chip_gen: v6e
topology: v6e:2x2x1
jax: 0.10.0
libtpu: 0.0.40
codegen_flags: <defaults>
</compile_context>

<pallas_src>
import functools

import jax
import jax.numpy as jnp
from jax import lax
from jax.experimental import pallas as pl
from jax.experimental.pallas import tpu as pltpu


# --------------------------------- kernel ------------------------------------

def _crb_kernel(x_ref, cond_ref, pg_ref, pgt_ref,
                w1_ref, b1_ref, g1_ref, be1_ref,
                w2_ref, b2_ref, g2_ref, be2_ref,
                wcs_ref, bcs_ref, wcb_ref, bcb_ref,
                wr_ref, br_ref,
                out_ref,
                *, n_groups, ksize, horizon, batch_tile, eps=1e-5):
    f32 = jnp.float32
    R, C_in = x_ref.shape                      # R = batch_tile * horizon
    C_out = out_ref.shape[1]
    H = horizon
    Bt = batch_tile
    K = ksize
    pad = K // 2
    cg = C_out // n_groups
    inv_n = 1.0 / float(H * cg)
    B_all = cond_ref.shape[0]

    x = x_ref[...].astype(f32)                 # (R, C_in) channels on lanes

    # per-row time index: zero 'same' padding + no cross-batch leakage
    t_idx = lax.broadcasted_iota(jnp.int32, (R, 1), 0) % H

    def mish(v):
        # mish(v) = v*tanh(softplus(v)) = v*(u^2-1)/(u^2+1), u = 1 + exp(v)
        u = 1.0 + jnp.exp(jnp.minimum(v, 20.0))     # clamp guards exp overflow
        u2 = u * u
        den = u2 + 1.0
        r = pl.reciprocal(den, approx=True)         # EUP slot
        r = r * (2.0 - den * r)                     # one Newton step -> ~exact
        return v * (u2 - 1.0) * r

    def conv1d_same(v, w_ref, b_ref, ci):
        # K accumulated tap-dots (never materializes an (R, K*ci) stack);
        # taps built with pltpu.roll (XLU) + boundary masks, MXU in weight dtype.
        acc = None
        for k in range(K):
            d = k - pad
            if d == 0:
                tap = v
            else:
                tap = pltpu.roll(v, (-d) % R, axis=0)            # f32 sublane roll
                ok = jnp.logical_and(t_idx + d >= 0, t_idx + d < H)
                tap = jnp.where(ok, tap, 0.0)
            wk = w_ref[k * ci:(k + 1) * ci, :]                   # static ref slice
            contrib = jnp.dot(tap.astype(wk.dtype), wk,
                              preferred_element_type=f32)
            acc = contrib if acc is None else acc + contrib
        return acc + b_ref[...].astype(f32)

    def group_norm(h, gamma_ref, beta_ref):
        # per-(batch, group) stats: time reduce on the XLU, tiny group dots on
        # the MXU, broadcast back per-batch via (Bt,1,C) reshape (no M=2R dots).
        h3 = h.reshape(Bt, H, C_out)
        sc = jnp.sum(h3, axis=1)                                  # (Bt, C) sum
        qc = jnp.sum(h3 * h3, axis=1)                             # (Bt, C) sum sq
        sg = jnp.dot(jnp.concatenate([sc, qc], axis=0), pg_ref[...],
                     preferred_element_type=f32)                  # (2Bt, G)
        mean = sg[:Bt] * inv_n
        var = jnp.maximum(sg[Bt:] * inv_n - mean * mean, 0.0)     # guard cancel
        inv = lax.rsqrt(var + eps)
        ac = jnp.concatenate([inv, -mean * inv], axis=0)          # (2Bt, G)
        pc = jnp.dot(ac, pgt_ref[...], preferred_element_type=f32)  # (2Bt, C)
        gamma = gamma_ref[...].astype(f32)
        beta = beta_ref[...].astype(f32)
        mul = (pc[:Bt] * gamma).reshape(Bt, 1, C_out)
        add = (pc[Bt:] * gamma + beta).reshape(Bt, 1, C_out)
        return (h3 * mul + add).reshape(R, C_out)

    # ---- block 0: Conv1d(same) -> GroupNorm -> Mish -------------------------
    h = conv1d_same(x, w1_ref, b1_ref, C_in)
    h = mish(group_norm(h, g1_ref, be1_ref))

    # ---- FiLM conditioning: Mish -> Linear (pre-split scale/bias weights) ---
    # pick this tile's Bt cond rows from the full (untiled) cond block
    i = pl.program_id(0)
    bi = lax.broadcasted_iota(jnp.int32, (Bt, B_all), 1)
    bj = lax.broadcasted_iota(jnp.int32, (Bt, B_all), 0)
    sel = (bi == bj + i * Bt).astype(f32)                         # (Bt, B_all)
    cm = mish(jnp.dot(sel, cond_ref[...].astype(f32),
                      preferred_element_type=f32))                # (Bt, cond_dim)
    wcs = wcs_ref[...]
    wcb = wcb_ref[...]
    scale = (jnp.dot(cm.astype(wcs.dtype), wcs, preferred_element_type=f32)
             + bcs_ref[...].astype(f32))                          # (Bt, C_out)
    bias = (jnp.dot(cm.astype(wcb.dtype), wcb, preferred_element_type=f32)
            + bcb_ref[...].astype(f32))                           # (Bt, C_out)
    h = (h.reshape(Bt, H, C_out) * scale.reshape(Bt, 1, C_out)
         + bias.reshape(Bt, 1, C_out)).reshape(R, C_out)

    # ---- block 1: Conv1d(same) -> GroupNorm -> Mish --------------------------
    o = conv1d_same(h, w2_ref, b2_ref, C_out)
    o = mish(group_norm(o, g2_ref, be2_ref))

    # ---- residual 1x1 conv ---------------------------------------------------
    wr = wr_ref[...]
    res = (jnp.dot(x.astype(wr.dtype), wr, preferred_element_type=f32)
           + br_ref[...].astype(f32))

    out_ref[...] = (o + res).astype(out_ref.dtype)


# -------------------------------- wrapper ------------------------------------

def conditional_residual_block_1d(x, cond, params, *, n_groups=8, kernel_size=3,
                                  cond_predict_scale=True, batch_tile=None,
                                  matmul_dtype=jnp.bfloat16):
    """x: [B, C_in, H] (PyTorch NCH), cond: [B, cond_dim] -> [B, C_out, H]."""
    B, C_in, H = x.shape
    K, C_out, _ = params["w1"].shape
    assert K == kernel_size
    cond_dim = cond.shape[1]
    cond_channels = params["wc"].shape[0]
    assert C_out % n_groups == 0
    if cond_predict_scale:
        assert cond_channels == 2 * C_out, (cond_channels, C_out)
    else:
        assert cond_channels == C_out, (cond_channels, C_out)

    f32 = jnp.float32
    md = matmul_dtype

    # ---- VMEM-aware batch tiling --------------------------------------------
    if batch_tile is None:
        per_row = 4 * (3 * C_in + 8 * C_out)              # rough live f32 B/row
        cap = max(1, (24 << 20) // max(per_row * H, 1))   # ~24 MiB act. budget
        bt = min(B, cap)
        if B >= 2:                                        # grid >= 2 (v7x: 2 TCs)
            bt = min(bt, -(-B // 2))
        while (bt * H) % 8 != 0 and bt < B:               # 8-sublane aligned block
            bt += 1
        batch_tile = max(bt, 1)
    n_tiles = -(-B // batch_tile)                         # cdiv
    B_pad = n_tiles * batch_tile
    R = batch_tile * H

    # lane-dense layout: rows = batch*time on sublanes, channels on lanes
    x2 = jnp.transpose(x, (0, 2, 1)).reshape(B * H, C_in)         # native dtype
    cond2 = cond.astype(f32)                                       # module does cond.float()
    if B_pad != B:                                                  # pad tail batches
        x2 = jnp.pad(x2, ((0, (B_pad - B) * H), (0, 0)))
        cond2 = jnp.pad(cond2, ((0, B_pad - B), (0, 0)))

    def stack_w(w):  # (K, Co, Ci) -> (K*Ci, Co): tap k occupies rows [k*Ci,(k+1)*Ci)
        K_, Co_, Ci_ = w.shape
        return jnp.transpose(w, (0, 2, 1)).reshape(K_ * Ci_, Co_).astype(md)

    def row(v):      # (C, 1) -> (1, C)
        return v.reshape(1, -1).astype(f32)

    w1s, w2s = stack_w(params["w1"]), stack_w(params["w2"])
    b1, g1, be1 = row(params["b1"]), row(params["g1"]), row(params["be1"])
    b2, g2, be2 = row(params["b2"]), row(params["g2"]), row(params["be2"])
    wr = jnp.transpose(params["wr"]).astype(md)                    # (C_in, C_out)
    br = row(params["br"])

    wc = params["wc"]
    bc = params["bc"].reshape(-1).astype(f32)
    if cond_predict_scale:
        wcs = jnp.transpose(wc[:C_out]).astype(md)                 # (cond_dim, C_out)
        wcb = jnp.transpose(wc[C_out:]).astype(md)
        bcs = bc[:C_out].reshape(1, -1)
        bcb = bc[C_out:].reshape(1, -1)
    else:
        # unified FiLM path: scale == 1, bias == embed  =>  h + embed
        wcs = jnp.zeros((cond_dim, C_out), md)
        bcs = jnp.ones((1, C_out), f32)
        wcb = jnp.transpose(wc).astype(md)
        bcb = bc.reshape(1, -1)

    # group one-hot maps, built once (hoisted out of the per-grid-step body)
    cg = C_out // n_groups
    pg = (jnp.arange(C_out)[:, None] // cg ==
          jnp.arange(n_groups)[None, :]).astype(f32)               # (C_out, G)
    pgt = jnp.transpose(pg)                                        # (G, C_out)

    weights = (w1s, b1, g1, be1, w2s, b2, g2, be2,
               wcs, bcs, wcb, bcb, wr, br)
    invariants = (cond2, pg, pgt) + weights
    args = (x2,) + invariants

    kernel = functools.partial(_crb_kernel, n_groups=n_groups, ksize=K,
                               horizon=H, batch_tile=batch_tile)

    # explicit VMEM sizing from the actual block sizes
    w_bytes = sum(int(a.size) * a.dtype.itemsize for a in invariants)
    blk_bytes = 2 * R * (C_in * x2.dtype.itemsize + C_out * 4)     # dbl-buf I/O blocks
    tmp_bytes = 4 * R * (2 * C_in + 6 * C_out)                     # live f32 temporaries
    vmem_limit = int(min(max(blk_bytes + 2 * w_bytes + tmp_bytes + (8 << 20),
                             32 << 20), 64 << 20))

    out_dtype = x.dtype

    def build(single_buffer_weights):
        def inv_spec(a):  # grid-invariant block: whole array, block index (0, ...)
            nd = a.ndim
            if single_buffer_weights:
                return pl.BlockSpec(a.shape, lambda i, _nd=nd: (0,) * _nd,
                                    pipeline_mode=pl.Buffered(1))
            return pl.BlockSpec(a.shape, lambda i, _nd=nd: (0,) * _nd)

        in_specs = [pl.BlockSpec((R, C_in), lambda i: (i, 0))]
        in_specs += [inv_spec(a) for a in invariants]
        out_spec = pl.BlockSpec((R, C_out), lambda i: (i, 0))

        return pl.pallas_call(
            kernel,
            out_shape=jax.ShapeDtypeStruct((B_pad * H, C_out), out_dtype),
            grid_spec=pltpu.PrefetchScalarGridSpec(
                num_scalar_prefetch=0,
                grid=(n_tiles,),
                in_specs=in_specs,
                out_specs=out_spec),
            compiler_params=pltpu.CompilerParams(
                dimension_semantics=("parallel",),
                vmem_limit_bytes=vmem_limit),
        )

    try:
        out2 = jax.block_until_ready(build(True)(*args))
    except Exception:
        # pipeline_mode=pl.Buffered(1) not supported on this jax/libtpu build:
        # fall back to default (double-buffered) invariant specs.
        out2 = jax.block_until_ready(build(False)(*args))

    out2 = out2[:B * H]
    # back to PyTorch NCH layout
    return jnp.transpose(out2.reshape(B, H, C_out), (0, 2, 1))


# ------------------------- pure-JAX reference check --------------------------

def _reference(x, cond, params, *, n_groups=8, cond_predict_scale=True, eps=1e-5):
    def mish(v):
        return v * jnp.tanh(jax.nn.softplus(v))

    def conv1d(v, w, b):
        w_ = jnp.transpose(w, (1, 2, 0))   # (K,Co,Ci) -> OIH (Co,Ci,K)
        pad = w.shape[0] // 2
        out = lax.conv_general_dilated(
            v, w_, window_strides=(1,), padding=[(pad, pad)],
            dimension_numbers=("NCH", "OIH", "NCH"))
        return out + b.reshape(1, -1, 1)

    def gn(v, gamma, beta):
        B, C, H = v.shape
        cg = C // n_groups
        vg = v.reshape(B, n_groups, cg * H)
        m = vg.mean(-1, keepdims=True)
        var = ((vg - m) ** 2).mean(-1, keepdims=True)
        vn = ((vg - m) / jnp.sqrt(var + eps)).reshape(B, C, H)
        return vn * gamma.reshape(1, -1, 1) + beta.reshape(1, -1, 1)

    C_out = params["w1"].shape[1]
    h = mish(gn(conv1d(x, params["w1"], params["b1"].ravel()),
                params["g1"].ravel(), params["be1"].ravel()))
    embed = mish(cond) @ params["wc"].T + params["bc"].ravel()
    if cond_predict_scale:
        h = embed[:, :C_out, None] * h + embed[:, C_out:, None]
    else:
        h = h + embed[:, :, None]
    o = mish(gn(conv1d(h, params["w2"], params["b2"].ravel()),
                params["g2"].ravel(), params["be2"].ravel()))
    res = jnp.einsum("oc,bch->boh", params["wr"], x) + params["br"].reshape(1, -1, 1)
    return o + res


# --------------------------------- main ---------------------------------------

if __name__ == "__main__":
    B, C_in, C_out, H = 4, 8, 16, 16
    cond_dim, n_groups, K = 12, 8, 3
    cond_predict_scale = True
    cond_channels = C_out * 2 if cond_predict_scale else C_out

    key = jax.random.PRNGKey(0)
    keys = jax.random.split(key, 16)

    def rnd(k, shape, scale=0.1):
        return scale * jax.random.normal(k, shape, dtype=jnp.float32)

    params = {
        "w1": rnd(keys[0], (K, C_out, C_in)),
        "b1": rnd(keys[1], (C_out, 1)),
        "g1": 1.0 + rnd(keys[2], (C_out, 1)),
        "be1": rnd(keys[3], (C_out, 1)),
        "w2": rnd(keys[4], (K, C_out, C_out)),
        "b2": rnd(keys[5], (C_out, 1)),
        "g2": 1.0 + rnd(keys[6], (C_out, 1)),
        "be2": rnd(keys[7], (C_out, 1)),
        "wc": rnd(keys[8], (cond_channels, cond_dim)),
        "bc": rnd(keys[9], (cond_channels, 1)),
        "wr": rnd(keys[10], (C_out, C_in)),
        "br": rnd(keys[11], (C_out, 1)),
    }

    x = jax.random.normal(keys[12], (B, C_in, H), dtype=jnp.float32)
    cond = jax.random.normal(keys[13], (B, cond_dim), dtype=jnp.float32)

    ref = _reference(x, cond, params, n_groups=n_groups,
                     cond_predict_scale=cond_predict_scale)

    # f32 MXU operands: tight numerical check of the kernel math
    out_f32 = conditional_residual_block_1d(
        x, cond, params, n_groups=n_groups, kernel_size=K,
        cond_predict_scale=cond_predict_scale, matmul_dtype=jnp.float32)
    out_f32 = jax.block_until_ready(out_f32)
    assert out_f32.shape == (B, C_out, H), out_f32.shape
    err32 = float(jnp.max(jnp.abs(out_f32 - ref)))
    assert err32 < 2e-3, f"f32 max abs err {err32}"

    # default path: bf16 MXU operands (f32 accumulation), looser tolerance
    out_bf16 = conditional_residual_block_1d(
        x, cond, params, n_groups=n_groups, kernel_size=K,
        cond_predict_scale=cond_predict_scale)
    out_bf16 = jax.block_until_ready(out_bf16)
    assert out_bf16.shape == (B, C_out, H), out_bf16.shape
    err16 = float(jnp.max(jnp.abs(out_bf16 - ref)))
    assert err16 < 1.5e-1, f"bf16 max abs err {err16}"

    print("KERNEL_OK")
</pallas_src>

<mosaic_0001>
module attributes {stable_mosaic.version = 11 : i64} {
  func.func @_crb_kernel(%arg0: i32, %arg1: memref<32x8xf32, #tpu.memory_space<vmem>>, %arg2: memref<4x12xf32, #tpu.memory_space<vmem>>, %arg3: memref<16x8xf32, #tpu.memory_space<vmem>>, %arg4: memref<8x16xf32, #tpu.memory_space<vmem>>, %arg5: memref<24x16xf32, #tpu.memory_space<vmem>>, %arg6: memref<1x16xf32, #tpu.memory_space<vmem>>, %arg7: memref<1x16xf32, #tpu.memory_space<vmem>>, %arg8: memref<1x16xf32, #tpu.memory_space<vmem>>, %arg9: memref<48x16xf32, #tpu.memory_space<vmem>>, %arg10: memref<1x16xf32, #tpu.memory_space<vmem>>, %arg11: memref<1x16xf32, #tpu.memory_space<vmem>>, %arg12: memref<1x16xf32, #tpu.memory_space<vmem>>, %arg13: memref<12x16xf32, #tpu.memory_space<vmem>>, %arg14: memref<1x16xf32, #tpu.memory_space<vmem>>, %arg15: memref<12x16xf32, #tpu.memory_space<vmem>>, %arg16: memref<1x16xf32, #tpu.memory_space<vmem>>, %arg17: memref<8x16xf32, #tpu.memory_space<vmem>>, %arg18: memref<1x16xf32, #tpu.memory_space<vmem>>, %arg19: memref<32x16xf32, #tpu.memory_space<vmem>>) attributes {dimension_semantics = [#tpu.dimension_semantics<parallel>], iteration_bounds = array<i64: 2>, scalar_prefetch = 0 : i64, scratch_operands = 0 : i64, tpu.core_type = #tpu.core_type<tc>, window_params = [{transform_indices = @transform_0, window_bounds = array<i64: 32, 8>}, {pipeline_mode = #tpu.pipeline_mode<synchronous>, transform_indices = @transform_1, window_bounds = array<i64: 4, 12>}, {pipeline_mode = #tpu.pipeline_mode<synchronous>, transform_indices = @transform_2, window_bounds = array<i64: 16, 8>}, {pipeline_mode = #tpu.pipeline_mode<synchronous>, transform_indices = @transform_3, window_bounds = array<i64: 8, 16>}, {pipeline_mode = #tpu.pipeline_mode<synchronous>, transform_indices = @transform_4, window_bounds = array<i64: 24, 16>}, {pipeline_mode = #tpu.pipeline_mode<synchronous>, transform_indices = @transform_5, window_bounds = array<i64: 1, 16>}, {pipeline_mode = #tpu.pipeline_mode<synchronous>, transform_indices = @transform_6, window_bounds = array<i64: 1, 16>}, {pipeline_mode = #tpu.pipeline_mode<synchronous>, transform_indices = @transform_7, window_bounds = array<i64: 1, 16>}, {pipeline_mode = #tpu.pipeline_mode<synchronous>, transform_indices = @transform_8, window_bounds = array<i64: 48, 16>}, {pipeline_mode = #tpu.pipeline_mode<synchronous>, transform_indices = @transform_9, window_bounds = array<i64: 1, 16>}, {pipeline_mode = #tpu.pipeline_mode<synchronous>, transform_indices = @transform_10, window_bounds = array<i64: 1, 16>}, {pipeline_mode = #tpu.pipeline_mode<synchronous>, transform_indices = @transform_11, window_bounds = array<i64: 1, 16>}, {pipeline_mode = #tpu.pipeline_mode<synchronous>, transform_indices = @transform_12, window_bounds = array<i64: 12, 16>}, {pipeline_mode = #tpu.pipeline_mode<synchronous>, transform_indices = @transform_13, window_bounds = array<i64: 1, 16>}, {pipeline_mode = #tpu.pipeline_mode<synchronous>, transform_indices = @transform_14, window_bounds = array<i64: 12, 16>}, {pipeline_mode = #tpu.pipeline_mode<synchronous>, transform_indices = @transform_15, window_bounds = array<i64: 1, 16>}, {pipeline_mode = #tpu.pipeline_mode<synchronous>, transform_indices = @transform_16, window_bounds = array<i64: 8, 16>}, {pipeline_mode = #tpu.pipeline_mode<synchronous>, transform_indices = @transform_17, window_bounds = array<i64: 1, 16>}, {transform_indices = @transform_18, window_bounds = array<i64: 32, 16>}]} {
    %c0 = arith.constant 0 : index
    %c0_0 = arith.constant 0 : index
    %0 = vector.load %arg1[%c0, %c0_0] : memref<32x8xf32, #tpu.memory_space<vmem>>, vector<32x8xf32>
    %1 = tpu.iota {dimensions = array<i32: 0>} : vector<32x1xi32>
    %c16_i32 = arith.constant 16 : i32
    %c0_i32 = arith.constant 0 : i32
    %2 = arith.cmpi eq, %c16_i32, %c0_i32 : i32
    %c1_i32 = arith.constant 1 : i32
    %3 = arith.select %2, %c1_i32, %c16_i32 : i32
    %4 = vector.broadcast %3 : i32 to vector<32x1xi32>
    %5 = arith.remsi %1, %4 : vector<32x1xi32>
    %c0_i32_1 = arith.constant 0 : i32
    %6 = vector.broadcast %c0_i32_1 : i32 to vector<32x1xi32>
    %7 = arith.cmpi ne, %5, %6 : vector<32x1xi32>
    %c0_i32_2 = arith.constant 0 : i32
    %8 = vector.broadcast %c0_i32_2 : i32 to vector<32x1xi32>
    %9 = arith.cmpi slt, %5, %8 : vector<32x1xi32>
    %c0_i32_3 = arith.constant 0 : i32
    %10 = arith.cmpi slt, %3, %c0_i32_3 : i32
    %11 = vector.broadcast %10 : i1 to vector<32x1xi1>
    %12 = vector.broadcast %11 : vector<32x1xi1> to vector<32x1xi1>
    %13 = arith.xori %9, %12 : vector<32x1xi1>
    %14 = arith.andi %13, %7 : vector<32x1xi1>
    %15 = vector.broadcast %3 : i32 to vector<32x1xi32>
    %16 = arith.addi %5, %15 : vector<32x1xi32>
    %17 = arith.select %14, %16, %5 : vector<32x1xi1>, vector<32x1xi32>
    %c1_i32_4 = arith.constant 1 : i32
    %18 = tpu.dynamic_rotate %0 by %c1_i32_4 dim 0 : vector<32x8xf32>, i32 -> vector<32x8xf32>
    %c-1_i32 = arith.constant -1 : i32
    %19 = vector.broadcast %c-1_i32 : i32 to vector<32x1xi32>
    %20 = arith.addi %17, %19 : vector<32x1xi32>
    %c0_i32_5 = arith.constant 0 : i32
    %21 = vector.broadcast %c0_i32_5 : i32 to vector<32x1xi32>
    %22 = arith.cmpi sge, %20, %21 : vector<32x1xi32>
    %c-1_i32_6 = arith.constant -1 : i32
    %23 = vector.broadcast %c-1_i32_6 : i32 to vector<32x1xi32>
    %24 = arith.addi %17, %23 : vector<32x1xi32>
    %c16_i32_7 = arith.constant 16 : i32
    %25 = vector.broadcast %c16_i32_7 : i32 to vector<32x1xi32>
    %26 = arith.cmpi slt, %24, %25 : vector<32x1xi32>
    %27 = arith.andi %22, %26 : vector<32x1xi1>
    %cst = arith.constant 0.000000e+00 : f32
    %28 = vector.shape_cast %27 : vector<32x1xi1> to vector<32x1xi1>
    %29 = vector.broadcast %28 : vector<32x1xi1> to vector<32x8xi1>
    %30 = vector.broadcast %cst : f32 to vector<32x8xf32>
    %31 = arith.select %29, %18, %30 : vector<32x8xi1>, vector<32x8xf32>
    %c0_8 = arith.constant 0 : index
    %c0_9 = arith.constant 0 : index
    %32 = vector.load %arg5[%c0_8, %c0_9] : memref<24x16xf32, #tpu.memory_space<vmem>>, vector<8x16xf32>
    %cst_10 = arith.constant dense<0.000000e+00> : vector<32x16xf32>
    %33 = tpu.matmul %31, %32, %cst_10 {dimension_numbers = #tpu.dot_dimension_numbers<[1], [0], [0], [1], [0, 0, 1, 1], [], []>} : vector<32x8xf32>, vector<8x16xf32>, vector<32x16xf32> -> vector<32x16xf32>
    %c8 = arith.constant 8 : index
    %c0_11 = arith.constant 0 : index
    %34 = vector.load %arg5[%c8, %c0_11] : memref<24x16xf32, #tpu.memory_space<vmem>>, vector<8x16xf32>
    %cst_12 = arith.constant dense<0.000000e+00> : vector<32x16xf32>
    %35 = tpu.matmul %0, %34, %cst_12 {dimension_numbers = #tpu.dot_dimension_numbers<[1], [0], [0], [1], [0, 0, 1, 1], [], []>} : vector<32x8xf32>, vector<8x16xf32>, vector<32x16xf32> -> vector<32x16xf32>
    %36 = arith.addf %33, %35 : vector<32x16xf32>
    %c31_i32 = arith.constant 31 : i32
    %37 = tpu.dynamic_rotate %0 by %c31_i32 dim 0 : vector<32x8xf32>, i32 -> vector<32x8xf32>
    %c1_i32_13 = arith.constant 1 : i32
    %38 = vector.broadcast %c1_i32_13 : i32 to vector<32x1xi32>
    %39 = arith.addi %17, %38 : vector<32x1xi32>
    %c0_i32_14 = arith.constant 0 : i32
    %40 = vector.broadcast %c0_i32_14 : i32 to vector<32x1xi32>
    %41 = arith.cmpi sge, %39, %40 : vector<32x1xi32>
    %c1_i32_15 = arith.constant 1 : i32
    %42 = vector.broadcast %c1_i32_15 : i32 to vector<32x1xi32>
    %43 = arith.addi %17, %42 : vector<32x1xi32>
    %c16_i32_16 = arith.constant 16 : i32
    %44 = vector.broadcast %c16_i32_16 : i32 to vector<32x1xi32>
    %45 = arith.cmpi slt, %43, %44 : vector<32x1xi32>
    %46 = arith.andi %41, %45 : vector<32x1xi1>
    %cst_17 = arith.constant 0.000000e+00 : f32
    %47 = vector.shape_cast %46 : vector<32x1xi1> to vector<32x1xi1>
    %48 = vector.broadcast %47 : vector<32x1xi1> to vector<32x8xi1>
    %49 = vector.broadcast %cst_17 : f32 to vector<32x8xf32>
    %50 = arith.select %48, %37, %49 : vector<32x8xi1>, vector<32x8xf32>
    %c16 = arith.constant 16 : index
    %c0_18 = arith.constant 0 : index
    %51 = vector.load %arg5[%c16, %c0_18] : memref<24x16xf32, #tpu.memory_space<vmem>>, vector<8x16xf32>
    %cst_19 = arith.constant dense<0.000000e+00> : vector<32x16xf32>
    %52 = tpu.matmul %50, %51, %cst_19 {dimension_numbers = #tpu.dot_dimension_numbers<[1], [0], [0], [1], [0, 0, 1, 1], [], []>} : vector<32x8xf32>, vector<8x16xf32>, vector<32x16xf32> -> vector<32x16xf32>
    %53 = arith.addf %36, %52 : vector<32x16xf32>
    %c0_20 = arith.constant 0 : index
    %c0_21 = arith.constant 0 : index
    %54 = vector.load %arg6[%c0_20, %c0_21] : memref<1x16xf32, #tpu.memory_space<vmem>>, vector<1x16xf32>
    %55 = vector.broadcast %54 : vector<1x16xf32> to vector<32x16xf32>
    %56 = arith.addf %53, %55 : vector<32x16xf32>
    %57 = vector.shape_cast %56 : vector<32x16xf32> to vector<2x16x16xf32>
    %cst_22 = arith.constant dense<0.000000e+00> : vector<2x16xf32>
    %58 = vector.multi_reduction <add>, %57, %cst_22 [1] : vector<2x16x16xf32> to vector<2x16xf32>
    %59 = arith.mulf %57, %57 : vector<2x16x16xf32>
    %cst_23 = arith.constant dense<0.000000e+00> : vector<2x16xf32>
    %60 = vector.multi_reduction <add>, %59, %cst_23 [1] : vector<2x16x16xf32> to vector<2x16xf32>
    %61 = tpu.concatenate %58, %60 in 0 : vector<2x16xf32>, vector<2x16xf32> -> vector<4x16xf32>
    %c0_24 = arith.constant 0 : index
    %c0_25 = arith.constant 0 : index
    %62 = vector.load %arg3[%c0_24, %c0_25] : memref<16x8xf32, #tpu.memory_space<vmem>>, vector<16x8xf32>
    %cst_26 = arith.constant dense<0.000000e+00> : vector<4x8xf32>
    %63 = tpu.matmul %61, %62, %cst_26 {dimension_numbers = #tpu.dot_dimension_numbers<[1], [0], [0], [1], [0, 0, 1, 1], [], []>} : vector<4x16xf32>, vector<16x8xf32>, vector<4x8xf32> -> vector<4x8xf32>
    %64 = vector.extract_strided_slice %63 {offsets = [0, 0], sizes = [2, 8], strides = [1, 1]} : vector<4x8xf32> to vector<2x8xf32>
    %cst_27 = arith.constant 3.125000e-02 : f32
    %65 = vector.broadcast %cst_27 : f32 to vector<2x8xf32>
    %66 = arith.mulf %64, %65 : vector<2x8xf32>
    %67 = vector.extract_strided_slice %63 {offsets = [2, 0], sizes = [2, 8], strides = [1, 1]} : vector<4x8xf32> to vector<2x8xf32>
    %cst_28 = arith.constant 3.125000e-02 : f32
    %68 = vector.broadcast %cst_28 : f32 to vector<2x8xf32>
    %69 = arith.mulf %67, %68 : vector<2x8xf32>
    %70 = arith.mulf %66, %66 : vector<2x8xf32>
    %71 = arith.subf %69, %70 : vector<2x8xf32>
    %cst_29 = arith.constant 0.000000e+00 : f32
    %72 = vector.broadcast %cst_29 : f32 to vector<2x8xf32>
    %73 = arith.maximumf %71, %72 : vector<2x8xf32>
    %cst_30 = arith.constant 9.99999974E-6 : f32
    %74 = vector.broadcast %cst_30 : f32 to vector<2x8xf32>
    %75 = arith.addf %73, %74 : vector<2x8xf32>
    %76 = math.rsqrt %75 : vector<2x8xf32>
    %cst_31 = arith.constant 0.000000e+00 : f32
    %77 = vector.broadcast %cst_31 : f32 to vector<2x8xf32>
    %78 = arith.subf %77, %66 : vector<2x8xf32>
    %79 = arith.mulf %78, %76 : vector<2x8xf32>
    %80 = tpu.concatenate %76, %79 in 0 : vector<2x8xf32>, vector<2x8xf32> -> vector<4x8xf32>
    %c0_32 = arith.constant 0 : index
    %c0_33 = arith.constant 0 : index
    %81 = vector.load %arg4[%c0_32, %c0_33] : memref<8x16xf32, #tpu.memory_space<vmem>>, vector<8x16xf32>
    %cst_34 = arith.constant dense<0.000000e+00> : vector<4x16xf32>
    %82 = tpu.matmul %80, %81, %cst_34 {dimension_numbers = #tpu.dot_dimension_numbers<[1], [0], [0], [1], [0, 0, 1, 1], [], []>} : vector<4x8xf32>, vector<8x16xf32>, vector<4x16xf32> -> vector<4x16xf32>
    %c0_35 = arith.constant 0 : index
    %c0_36 = arith.constant 0 : index
    %83 = vector.load %arg7[%c0_35, %c0_36] : memref<1x16xf32, #tpu.memory_space<vmem>>, vector<1x16xf32>
    %c0_37 = arith.constant 0 : index
    %c0_38 = arith.constant 0 : index
    %84 = vector.load %arg8[%c0_37, %c0_38] : memref<1x16xf32, #tpu.memory_space<vmem>>, vector<1x16xf32>
    %85 = vector.extract_strided_slice %82 {offsets = [0, 0], sizes = [2, 16], strides = [1, 1]} : vector<4x16xf32> to vector<2x16xf32>
    %86 = vector.broadcast %83 : vector<1x16xf32> to vector<2x16xf32>
    %87 = arith.mulf %85, %86 : vector<2x16xf32>
    %88 = vector.shape_cast %87 : vector<2x16xf32> to vector<2x1x16xf32>
    %89 = vector.extract_strided_slice %82 {offsets = [2, 0], sizes = [2, 16], strides = [1, 1]} : vector<4x16xf32> to vector<2x16xf32>
    %90 = vector.broadcast %83 : vector<1x16xf32> to vector<2x16xf32>
    %91 = arith.mulf %89, %90 : vector<2x16xf32>
    %92 = vector.broadcast %84 : vector<1x16xf32> to vector<2x16xf32>
    %93 = arith.addf %91, %92 : vector<2x16xf32>
    %94 = vector.shape_cast %93 : vector<2x16xf32> to vector<2x1x16xf32>
    %95 = vector.broadcast %88 : vector<2x1x16xf32> to vector<2x16x16xf32>
    %96 = arith.mulf %57, %95 : vector<2x16x16xf32>
    %97 = vector.broadcast %94 : vector<2x1x16xf32> to vector<2x16x16xf32>
    %98 = arith.addf %96, %97 : vector<2x16x16xf32>
    %99 = vector.shape_cast %98 : vector<2x16x16xf32> to vector<32x16xf32>
    %cst_39 = arith.constant 2.000000e+01 : f32
    %100 = vector.broadcast %cst_39 : f32 to vector<32x16xf32>
    %101 = arith.minimumf %99, %100 : vector<32x16xf32>
    %102 = math.exp %101 : vector<32x16xf32>
    %cst_40 = arith.constant 1.000000e+00 : f32
    %103 = vector.broadcast %cst_40 : f32 to vector<32x16xf32>
    %104 = arith.addf %103, %102 : vector<32x16xf32>
    %105 = arith.mulf %104, %104 : vector<32x16xf32>
    %cst_41 = arith.constant 1.000000e+00 : f32
    %106 = vector.broadcast %cst_41 : f32 to vector<32x16xf32>
    %107 = arith.addf %105, %106 : vector<32x16xf32>
    %108 = tpu.reciprocal %107 {approx = true} : vector<32x16xf32> -> vector<32x16xf32>
    %109 = arith.mulf %107, %108 : vector<32x16xf32>
    %cst_42 = arith.constant 2.000000e+00 : f32
    %110 = vector.broadcast %cst_42 : f32 to vector<32x16xf32>
    %111 = arith.subf %110, %109 : vector<32x16xf32>
    %112 = arith.mulf %108, %111 : vector<32x16xf32>
    %cst_43 = arith.constant 1.000000e+00 : f32
    %113 = vector.broadcast %cst_43 : f32 to vector<32x16xf32>
    %114 = arith.subf %105, %113 : vector<32x16xf32>
    %115 = arith.mulf %99, %114 : vector<32x16xf32>
    %116 = arith.mulf %115, %112 : vector<32x16xf32>
    %117 = tpu.iota {dimensions = array<i32: 1>} : vector<2x4xi32>
    %118 = tpu.iota {dimensions = array<i32: 0>} : vector<2x4xi32>
    %c2_i32 = arith.constant 2 : i32
    %119 = arith.muli %arg0, %c2_i32 : i32
    %120 = vector.broadcast %119 : i32 to vector<2x4xi32>
    %121 = arith.addi %118, %120 : vector<2x4xi32>
    %122 = arith.cmpi eq, %117, %121 : vector<2x4xi32>
    %123 = arith.extui %122 : vector<2x4xi1> to vector<2x4xi32>
    %124 = arith.sitofp %123 : vector<2x4xi32> to vector<2x4xf32>
    %c0_44 = arith.constant 0 : index
    %c0_45 = arith.constant 0 : index
    %125 = vector.load %arg2[%c0_44, %c0_45] : memref<4x12xf32, #tpu.memory_space<vmem>>, vector<4x12xf32>
    %cst_46 = arith.constant dense<0.000000e+00> : vector<2x12xf32>
    %126 = tpu.matmul %124, %125, %cst_46 {dimension_numbers = #tpu.dot_dimension_numbers<[1], [0], [0], [1], [0, 0, 1, 1], [], []>} : vector<2x4xf32>, vector<4x12xf32>, vector<2x12xf32> -> vector<2x12xf32>
    %cst_47 = arith.constant 2.000000e+01 : f32
    %127 = vector.broadcast %cst_47 : f32 to vector<2x12xf32>
    %128 = arith.minimumf %126, %127 : vector<2x12xf32>
    %129 = math.exp %128 : vector<2x12xf32>
    %cst_48 = arith.constant 1.000000e+00 : f32
    %130 = vector.broadcast %cst_48 : f32 to vector<2x12xf32>
    %131 = arith.addf %130, %129 : vector<2x12xf32>
    %132 = arith.mulf %131, %131 : vector<2x12xf32>
    %cst_49 = arith.constant 1.000000e+00 : f32
    %133 = vector.broadcast %cst_49 : f32 to vector<2x12xf32>
    %134 = arith.addf %132, %133 : vector<2x12xf32>
    %135 = tpu.reciprocal %134 {approx = true} : vector<2x12xf32> -> vector<2x12xf32>
    %136 = arith.mulf %134, %135 : vector<2x12xf32>
    %cst_50 = arith.constant 2.000000e+00 : f32
    %137 = vector.broadcast %cst_50 : f32 to vector<2x12xf32>
    %138 = arith.subf %137, %136 : vector<2x12xf32>
    %139 = arith.mulf %135, %138 : vector<2x12xf32>
    %cst_51 = arith.constant 1.000000e+00 : f32
    %140 = vector.broadcast %cst_51 : f32 to vector<2x12xf32>
    %141 = arith.subf %132, %140 : vector<2x12xf32>
    %142 = arith.mulf %126, %141 : vector<2x12xf32>
    %143 = arith.mulf %142, %139 : vector<2x12xf32>
    %c0_52 = arith.constant 0 : index
    %c0_53 = arith.constant 0 : index
    %144 = vector.load %arg13[%c0_52, %c0_53] : memref<12x16xf32, #tpu.memory_space<vmem>>, vector<12x16xf32>
    %c0_54 = arith.constant 0 : index
    %c0_55 = arith.constant 0 : index
    %145 = vector.load %arg15[%c0_54, %c0_55] : memref<12x16xf32, #tpu.memory_space<vmem>>, vector<12x16xf32>
    %cst_56 = arith.constant dense<0.000000e+00> : vector<2x16xf32>
    %146 = tpu.matmul %143, %144, %cst_56 {dimension_numbers = #tpu.dot_dimension_numbers<[1], [0], [0], [1], [0, 0, 1, 1], [], []>} : vector<2x12xf32>, vector<12x16xf32>, vector<2x16xf32> -> vector<2x16xf32>
    %c0_57 = arith.constant 0 : index
    %c0_58 = arith.constant 0 : index
    %147 = vector.load %arg14[%c0_57, %c0_58] : memref<1x16xf32, #tpu.memory_space<vmem>>, vector<1x16xf32>
    %148 = vector.broadcast %147 : vector<1x16xf32> to vector<2x16xf32>
    %149 = arith.addf %146, %148 : vector<2x16xf32>
    %cst_59 = arith.constant dense<0.000000e+00> : vector<2x16xf32>
    %150 = tpu.matmul %143, %145, %cst_59 {dimension_numbers = #tpu.dot_dimension_numbers<[1], [0], [0], [1], [0, 0, 1, 1], [], []>} : vector<2x12xf32>, vector<12x16xf32>, vector<2x16xf32> -> vector<2x16xf32>
    %c0_60 = arith.constant 0 : index
    %c0_61 = arith.constant 0 : index
    %151 = vector.load %arg16[%c0_60, %c0_61] : memref<1x16xf32, #tpu.memory_space<vmem>>, vector<1x16xf32>
    %152 = vector.broadcast %151 : vector<1x16xf32> to vector<2x16xf32>
    %153 = arith.addf %150, %152 : vector<2x16xf32>
    %154 = vector.shape_cast %116 : vector<32x16xf32> to vector<2x16x16xf32>
    %155 = vector.shape_cast %149 : vector<2x16xf32> to vector<2x1x16xf32>
    %156 = vector.broadcast %155 : vector<2x1x16xf32> to vector<2x16x16xf32>
    %157 = arith.mulf %154, %156 : vector<2x16x16xf32>
    %158 = vector.shape_cast %153 : vector<2x16xf32> to vector<2x1x16xf32>
    %159 = vector.broadcast %158 : vector<2x1x16xf32> to vector<2x16x16xf32>
    %160 = arith.addf %157, %159 : vector<2x16x16xf32>
    %161 = vector.shape_cast %160 : vector<2x16x16xf32> to vector<32x16xf32>
    %c1_i32_62 = arith.constant 1 : i32
    %162 = tpu.dynamic_rotate %161 by %c1_i32_62 dim 0 : vector<32x16xf32>, i32 -> vector<32x16xf32>
    %c-1_i32_63 = arith.constant -1 : i32
    %163 = vector.broadcast %c-1_i32_63 : i32 to vector<32x1xi32>
    %164 = arith.addi %17, %163 : vector<32x1xi32>
    %c0_i32_64 = arith.constant 0 : i32
    %165 = vector.broadcast %c0_i32_64 : i32 to vector<32x1xi32>
    %166 = arith.cmpi sge, %164, %165 : vector<32x1xi32>
    %c-1_i32_65 = arith.constant -1 : i32
    %167 = vector.broadcast %c-1_i32_65 : i32 to vector<32x1xi32>
    %168 = arith.addi %17, %167 : vector<32x1xi32>
    %c16_i32_66 = arith.constant 16 : i32
    %169 = vector.broadcast %c16_i32_66 : i32 to vector<32x1xi32>
    %170 = arith.cmpi slt, %168, %169 : vector<32x1xi32>
    %171 = arith.andi %166, %170 : vector<32x1xi1>
    %cst_67 = arith.constant 0.000000e+00 : f32
    %172 = vector.shape_cast %171 : vector<32x1xi1> to vector<32x1xi1>
    %173 = vector.broadcast %172 : vector<32x1xi1> to vector<32x16xi1>
    %174 = vector.broadcast %cst_67 : f32 to vector<32x16xf32>
    %175 = arith.select %173, %162, %174 : vector<32x16xi1>, vector<32x16xf32>
    %c0_68 = arith.constant 0 : index
    %c0_69 = arith.constant 0 : index
    %176 = vector.load %arg9[%c0_68, %c0_69] : memref<48x16xf32, #tpu.memory_space<vmem>>, vector<16x16xf32>
    %cst_70 = arith.constant dense<0.000000e+00> : vector<32x16xf32>
    %177 = tpu.matmul %175, %176, %cst_70 {dimension_numbers = #tpu.dot_dimension_numbers<[1], [0], [0], [1], [0, 0, 1, 1], [], []>} : vector<32x16xf32>, vector<16x16xf32>, vector<32x16xf32> -> vector<32x16xf32>
    %c16_71 = arith.constant 16 : index
    %c0_72 = arith.constant 0 : index
    %178 = vector.load %arg9[%c16_71, %c0_72] : memref<48x16xf32, #tpu.memory_space<vmem>>, vector<16x16xf32>
    %cst_73 = arith.constant dense<0.000000e+00> : vector<32x16xf32>
    %179 = tpu.matmul %161, %178, %cst_73 {dimension_numbers = #tpu.dot_dimension_numbers<[1], [0], [0], [1], [0, 0, 1, 1], [], []>} : vector<32x16xf32>, vector<16x16xf32>, vector<32x16xf32> -> vector<32x16xf32>
    %180 = arith.addf %177, %179 : vector<32x16xf32>
    %c31_i32_74 = arith.constant 31 : i32
    %181 = tpu.dynamic_rotate %161 by %c31_i32_74 dim 0 : vector<32x16xf32>, i32 -> vector<32x16xf32>
    %c1_i32_75 = arith.constant 1 : i32
    %182 = vector.broadcast %c1_i32_75 : i32 to vector<32x1xi32>
    %183 = arith.addi %17, %182 : vector<32x1xi32>
    %c0_i32_76 = arith.constant 0 : i32
    %184 = vector.broadcast %c0_i32_76 : i32 to vector<32x1xi32>
    %185 = arith.cmpi sge, %183, %184 : vector<32x1xi32>
    %c1_i32_77 = arith.constant 1 : i32
    %186 = vector.broadcast %c1_i32_77 : i32 to vector<32x1xi32>
    %187 = arith.addi %17, %186 : vector<32x1xi32>
    %c16_i32_78 = arith.constant 16 : i32
    %188 = vector.broadcast %c16_i32_78 : i32 to vector<32x1xi32>
    %189 = arith.cmpi slt, %187, %188 : vector<32x1xi32>
    %190 = arith.andi %185, %189 : vector<32x1xi1>
    %cst_79 = arith.constant 0.000000e+00 : f32
    %191 = vector.shape_cast %190 : vector<32x1xi1> to vector<32x1xi1>
    %192 = vector.broadcast %191 : vector<32x1xi1> to vector<32x16xi1>
    %193 = vector.broadcast %cst_79 : f32 to vector<32x16xf32>
    %194 = arith.select %192, %181, %193 : vector<32x16xi1>, vector<32x16xf32>
    %c32 = arith.constant 32 : index
    %c0_80 = arith.constant 0 : index
    %195 = vector.load %arg9[%c32, %c0_80] : memref<48x16xf32, #tpu.memory_space<vmem>>, vector<16x16xf32>
    %cst_81 = arith.constant dense<0.000000e+00> : vector<32x16xf32>
    %196 = tpu.matmul %194, %195, %cst_81 {dimension_numbers = #tpu.dot_dimension_numbers<[1], [0], [0], [1], [0, 0, 1, 1], [], []>} : vector<32x16xf32>, vector<16x16xf32>, vector<32x16xf32> -> vector<32x16xf32>
    %197 = arith.addf %180, %196 : vector<32x16xf32>
    %c0_82 = arith.constant 0 : index
    %c0_83 = arith.constant 0 : index
    %198 = vector.load %arg10[%c0_82, %c0_83] : memref<1x16xf32, #tpu.memory_space<vmem>>, vector<1x16xf32>
    %199 = vector.broadcast %198 : vector<1x16xf32> to vector<32x16xf32>
    %200 = arith.addf %197, %199 : vector<32x16xf32>
    %201 = vector.shape_cast %200 : vector<32x16xf32> to vector<2x16x16xf32>
    %cst_84 = arith.constant dense<0.000000e+00> : vector<2x16xf32>
    %202 = vector.multi_reduction <add>, %201, %cst_84 [1] : vector<2x16x16xf32> to vector<2x16xf32>
    %203 = arith.mulf %201, %201 : vector<2x16x16xf32>
    %cst_85 = arith.constant dense<0.000000e+00> : vector<2x16xf32>
    %204 = vector.multi_reduction <add>, %203, %cst_85 [1] : vector<2x16x16xf32> to vector<2x16xf32>
    %205 = tpu.concatenate %202, %204 in 0 : vector<2x16xf32>, vector<2x16xf32> -> vector<4x16xf32>
    %c0_86 = arith.constant 0 : index
    %c0_87 = arith.constant 0 : index
    %206 = vector.load %arg3[%c0_86, %c0_87] : memref<16x8xf32, #tpu.memory_space<vmem>>, vector<16x8xf32>
    %cst_88 = arith.constant dense<0.000000e+00> : vector<4x8xf32>
    %207 = tpu.matmul %205, %206, %cst_88 {dimension_numbers = #tpu.dot_dimension_numbers<[1], [0], [0], [1], [0, 0, 1, 1], [], []>} : vector<4x16xf32>, vector<16x8xf32>, vector<4x8xf32> -> vector<4x8xf32>
    %208 = vector.extract_strided_slice %207 {offsets = [0, 0], sizes = [2, 8], strides = [1, 1]} : vector<4x8xf32> to vector<2x8xf32>
    %cst_89 = arith.constant 3.125000e-02 : f32
    %209 = vector.broadcast %cst_89 : f32 to vector<2x8xf32>
    %210 = arith.mulf %208, %209 : vector<2x8xf32>
    %211 = vector.extract_strided_slice %207 {offsets = [2, 0], sizes = [2, 8], strides = [1, 1]} : vector<4x8xf32> to vector<2x8xf32>
    %cst_90 = arith.constant 3.125000e-02 : f32
    %212 = vector.broadcast %cst_90 : f32 to vector<2x8xf32>
    %213 = arith.mulf %211, %212 : vector<2x8xf32>
    %214 = arith.mulf %210, %210 : vector<2x8xf32>
    %215 = arith.subf %213, %214 : vector<2x8xf32>
    %cst_91 = arith.constant 0.000000e+00 : f32
    %216 = vector.broadcast %cst_91 : f32 to vector<2x8xf32>
    %217 = arith.maximumf %215, %216 : vector<2x8xf32>
    %cst_92 = arith.constant 9.99999974E-6 : f32
    %218 = vector.broadcast %cst_92 : f32 to vector<2x8xf32>
    %219 = arith.addf %217, %218 : vector<2x8xf32>
    %220 = math.rsqrt %219 : vector<2x8xf32>
    %cst_93 = arith.constant 0.000000e+00 : f32
    %221 = vector.broadcast %cst_93 : f32 to vector<2x8xf32>
    %222 = arith.subf %221, %210 : vector<2x8xf32>
    %223 = arith.mulf %222, %220 : vector<2x8xf32>
    %224 = tpu.concatenate %220, %223 in 0 : vector<2x8xf32>, vector<2x8xf32> -> vector<4x8xf32>
    %c0_94 = arith.constant 0 : index
    %c0_95 = arith.constant 0 : index
    %225 = vector.load %arg4[%c0_94, %c0_95] : memref<8x16xf32, #tpu.memory_space<vmem>>, vector<8x16xf32>
    %cst_96 = arith.constant dense<0.000000e+00> : vector<4x16xf32>
    %226 = tpu.matmul %224, %225, %cst_96 {dimension_numbers = #tpu.dot_dimension_numbers<[1], [0], [0], [1], [0, 0, 1, 1], [], []>} : vector<4x8xf32>, vector<8x16xf32>, vector<4x16xf32> -> vector<4x16xf32>
    %c0_97 = arith.constant 0 : index
    %c0_98 = arith.constant 0 : index
    %227 = vector.load %arg11[%c0_97, %c0_98] : memref<1x16xf32, #tpu.memory_space<vmem>>, vector<1x16xf32>
    %c0_99 = arith.constant 0 : index
    %c0_100 = arith.constant 0 : index
    %228 = vector.load %arg12[%c0_99, %c0_100] : memref<1x16xf32, #tpu.memory_space<vmem>>, vector<1x16xf32>
    %229 = vector.extract_strided_slice %226 {offsets = [0, 0], sizes = [2, 16], strides = [1, 1]} : vector<4x16xf32> to vector<2x16xf32>
    %230 = vector.broadcast %227 : vector<1x16xf32> to vector<2x16xf32>
    %231 = arith.mulf %229, %230 : vector<2x16xf32>
    %232 = vector.shape_cast %231 : vector<2x16xf32> to vector<2x1x16xf32>
    %233 = vector.extract_strided_slice %226 {offsets = [2, 0], sizes = [2, 16], strides = [1, 1]} : vector<4x16xf32> to vector<2x16xf32>
    %234 = vector.broadcast %227 : vector<1x16xf32> to vector<2x16xf32>
    %235 = arith.mulf %233, %234 : vector<2x16xf32>
    %236 = vector.broadcast %228 : vector<1x16xf32> to vector<2x16xf32>
    %237 = arith.addf %235, %236 : vector<2x16xf32>
    %238 = vector.shape_cast %237 : vector<2x16xf32> to vector<2x1x16xf32>
    %239 = vector.broadcast %232 : vector<2x1x16xf32> to vector<2x16x16xf32>
    %240 = arith.mulf %201, %239 : vector<2x16x16xf32>
    %241 = vector.broadcast %238 : vector<2x1x16xf32> to vector<2x16x16xf32>
    %242 = arith.addf %240, %241 : vector<2x16x16xf32>
    %243 = vector.shape_cast %242 : vector<2x16x16xf32> to vector<32x16xf32>
    %cst_101 = arith.constant 2.000000e+01 : f32
    %244 = vector.broadcast %cst_101 : f32 to vector<32x16xf32>
    %245 = arith.minimumf %243, %244 : vector<32x16xf32>
    %246 = math.exp %245 : vector<32x16xf32>
    %cst_102 = arith.constant 1.000000e+00 : f32
    %247 = vector.broadcast %cst_102 : f32 to vector<32x16xf32>
    %248 = arith.addf %247, %246 : vector<32x16xf32>
    %249 = arith.mulf %248, %248 : vector<32x16xf32>
    %cst_103 = arith.constant 1.000000e+00 : f32
    %250 = vector.broadcast %cst_103 : f32 to vector<32x16xf32>
    %251 = arith.addf %249, %250 : vector<32x16xf32>
    %252 = tpu.reciprocal %251 {approx = true} : vector<32x16xf32> -> vector<32x16xf32>
    %253 = arith.mulf %251, %252 : vector<32x16xf32>
    %cst_104 = arith.constant 2.000000e+00 : f32
    %254 = vector.broadcast %cst_104 : f32 to vector<32x16xf32>
    %255 = arith.subf %254, %253 : vector<32x16xf32>
    %256 = arith.mulf %252, %255 : vector<32x16xf32>
    %cst_105 = arith.constant 1.000000e+00 : f32
    %257 = vector.broadcast %cst_105 : f32 to vector<32x16xf32>
    %258 = arith.subf %249, %257 : vector<32x16xf32>
    %259 = arith.mulf %243, %258 : vector<32x16xf32>
    %260 = arith.mulf %259, %256 : vector<32x16xf32>
    %c0_106 = arith.constant 0 : index
    %c0_107 = arith.constant 0 : index
    %261 = vector.load %arg17[%c0_106, %c0_107] : memref<8x16xf32, #tpu.memory_space<vmem>>, vector<8x16xf32>
    %cst_108 = arith.constant dense<0.000000e+00> : vector<32x16xf32>
    %262 = tpu.matmul %0, %261, %cst_108 {dimension_numbers = #tpu.dot_dimension_numbers<[1], [0], [0], [1], [0, 0, 1, 1], [], []>} : vector<32x8xf32>, vector<8x16xf32>, vector<32x16xf32> -> vector<32x16xf32>
    %c0_109 = arith.constant 0 : index
    %c0_110 = arith.constant 0 : index
    %263 = vector.load %arg18[%c0_109, %c0_110] : memref<1x16xf32, #tpu.memory_space<vmem>>, vector<1x16xf32>
    %264 = vector.broadcast %263 : vector<1x16xf32> to vector<32x16xf32>
    %265 = arith.addf %262, %264 : vector<32x16xf32>
    %266 = arith.addf %260, %265 : vector<32x16xf32>
    %c0_111 = arith.constant 0 : index
    %c0_112 = arith.constant 0 : index
    %267 = vector.load %arg19[%c0_111, %c0_112] : memref<32x16xf32, #tpu.memory_space<vmem>>, vector<32x16xf32>
    tpu.vector_store %arg19[%c0_111, %c0_112], %266 {strides = array<i32>} : memref<32x16xf32, #tpu.memory_space<vmem>>, vector<32x16xf32>,
    return
  }
  func.func @transform_0(%arg0: i32) -> (i32, i32) {
    %c0_i32 = arith.constant 0 : i32
    %c0_i32_0 = arith.constant 0 : i32
    return %arg0, %c0_i32 : i32, i32
  }
  func.func @transform_1(%arg0: i32) -> (i32, i32) {
    %c0_i32 = arith.constant 0 : i32
    %c0_i32_0 = arith.constant 0 : i32
    %c0_i32_1 = arith.constant 0 : i32
    return %c0_i32, %c0_i32_0 : i32, i32
  }
  func.func @transform_2(%arg0: i32) -> (i32, i32) {
    %c0_i32 = arith.constant 0 : i32
    %c0_i32_0 = arith.constant 0 : i32
    %c0_i32_1 = arith.constant 0 : i32
    return %c0_i32, %c0_i32_0 : i32, i32
  }
  func.func @transform_3(%arg0: i32) -> (i32, i32) {
    %c0_i32 = arith.constant 0 : i32
    %c0_i32_0 = arith.constant 0 : i32
    %c0_i32_1 = arith.constant 0 : i32
    return %c0_i32, %c0_i32_0 : i32, i32
  }
  func.func @transform_4(%arg0: i32) -> (i32, i32) {
    %c0_i32 = arith.constant 0 : i32
    %c0_i32_0 = arith.constant 0 : i32
    %c0_i32_1 = arith.constant 0 : i32
    return %c0_i32, %c0_i32_0 : i32, i32
  }
  func.func @transform_5(%arg0: i32) -> (i32, i32) {
    %c0_i32 = arith.constant 0 : i32
    %c0_i32_0 = arith.constant 0 : i32
    %c0_i32_1 = arith.constant 0 : i32
    return %c0_i32, %c0_i32_0 : i32, i32
  }
  func.func @transform_6(%arg0: i32) -> (i32, i32) {
    %c0_i32 = arith.constant 0 : i32
    %c0_i32_0 = arith.constant 0 : i32
    %c0_i32_1 = arith.constant 0 : i32
    return %c0_i32, %c0_i32_0 : i32, i32
  }
  func.func @transform_7(%arg0: i32) -> (i32, i32) {
    %c0_i32 = arith.constant 0 : i32
    %c0_i32_0 = arith.constant 0 : i32
    %c0_i32_1 = arith.constant 0 : i32
    return %c0_i32, %c0_i32_0 : i32, i32
  }
  func.func @transform_8(%arg0: i32) -> (i32, i32) {
    %c0_i32 = arith.constant 0 : i32
    %c0_i32_0 = arith.constant 0 : i32
    %c0_i32_1 = arith.constant 0 : i32
    return %c0_i32, %c0_i32_0 : i32, i32
  }
  func.func @transform_9(%arg0: i32) -> (i32, i32) {
    %c0_i32 = arith.constant 0 : i32
    %c0_i32_0 = arith.constant 0 : i32
    %c0_i32_1 = arith.constant 0 : i32
    return %c0_i32, %c0_i32_0 : i32, i32
  }
  func.func @transform_10(%arg0: i32) -> (i32, i32) {
    %c0_i32 = arith.constant 0 : i32
    %c0_i32_0 = arith.constant 0 : i32
    %c0_i32_1 = arith.constant 0 : i32
    return %c0_i32, %c0_i32_0 : i32, i32
  }
  func.func @transform_11(%arg0: i32) -> (i32, i32) {
    %c0_i32 = arith.constant 0 : i32
    %c0_i32_0 = arith.constant 0 : i32
    %c0_i32_1 = arith.constant 0 : i32
    return %c0_i32, %c0_i32_0 : i32, i32
  }
  func.func @transform_12(%arg0: i32) -> (i32, i32) {
    %c0_i32 = arith.constant 0 : i32
    %c0_i32_0 = arith.constant 0 : i32
    %c0_i32_1 = arith.constant 0 : i32
    return %c0_i32, %c0_i32_0 : i32, i32
  }
  func.func @transform_13(%arg0: i32) -> (i32, i32) {
    %c0_i32 = arith.constant 0 : i32
    %c0_i32_0 = arith.constant 0 : i32
    %c0_i32_1 = arith.constant 0 : i32
    return %c0_i32, %c0_i32_0 : i32, i32
  }
  func.func @transform_14(%arg0: i32) -> (i32, i32) {
    %c0_i32 = arith.constant 0 : i32
    %c0_i32_0 = arith.constant 0 : i32
    %c0_i32_1 = arith.constant 0 : i32
    return %c0_i32, %c0_i32_0 : i32, i32
  }
  func.func @transform_15(%arg0: i32) -> (i32, i32) {
    %c0_i32 = arith.constant 0 : i32
    %c0_i32_0 = arith.constant 0 : i32
    %c0_i32_1 = arith.constant 0 : i32
    return %c0_i32, %c0_i32_0 : i32, i32
  }
  func.func @transform_16(%arg0: i32) -> (i32, i32) {
    %c0_i32 = arith.constant 0 : i32
    %c0_i32_0 = arith.constant 0 : i32
    %c0_i32_1 = arith.constant 0 : i32
    return %c0_i32, %c0_i32_0 : i32, i32
  }
  func.func @transform_17(%arg0: i32) -> (i32, i32) {
    %c0_i32 = arith.constant 0 : i32
    %c0_i32_0 = arith.constant 0 : i32
    %c0_i32_1 = arith.constant 0 : i32
    return %c0_i32, %c0_i32_0 : i32, i32
  }
  func.func @transform_18(%arg0: i32) -> (i32, i32) {
    %c0_i32 = arith.constant 0 : i32
    %c0_i32_0 = arith.constant 0 : i32
    return %arg0, %c0_i32 : i32, i32
  }
}

module attributes {stable_mosaic.version = 11 : i64} {
  func.func @_crb_kernel(%arg0: i32, %arg1: memref<32x8xf32, #tpu.memory_space<vmem>>, %arg2: memref<4x12xf32, #tpu.memory_space<vmem>>, %arg3: memref<16x8xf32, #tpu.memory_space<vmem>>, %arg4: memref<8x16xf32, #tpu.memory_space<vmem>>, %arg5: memref<24x16xf32, #tpu.memory_space<vmem>>, %arg6: memref<1x16xf32, #tpu.memory_space<vmem>>, %arg7: memref<1x16xf32, #tpu.memory_space<vmem>>, %arg8: memref<1x16xf32, #tpu.memory_space<vmem>>, %arg9: memref<48x16xf32, #tpu.memory_space<vmem>>, %arg10: memref<1x16xf32, #tpu.memory_space<vmem>>, %arg11: memref<1x16xf32, #tpu.memory_space<vmem>>, %arg12: memref<1x16xf32, #tpu.memory_space<vmem>>, %arg13: memref<12x16xf32, #tpu.memory_space<vmem>>, %arg14: memref<1x16xf32, #tpu.memory_space<vmem>>, %arg15: memref<12x16xf32, #tpu.memory_space<vmem>>, %arg16: memref<1x16xf32, #tpu.memory_space<vmem>>, %arg17: memref<8x16xf32, #tpu.memory_space<vmem>>, %arg18: memref<1x16xf32, #tpu.memory_space<vmem>>, %arg19: memref<32x16xf32, #tpu.memory_space<vmem>>) attributes {dimension_semantics = [#tpu.dimension_semantics<parallel>], iteration_bounds = array<i64: 2>, scalar_prefetch = 0 : i64, scratch_operands = 0 : i64, tpu.core_type = #tpu.core_type<tc>, window_params = [{transform_indices = @transform_0, window_bounds = array<i64: 32, 8>}, {pipeline_mode = #tpu.pipeline_mode<synchronous>, transform_indices = @transform_1, window_bounds = array<i64: 4, 12>}, {pipeline_mode = #tpu.pipeline_mode<synchronous>, transform_indices = @transform_2, window_bounds = array<i64: 16, 8>}, {pipeline_mode = #tpu.pipeline_mode<synchronous>, transform_indices = @transform_3, window_bounds = array<i64: 8, 16>}, {pipeline_mode = #tpu.pipeline_mode<synchronous>, transform_indices = @transform_4, window_bounds = array<i64: 24, 16>}, {pipeline_mode = #tpu.pipeline_mode<synchronous>, transform_indices = @transform_5, window_bounds = array<i64: 1, 16>}, {pipeline_mode = #tpu.pipeline_mode<synchronous>, transform_indices = @transform_6, window_bounds = array<i64: 1, 16>}, {pipeline_mode = #tpu.pipeline_mode<synchronous>, transform_indices = @transform_7, window_bounds = array<i64: 1, 16>}, {pipeline_mode = #tpu.pipeline_mode<synchronous>, transform_indices = @transform_8, window_bounds = array<i64: 48, 16>}, {pipeline_mode = #tpu.pipeline_mode<synchronous>, transform_indices = @transform_9, window_bounds = array<i64: 1, 16>}, {pipeline_mode = #tpu.pipeline_mode<synchronous>, transform_indices = @transform_10, window_bounds = array<i64: 1, 16>}, {pipeline_mode = #tpu.pipeline_mode<synchronous>, transform_indices = @transform_11, window_bounds = array<i64: 1, 16>}, {pipeline_mode = #tpu.pipeline_mode<synchronous>, transform_indices = @transform_12, window_bounds = array<i64: 12, 16>}, {pipeline_mode = #tpu.pipeline_mode<synchronous>, transform_indices = @transform_13, window_bounds = array<i64: 1, 16>}, {pipeline_mode = #tpu.pipeline_mode<synchronous>, transform_indices = @transform_14, window_bounds = array<i64: 12, 16>}, {pipeline_mode = #tpu.pipeline_mode<synchronous>, transform_indices = @transform_15, window_bounds = array<i64: 1, 16>}, {pipeline_mode = #tpu.pipeline_mode<synchronous>, transform_indices = @transform_16, window_bounds = array<i64: 8, 16>}, {pipeline_mode = #tpu.pipeline_mode<synchronous>, transform_indices = @transform_17, window_bounds = array<i64: 1, 16>}, {transform_indices = @transform_18, window_bounds = array<i64: 32, 16>}]} {
    %c0 = arith.constant 0 : index
    %c0_0 = arith.constant 0 : index
    %0 = vector.load %arg1[%c0, %c0_0] : memref<32x8xf32, #tpu.memory_space<vmem>>, vector<32x8xf32>
    %1 = tpu.iota {dimensions = array<i32: 0>} : vector<32x1xi32>
    %c16_i32 = arith.constant 16 : i32
    %c0_i32 = arith.constant 0 : i32
    %2 = arith.cmpi eq, %c16_i32, %c0_i32 : i32
    %c1_i32 = arith.constant 1 : i32
    %3 = arith.select %2, %c1_i32, %c16_i32 : i32
    %4 = vector.broadcast %3 : i32 to vector<32x1xi32>
    %5 = arith.remsi %1, %4 : vector<32x1xi32>
    %c0_i32_1 = arith.constant 0 : i32
    %6 = vector.broadcast %c0_i32_1 : i32 to vector<32x1xi32>
    %7 = arith.cmpi ne, %5, %6 : vector<32x1xi32>
    %c0_i32_2 = arith.constant 0 : i32
    %8 = vector.broadcast %c0_i32_2 : i32 to vector<32x1xi32>
    %9 = arith.cmpi slt, %5, %8 : vector<32x1xi32>
    %c0_i32_3 = arith.constant 0 : i32
    %10 = arith.cmpi slt, %3, %c0_i32_3 : i32
    %11 = vector.broadcast %10 : i1 to vector<32x1xi1>
    %12 = vector.broadcast %11 : vector<32x1xi1> to vector<32x1xi1>
    %13 = arith.xori %9, %12 : vector<32x1xi1>
    %14 = arith.andi %13, %7 : vector<32x1xi1>
    %15 = vector.broadcast %3 : i32 to vector<32x1xi32>
    %16 = arith.addi %5, %15 : vector<32x1xi32>
    %17 = arith.select %14, %16, %5 : vector<32x1xi1>, vector<32x1xi32>
    %c1_i32_4 = arith.constant 1 : i32
    %18 = tpu.dynamic_rotate %0 by %c1_i32_4 dim 0 : vector<32x8xf32>, i32 -> vector<32x8xf32>
    %c-1_i32 = arith.constant -1 : i32
    %19 = vector.broadcast %c-1_i32 : i32 to vector<32x1xi32>
    %20 = arith.addi %17, %19 : vector<32x1xi32>
    %c0_i32_5 = arith.constant 0 : i32
    %21 = vector.broadcast %c0_i32_5 : i32 to vector<32x1xi32>
    %22 = arith.cmpi sge, %20, %21 : vector<32x1xi32>
    %c-1_i32_6 = arith.constant -1 : i32
    %23 = vector.broadcast %c-1_i32_6 : i32 to vector<32x1xi32>
    %24 = arith.addi %17, %23 : vector<32x1xi32>
    %c16_i32_7 = arith.constant 16 : i32
    %25 = vector.broadcast %c16_i32_7 : i32 to vector<32x1xi32>
    %26 = arith.cmpi slt, %24, %25 : vector<32x1xi32>
    %27 = arith.andi %22, %26 : vector<32x1xi1>
    %cst = arith.constant 0.000000e+00 : f32
    %28 = vector.shape_cast %27 : vector<32x1xi1> to vector<32x1xi1>
    %29 = vector.broadcast %28 : vector<32x1xi1> to vector<32x8xi1>
    %30 = vector.broadcast %cst : f32 to vector<32x8xf32>
    %31 = arith.select %29, %18, %30 : vector<32x8xi1>, vector<32x8xf32>
    %c0_8 = arith.constant 0 : index
    %c0_9 = arith.constant 0 : index
    %32 = vector.load %arg5[%c0_8, %c0_9] : memref<24x16xf32, #tpu.memory_space<vmem>>, vector<8x16xf32>
    %cst_10 = arith.constant dense<0.000000e+00> : vector<32x16xf32>
    %33 = tpu.matmul %31, %32, %cst_10 {dimension_numbers = #tpu.dot_dimension_numbers<[1], [0], [0], [1], [0, 0, 1, 1], [], []>} : vector<32x8xf32>, vector<8x16xf32>, vector<32x16xf32> -> vector<32x16xf32>
    %c8 = arith.constant 8 : index
    %c0_11 = arith.constant 0 : index
    %34 = vector.load %arg5[%c8, %c0_11] : memref<24x16xf32, #tpu.memory_space<vmem>>, vector<8x16xf32>
    %cst_12 = arith.constant dense<0.000000e+00> : vector<32x16xf32>
    %35 = tpu.matmul %0, %34, %cst_12 {dimension_numbers = #tpu.dot_dimension_numbers<[1], [0], [0], [1], [0, 0, 1, 1], [], []>} : vector<32x8xf32>, vector<8x16xf32>, vector<32x16xf32> -> vector<32x16xf32>
    %36 = arith.addf %33, %35 : vector<32x16xf32>
    %c31_i32 = arith.constant 31 : i32
    %37 = tpu.dynamic_rotate %0 by %c31_i32 dim 0 : vector<32x8xf32>, i32 -> vector<32x8xf32>
    %c1_i32_13 = arith.constant 1 : i32
    %38 = vector.broadcast %c1_i32_13 : i32 to vector<32x1xi32>
    %39 = arith.addi %17, %38 : vector<32x1xi32>
    %c0_i32_14 = arith.constant 0 : i32
    %40 = vector.broadcast %c0_i32_14 : i32 to vector<32x1xi32>
    %41 = arith.cmpi sge, %39, %40 : vector<32x1xi32>
    %c1_i32_15 = arith.constant 1 : i32
    %42 = vector.broadcast %c1_i32_15 : i32 to vector<32x1xi32>
    %43 = arith.addi %17, %42 : vector<32x1xi32>
    %c16_i32_16 = arith.constant 16 : i32
    %44 = vector.broadcast %c16_i32_16 : i32 to vector<32x1xi32>
    %45 = arith.cmpi slt, %43, %44 : vector<32x1xi32>
    %46 = arith.andi %41, %45 : vector<32x1xi1>
    %cst_17 = arith.constant 0.000000e+00 : f32
    %47 = vector.shape_cast %46 : vector<32x1xi1> to vector<32x1xi1>
    %48 = vector.broadcast %47 : vector<32x1xi1> to vector<32x8xi1>
    %49 = vector.broadcast %cst_17 : f32 to vector<32x8xf32>
    %50 = arith.select %48, %37, %49 : vector<32x8xi1>, vector<32x8xf32>
    %c16 = arith.constant 16 : index
    %c0_18 = arith.constant 0 : index
    %51 = vector.load %arg5[%c16, %c0_18] : memref<24x16xf32, #tpu.memory_space<vmem>>, vector<8x16xf32>
    %cst_19 = arith.constant dense<0.000000e+00> : vector<32x16xf32>
    %52 = tpu.matmul %50, %51, %cst_19 {dimension_numbers = #tpu.dot_dimension_numbers<[1], [0], [0], [1], [0, 0, 1, 1], [], []>} : vector<32x8xf32>, vector<8x16xf32>, vector<32x16xf32> -> vector<32x16xf32>
    %53 = arith.addf %36, %52 : vector<32x16xf32>
    %c0_20 = arith.constant 0 : index
    %c0_21 = arith.constant 0 : index
    %54 = vector.load %arg6[%c0_20, %c0_21] : memref<1x16xf32, #tpu.memory_space<vmem>>, vector<1x16xf32>
    %55 = vector.broadcast %54 : vector<1x16xf32> to vector<32x16xf32>
    %56 = arith.addf %53, %55 : vector<32x16xf32>
    %57 = vector.shape_cast %56 : vector<32x16xf32> to vector<2x16x16xf32>
    %cst_22 = arith.constant dense<0.000000e+00> : vector<2x16xf32>
    %58 = vector.multi_reduction <add>, %57, %cst_22 [1] : vector<2x16x16xf32> to vector<2x16xf32>
    %59 = arith.mulf %57, %57 : vector<2x16x16xf32>
    %cst_23 = arith.constant dense<0.000000e+00> : vector<2x16xf32>
    %60 = vector.multi_reduction <add>, %59, %cst_23 [1] : vector<2x16x16xf32> to vector<2x16xf32>
    %61 = tpu.concatenate %58, %60 in 0 : vector<2x16xf32>, vector<2x16xf32> -> vector<4x16xf32>
    %c0_24 = arith.constant 0 : index
    %c0_25 = arith.constant 0 : index
    %62 = vector.load %arg3[%c0_24, %c0_25] : memref<16x8xf32, #tpu.memory_space<vmem>>, vector<16x8xf32>
    %cst_26 = arith.constant dense<0.000000e+00> : vector<4x8xf32>
    %63 = tpu.matmul %61, %62, %cst_26 {dimension_numbers = #tpu.dot_dimension_numbers<[1], [0], [0], [1], [0, 0, 1, 1], [], []>} : vector<4x16xf32>, vector<16x8xf32>, vector<4x8xf32> -> vector<4x8xf32>
    %64 = vector.extract_strided_slice %63 {offsets = [0, 0], sizes = [2, 8], strides = [1, 1]} : vector<4x8xf32> to vector<2x8xf32>
    %cst_27 = arith.constant 3.125000e-02 : f32
    %65 = vector.broadcast %cst_27 : f32 to vector<2x8xf32>
    %66 = arith.mulf %64, %65 : vector<2x8xf32>
    %67 = vector.extract_strided_slice %63 {offsets = [2, 0], sizes = [2, 8], strides = [1, 1]} : vector<4x8xf32> to vector<2x8xf32>
    %cst_28 = arith.constant 3.125000e-02 : f32
    %68 = vector.broadcast %cst_28 : f32 to vector<2x8xf32>
    %69 = arith.mulf %67, %68 : vector<2x8xf32>
    %70 = arith.mulf %66, %66 : vector<2x8xf32>
    %71 = arith.subf %69, %70 : vector<2x8xf32>
    %cst_29 = arith.constant 0.000000e+00 : f32
    %72 = vector.broadcast %cst_29 : f32 to vector<2x8xf32>
    %73 = arith.maximumf %71, %72 : vector<2x8xf32>
    %cst_30 = arith.constant 9.99999974E-6 : f32
    %74 = vector.broadcast %cst_30 : f32 to vector<2x8xf32>
    %75 = arith.addf %73, %74 : vector<2x8xf32>
    %76 = math.rsqrt %75 : vector<2x8xf32>
    %cst_31 = arith.constant 0.000000e+00 : f32
    %77 = vector.broadcast %cst_31 : f32 to vector<2x8xf32>
    %78 = arith.subf %77, %66 : vector<2x8xf32>
    %79 = arith.mulf %78, %76 : vector<2x8xf32>
    %80 = tpu.concatenate %76, %79 in 0 : vector<2x8xf32>, vector<2x8xf32> -> vector<4x8xf32>
    %c0_32 = arith.constant 0 : index
    %c0_33 = arith.constant 0 : index
    %81 = vector.load %arg4[%c0_32, %c0_33] : memref<8x16xf32, #tpu.memory_space<vmem>>, vector<8x16xf32>
    %cst_34 = arith.constant dense<0.000000e+00> : vector<4x16xf32>
    %82 = tpu.matmul %80, %81, %cst_34 {dimension_numbers = #tpu.dot_dimension_numbers<[1], [0], [0], [1], [0, 0, 1, 1], [], []>} : vector<4x8xf32>, vector<8x16xf32>, vector<4x16xf32> -> vector<4x16xf32>
    %c0_35 = arith.constant 0 : index
    %c0_36 = arith.constant 0 : index
    %83 = vector.load %arg7[%c0_35, %c0_36] : memref<1x16xf32, #tpu.memory_space<vmem>>, vector<1x16xf32>
    %c0_37 = arith.constant 0 : index
    %c0_38 = arith.constant 0 : index
    %84 = vector.load %arg8[%c0_37, %c0_38] : memref<1x16xf32, #tpu.memory_space<vmem>>, vector<1x16xf32>
    %85 = vector.extract_strided_slice %82 {offsets = [0, 0], sizes = [2, 16], strides = [1, 1]} : vector<4x16xf32> to vector<2x16xf32>
    %86 = vector.broadcast %83 : vector<1x16xf32> to vector<2x16xf32>
    %87 = arith.mulf %85, %86 : vector<2x16xf32>
    %88 = vector.shape_cast %87 : vector<2x16xf32> to vector<2x1x16xf32>
    %89 = vector.extract_strided_slice %82 {offsets = [2, 0], sizes = [2, 16], strides = [1, 1]} : vector<4x16xf32> to vector<2x16xf32>
    %90 = vector.broadcast %83 : vector<1x16xf32> to vector<2x16xf32>
    %91 = arith.mulf %89, %90 : vector<2x16xf32>
    %92 = vector.broadcast %84 : vector<1x16xf32> to vector<2x16xf32>
    %93 = arith.addf %91, %92 : vector<2x16xf32>
    %94 = vector.shape_cast %93 : vector<2x16xf32> to vector<2x1x16xf32>
    %95 = vector.broadcast %88 : vector<2x1x16xf32> to vector<2x16x16xf32>
    %96 = arith.mulf %57, %95 : vector<2x16x16xf32>
    %97 = vector.broadcast %94 : vector<2x1x16xf32> to vector<2x16x16xf32>
    %98 = arith.addf %96, %97 : vector<2x16x16xf32>
    %99 = vector.shape_cast %98 : vector<2x16x16xf32> to vector<32x16xf32>
    %cst_39 = arith.constant 2.000000e+01 : f32
    %100 = vector.broadcast %cst_39 : f32 to vector<32x16xf32>
    %101 = arith.minimumf %99, %100 : vector<32x16xf32>
    %102 = math.exp %101 : vector<32x16xf32>
    %cst_40 = arith.constant 1.000000e+00 : f32
    %103 = vector.broadcast %cst_40 : f32 to vector<32x16xf32>
    %104 = arith.addf %103, %102 : vector<32x16xf32>
    %105 = arith.mulf %104, %104 : vector<32x16xf32>
    %cst_41 = arith.constant 1.000000e+00 : f32
    %106 = vector.broadcast %cst_41 : f32 to vector<32x16xf32>
    %107 = arith.addf %105, %106 : vector<32x16xf32>
    %108 = tpu.reciprocal %107 {approx = true} : vector<32x16xf32> -> vector<32x16xf32>
    %109 = arith.mulf %107, %108 : vector<32x16xf32>
    %cst_42 = arith.constant 2.000000e+00 : f32
    %110 = vector.broadcast %cst_42 : f32 to vector<32x16xf32>
    %111 = arith.subf %110, %109 : vector<32x16xf32>
    %112 = arith.mulf %108, %111 : vector<32x16xf32>
    %cst_43 = arith.constant 1.000000e+00 : f32
    %113 = vector.broadcast %cst_43 : f32 to vector<32x16xf32>
    %114 = arith.subf %105, %113 : vector<32x16xf32>
    %115 = arith.mulf %99, %114 : vector<32x16xf32>
    %116 = arith.mulf %115, %112 : vector<32x16xf32>
    %117 = tpu.iota {dimensions = array<i32: 1>} : vector<2x4xi32>
    %118 = tpu.iota {dimensions = array<i32: 0>} : vector<2x4xi32>
    %c2_i32 = arith.constant 2 : i32
    %119 = arith.muli %arg0, %c2_i32 : i32
    %120 = vector.broadcast %119 : i32 to vector<2x4xi32>
    %121 = arith.addi %118, %120 : vector<2x4xi32>
    %122 = arith.cmpi eq, %117, %121 : vector<2x4xi32>
    %123 = arith.extui %122 : vector<2x4xi1> to vector<2x4xi32>
    %124 = arith.sitofp %123 : vector<2x4xi32> to vector<2x4xf32>
    %c0_44 = arith.constant 0 : index
    %c0_45 = arith.constant 0 : index
    %125 = vector.load %arg2[%c0_44, %c0_45] : memref<4x12xf32, #tpu.memory_space<vmem>>, vector<4x12xf32>
    %cst_46 = arith.constant dense<0.000000e+00> : vector<2x12xf32>
    %126 = tpu.matmul %124, %125, %cst_46 {dimension_numbers = #tpu.dot_dimension_numbers<[1], [0], [0], [1], [0, 0, 1, 1], [], []>} : vector<2x4xf32>, vector<4x12xf32>, vector<2x12xf32> -> vector<2x12xf32>
    %cst_47 = arith.constant 2.000000e+01 : f32
    %127 = vector.broadcast %cst_47 : f32 to vector<2x12xf32>
    %128 = arith.minimumf %126, %127 : vector<2x12xf32>
    %129 = math.exp %128 : vector<2x12xf32>
    %cst_48 = arith.constant 1.000000e+00 : f32
    %130 = vector.broadcast %cst_48 : f32 to vector<2x12xf32>
    %131 = arith.addf %130, %129 : vector<2x12xf32>
    %132 = arith.mulf %131, %131 : vector<2x12xf32>
    %cst_49 = arith.constant 1.000000e+00 : f32
    %133 = vector.broadcast %cst_49 : f32 to vector<2x12xf32>
    %134 = arith.addf %132, %133 : vector<2x12xf32>
    %135 = tpu.reciprocal %134 {approx = true} : vector<2x12xf32> -> vector<2x12xf32>
    %136 = arith.mulf %134, %135 : vector<2x12xf32>
    %cst_50 = arith.constant 2.000000e+00 : f32
    %137 = vector.broadcast %cst_50 : f32 to vector<2x12xf32>
    %138 = arith.subf %137, %136 : vector<2x12xf32>
    %139 = arith.mulf %135, %138 : vector<2x12xf32>
    %cst_51 = arith.constant 1.000000e+00 : f32
    %140 = vector.broadcast %cst_51 : f32 to vector<2x12xf32>
    %141 = arith.subf %132, %140 : vector<2x12xf32>
    %142 = arith.mulf %126, %141 : vector<2x12xf32>
    %143 = arith.mulf %142, %139 : vector<2x12xf32>
    %c0_52 = arith.constant 0 : index
    %c0_53 = arith.constant 0 : index
    %144 = vector.load %arg13[%c0_52, %c0_53] : memref<12x16xf32, #tpu.memory_space<vmem>>, vector<12x16xf32>
    %c0_54 = arith.constant 0 : index
    %c0_55 = arith.constant 0 : index
    %145 = vector.load %arg15[%c0_54, %c0_55] : memref<12x16xf32, #tpu.memory_space<vmem>>, vector<12x16xf32>
    %cst_56 = arith.constant dense<0.000000e+00> : vector<2x16xf32>
    %146 = tpu.matmul %143, %144, %cst_56 {dimension_numbers = #tpu.dot_dimension_numbers<[1], [0], [0], [1], [0, 0, 1, 1], [], []>} : vector<2x12xf32>, vector<12x16xf32>, vector<2x16xf32> -> vector<2x16xf32>
    %c0_57 = arith.constant 0 : index
    %c0_58 = arith.constant 0 : index
    %147 = vector.load %arg14[%c0_57, %c0_58] : memref<1x16xf32, #tpu.memory_space<vmem>>, vector<1x16xf32>
    %148 = vector.broadcast %147 : vector<1x16xf32> to vector<2x16xf32>
    %149 = arith.addf %146, %148 : vector<2x16xf32>
    %cst_59 = arith.constant dense<0.000000e+00> : vector<2x16xf32>
    %150 = tpu.matmul %143, %145, %cst_59 {dimension_numbers = #tpu.dot_dimension_numbers<[1], [0], [0], [1], [0, 0, 1, 1], [], []>} : vector<2x12xf32>, vector<12x16xf32>, vector<2x16xf32> -> vector<2x16xf32>
    %c0_60 = arith.constant 0 : index
    %c0_61 = arith.constant 0 : index
    %151 = vector.load %arg16[%c0_60, %c0_61] : memref<1x16xf32, #tpu.memory_space<vmem>>, vector<1x16xf32>
    %152 = vector.broadcast %151 : vector<1x16xf32> to vector<2x16xf32>
    %153 = arith.addf %150, %152 : vector<2x16xf32>
    %154 = vector.shape_cast %116 : vector<32x16xf32> to vector<2x16x16xf32>
    %155 = vector.shape_cast %149 : vector<2x16xf32> to vector<2x1x16xf32>
    %156 = vector.broadcast %155 : vector<2x1x16xf32> to vector<2x16x16xf32>
    %157 = arith.mulf %154, %156 : vector<2x16x16xf32>
    %158 = vector.shape_cast %153 : vector<2x16xf32> to vector<2x1x16xf32>
    %159 = vector.broadcast %158 : vector<2x1x16xf32> to vector<2x16x16xf32>
    %160 = arith.addf %157, %159 : vector<2x16x16xf32>
    %161 = vector.shape_cast %160 : vector<2x16x16xf32> to vector<32x16xf32>
    %c1_i32_62 = arith.constant 1 : i32
    %162 = tpu.dynamic_rotate %161 by %c1_i32_62 dim 0 : vector<32x16xf32>, i32 -> vector<32x16xf32>
    %c-1_i32_63 = arith.constant -1 : i32
    %163 = vector.broadcast %c-1_i32_63 : i32 to vector<32x1xi32>
    %164 = arith.addi %17, %163 : vector<32x1xi32>
    %c0_i32_64 = arith.constant 0 : i32
    %165 = vector.broadcast %c0_i32_64 : i32 to vector<32x1xi32>
    %166 = arith.cmpi sge, %164, %165 : vector<32x1xi32>
    %c-1_i32_65 = arith.constant -1 : i32
    %167 = vector.broadcast %c-1_i32_65 : i32 to vector<32x1xi32>
    %168 = arith.addi %17, %167 : vector<32x1xi32>
    %c16_i32_66 = arith.constant 16 : i32
    %169 = vector.broadcast %c16_i32_66 : i32 to vector<32x1xi32>
    %170 = arith.cmpi slt, %168, %169 : vector<32x1xi32>
    %171 = arith.andi %166, %170 : vector<32x1xi1>
    %cst_67 = arith.constant 0.000000e+00 : f32
    %172 = vector.shape_cast %171 : vector<32x1xi1> to vector<32x1xi1>
    %173 = vector.broadcast %172 : vector<32x1xi1> to vector<32x16xi1>
    %174 = vector.broadcast %cst_67 : f32 to vector<32x16xf32>
    %175 = arith.select %173, %162, %174 : vector<32x16xi1>, vector<32x16xf32>
    %c0_68 = arith.constant 0 : index
    %c0_69 = arith.constant 0 : index
    %176 = vector.load %arg9[%c0_68, %c0_69] : memref<48x16xf32, #tpu.memory_space<vmem>>, vector<16x16xf32>
    %cst_70 = arith.constant dense<0.000000e+00> : vector<32x16xf32>
    %177 = tpu.matmul %175, %176, %cst_70 {dimension_numbers = #tpu.dot_dimension_numbers<[1], [0], [0], [1], [0, 0, 1, 1], [], []>} : vector<32x16xf32>, vector<16x16xf32>, vector<32x16xf32> -> vector<32x16xf32>
    %c16_71 = arith.constant 16 : index
    %c0_72 = arith.constant 0 : index
    %178 = vector.load %arg9[%c16_71, %c0_72] : memref<48x16xf32, #tpu.memory_space<vmem>>, vector<16x16xf32>
    %cst_73 = arith.constant dense<0.000000e+00> : vector<32x16xf32>
    %179 = tpu.matmul %161, %178, %cst_73 {dimension_numbers = #tpu.dot_dimension_numbers<[1], [0], [0], [1], [0, 0, 1, 1], [], []>} : vector<32x16xf32>, vector<16x16xf32>, vector<32x16xf32> -> vector<32x16xf32>
    %180 = arith.addf %177, %179 : vector<32x16xf32>
    %c31_i32_74 = arith.constant 31 : i32
    %181 = tpu.dynamic_rotate %161 by %c31_i32_74 dim 0 : vector<32x16xf32>, i32 -> vector<32x16xf32>
    %c1_i32_75 = arith.constant 1 : i32
    %182 = vector.broadcast %c1_i32_75 : i32 to vector<32x1xi32>
    %183 = arith.addi %17, %182 : vector<32x1xi32>
    %c0_i32_76 = arith.constant 0 : i32
    %184 = vector.broadcast %c0_i32_76 : i32 to vector<32x1xi32>
    %185 = arith.cmpi sge, %183, %184 : vector<32x1xi32>
    %c1_i32_77 = arith.constant 1 : i32
    %186 = vector.broadcast %c1_i32_77 : i32 to vector<32x1xi32>
    %187 = arith.addi %17, %186 : vector<32x1xi32>
    %c16_i32_78 = arith.constant 16 : i32
    %188 = vector.broadcast %c16_i32_78 : i32 to vector<32x1xi32>
    %189 = arith.cmpi slt, %187, %188 : vector<32x1xi32>
    %190 = arith.andi %185, %189 : vector<32x1xi1>
    %cst_79 = arith.constant 0.000000e+00 : f32
    %191 = vector.shape_cast %190 : vector<32x1xi1> to vector<32x1xi1>
    %192 = vector.broadcast %191 : vector<32x1xi1> to vector<32x16xi1>
    %193 = vector.broadcast %cst_79 : f32 to vector<32x16xf32>
    %194 = arith.select %192, %181, %193 : vector<32x16xi1>, vector<32x16xf32>
    %c32 = arith.constant 32 : index
    %c0_80 = arith.constant 0 : index
    %195 = vector.load %arg9[%c32, %c0_80] : memref<48x16xf32, #tpu.memory_space<vmem>>, vector<16x16xf32>
    %cst_81 = arith.constant dense<0.000000e+00> : vector<32x16xf32>
    %196 = tpu.matmul %194, %195, %cst_81 {dimension_numbers = #tpu.dot_dimension_numbers<[1], [0], [0], [1], [0, 0, 1, 1], [], []>} : vector<32x16xf32>, vector<16x16xf32>, vector<32x16xf32> -> vector<32x16xf32>
    %197 = arith.addf %180, %196 : vector<32x16xf32>
    %c0_82 = arith.constant 0 : index
    %c0_83 = arith.constant 0 : index
    %198 = vector.load %arg10[%c0_82, %c0_83] : memref<1x16xf32, #tpu.memory_space<vmem>>, vector<1x16xf32>
    %199 = vector.broadcast %198 : vector<1x16xf32> to vector<32x16xf32>
    %200 = arith.addf %197, %199 : vector<32x16xf32>
    %201 = vector.shape_cast %200 : vector<32x16xf32> to vector<2x16x16xf32>
    %cst_84 = arith.constant dense<0.000000e+00> : vector<2x16xf32>
    %202 = vector.multi_reduction <add>, %201, %cst_84 [1] : vector<2x16x16xf32> to vector<2x16xf32>
    %203 = arith.mulf %201, %201 : vector<2x16x16xf32>
    %cst_85 = arith.constant dense<0.000000e+00> : vector<2x16xf32>
    %204 = vector.multi_reduction <add>, %203, %cst_85 [1] : vector<2x16x16xf32> to vector<2x16xf32>
    %205 = tpu.concatenate %202, %204 in 0 : vector<2x16xf32>, vector<2x16xf32> -> vector<4x16xf32>
    %c0_86 = arith.constant 0 : index
    %c0_87 = arith.constant 0 : index
    %206 = vector.load %arg3[%c0_86, %c0_87] : memref<16x8xf32, #tpu.memory_space<vmem>>, vector<16x8xf32>
    %cst_88 = arith.constant dense<0.000000e+00> : vector<4x8xf32>
    %207 = tpu.matmul %205, %206, %cst_88 {dimension_numbers = #tpu.dot_dimension_numbers<[1], [0], [0], [1], [0, 0, 1, 1], [], []>} : vector<4x16xf32>, vector<16x8xf32>, vector<4x8xf32> -> vector<4x8xf32>
    %208 = vector.extract_strided_slice %207 {offsets = [0, 0], sizes = [2, 8], strides = [1, 1]} : vector<4x8xf32> to vector<2x8xf32>
    %cst_89 = arith.constant 3.125000e-02 : f32
    %209 = vector.broadcast %cst_89 : f32 to vector<2x8xf32>
    %210 = arith.mulf %208, %209 : vector<2x8xf32>
    %211 = vector.extract_strided_slice %207 {offsets = [2, 0], sizes = [2, 8], strides = [1, 1]} : vector<4x8xf32> to vector<2x8xf32>
    %cst_90 = arith.constant 3.125000e-02 : f32
    %212 = vector.broadcast %cst_90 : f32 to vector<2x8xf32>
    %213 = arith.mulf %211, %212 : vector<2x8xf32>
    %214 = arith.mulf %210, %210 : vector<2x8xf32>
    %215 = arith.subf %213, %214 : vector<2x8xf32>
    %cst_91 = arith.constant 0.000000e+00 : f32
    %216 = vector.broadcast %cst_91 : f32 to vector<2x8xf32>
    %217 = arith.maximumf %215, %216 : vector<2x8xf32>
    %cst_92 = arith.constant 9.99999974E-6 : f32
    %218 = vector.broadcast %cst_92 : f32 to vector<2x8xf32>
    %219 = arith.addf %217, %218 : vector<2x8xf32>
    %220 = math.rsqrt %219 : vector<2x8xf32>
    %cst_93 = arith.constant 0.000000e+00 : f32
    %221 = vector.broadcast %cst_93 : f32 to vector<2x8xf32>
    %222 = arith.subf %221, %210 : vector<2x8xf32>
    %223 = arith.mulf %222, %220 : vector<2x8xf32>
    %224 = tpu.concatenate %220, %223 in 0 : vector<2x8xf32>, vector<2x8xf32> -> vector<4x8xf32>
    %c0_94 = arith.constant 0 : index
    %c0_95 = arith.constant 0 : index
    %225 = vector.load %arg4[%c0_94, %c0_95] : memref<8x16xf32, #tpu.memory_space<vmem>>, vector<8x16xf32>
    %cst_96 = arith.constant dense<0.000000e+00> : vector<4x16xf32>
    %226 = tpu.matmul %224, %225, %cst_96 {dimension_numbers = #tpu.dot_dimension_numbers<[1], [0], [0], [1], [0, 0, 1, 1], [], []>} : vector<4x8xf32>, vector<8x16xf32>, vector<4x16xf32> -> vector<4x16xf32>
    %c0_97 = arith.constant 0 : index
    %c0_98 = arith.constant 0 : index
    %227 = vector.load %arg11[%c0_97, %c0_98] : memref<1x16xf32, #tpu.memory_space<vmem>>, vector<1x16xf32>
    %c0_99 = arith.constant 0 : index
    %c0_100 = arith.constant 0 : index
    %228 = vector.load %arg12[%c0_99, %c0_100] : memref<1x16xf32, #tpu.memory_space<vmem>>, vector<1x16xf32>
    %229 = vector.extract_strided_slice %226 {offsets = [0, 0], sizes = [2, 16], strides = [1, 1]} : vector<4x16xf32> to vector<2x16xf32>
    %230 = vector.broadcast %227 : vector<1x16xf32> to vector<2x16xf32>
    %231 = arith.mulf %229, %230 : vector<2x16xf32>
    %232 = vector.shape_cast %231 : vector<2x16xf32> to vector<2x1x16xf32>
    %233 = vector.extract_strided_slice %226 {offsets = [2, 0], sizes = [2, 16], strides = [1, 1]} : vector<4x16xf32> to vector<2x16xf32>
    %234 = vector.broadcast %227 : vector<1x16xf32> to vector<2x16xf32>
    %235 = arith.mulf %233, %234 : vector<2x16xf32>
    %236 = vector.broadcast %228 : vector<1x16xf32> to vector<2x16xf32>
    %237 = arith.addf %235, %236 : vector<2x16xf32>
    %238 = vector.shape_cast %237 : vector<2x16xf32> to vector<2x1x16xf32>
    %239 = vector.broadcast %232 : vector<2x1x16xf32> to vector<2x16x16xf32>
    %240 = arith.mulf %201, %239 : vector<2x16x16xf32>
    %241 = vector.broadcast %238 : vector<2x1x16xf32> to vector<2x16x16xf32>
    %242 = arith.addf %240, %241 : vector<2x16x16xf32>
    %243 = vector.shape_cast %242 : vector<2x16x16xf32> to vector<32x16xf32>
    %cst_101 = arith.constant 2.000000e+01 : f32
    %244 = vector.broadcast %cst_101 : f32 to vector<32x16xf32>
    %245 = arith.minimumf %243, %244 : vector<32x16xf32>
    %246 = math.exp %245 : vector<32x16xf32>
    %cst_102 = arith.constant 1.000000e+00 : f32
    %247 = vector.broadcast %cst_102 : f32 to vector<32x16xf32>
    %248 = arith.addf %247, %246 : vector<32x16xf32>
    %249 = arith.mulf %248, %248 : vector<32x16xf32>
    %cst_103 = arith.constant 1.000000e+00 : f32
    %250 = vector.broadcast %cst_103 : f32 to vector<32x16xf32>
    %251 = arith.addf %249, %250 : vector<32x16xf32>
    %252 = tpu.reciprocal %251 {approx = true} : vector<32x16xf32> -> vector<32x16xf32>
    %253 = arith.mulf %251, %252 : vector<32x16xf32>
    %cst_104 = arith.constant 2.000000e+00 : f32
    %254 = vector.broadcast %cst_104 : f32 to vector<32x16xf32>
    %255 = arith.subf %254, %253 : vector<32x16xf32>
    %256 = arith.mulf %252, %255 : vector<32x16xf32>
    %cst_105 = arith.constant 1.000000e+00 : f32
    %257 = vector.broadcast %cst_105 : f32 to vector<32x16xf32>
    %258 = arith.subf %249, %257 : vector<32x16xf32>
    %259 = arith.mulf %243, %258 : vector<32x16xf32>
    %260 = arith.mulf %259, %256 : vector<32x16xf32>
    %c0_106 = arith.constant 0 : index
    %c0_107 = arith.constant 0 : index
    %261 = vector.load %arg17[%c0_106, %c0_107] : memref<8x16xf32, #tpu.memory_space<vmem>>, vector<8x16xf32>
    %cst_108 = arith.constant dense<0.000000e+00> : vector<32x16xf32>
    %262 = tpu.matmul %0, %261, %cst_108 {dimension_numbers = #tpu.dot_dimension_numbers<[1], [0], [0], [1], [0, 0, 1, 1], [], []>} : vector<32x8xf32>, vector<8x16xf32>, vector<32x16xf32> -> vector<32x16xf32>
    %c0_109 = arith.constant 0 : index
    %c0_110 = arith.constant 0 : index
    %263 = vector.load %arg18[%c0_109, %c0_110] : memref<1x16xf32, #tpu.memory_space<vmem>>, vector<1x16xf32>
    %264 = vector.broadcast %263 : vector<1x16xf32> to vector<32x16xf32>
    %265 = arith.addf %262, %264 : vector<32x16xf32>
    %266 = arith.addf %260, %265 : vector<32x16xf32>
    %c0_111 = arith.constant 0 : index
    %c0_112 = arith.constant 0 : index
    %267 = vector.load %arg19[%c0_111, %c0_112] : memref<32x16xf32, #tpu.memory_space<vmem>>, vector<32x16xf32>
    tpu.vector_store %arg19[%c0_111, %c0_112], %266 {strides = array<i32>} : memref<32x16xf32, #tpu.memory_space<vmem>>, vector<32x16xf32>,
    return
  }
  func.func @transform_0(%arg0: i32) -> (i32, i32) {
    %c0_i32 = arith.constant 0 : i32
    %c0_i32_0 = arith.constant 0 : i32
    return %arg0, %c0_i32 : i32, i32
  }
  func.func @transform_1(%arg0: i32) -> (i32, i32) {
    %c0_i32 = arith.constant 0 : i32
    %c0_i32_0 = arith.constant 0 : i32
    %c0_i32_1 = arith.constant 0 : i32
    return %c0_i32, %c0_i32_0 : i32, i32
  }
  func.func @transform_2(%arg0: i32) -> (i32, i32) {
    %c0_i32 = arith.constant 0 : i32
    %c0_i32_0 = arith.constant 0 : i32
    %c0_i32_1 = arith.constant 0 : i32
    return %c0_i32, %c0_i32_0 : i32, i32
  }
  func.func @transform_3(%arg0: i32) -> (i32, i32) {
    %c0_i32 = arith.constant 0 : i32
    %c0_i32_0 = arith.constant 0 : i32
    %c0_i32_1 = arith.constant 0 : i32
    return %c0_i32, %c0_i32_0 : i32, i32
  }
  func.func @transform_4(%arg0: i32) -> (i32, i32) {
    %c0_i32 = arith.constant 0 : i32
    %c0_i32_0 = arith.constant 0 : i32
    %c0_i32_1 = arith.constant 0 : i32
    return %c0_i32, %c0_i32_0 : i32, i32
  }
  func.func @transform_5(%arg0: i32) -> (i32, i32) {
    %c0_i32 = arith.constant 0 : i32
    %c0_i32_0 = arith.constant 0 : i32
    %c0_i32_1 = arith.constant 0 : i32
    return %c0_i32, %c0_i32_0 : i32, i32
  }
  func.func @transform_6(%arg0: i32) -> (i32, i32) {
    %c0_i32 = arith.constant 0 : i32
    %c0_i32_0 = arith.constant 0 : i32
    %c0_i32_1 = arith.constant 0 : i32
    return %c0_i32, %c0_i32_0 : i32, i32
  }
  func.func @transform_7(%arg0: i32) -> (i32, i32) {
    %c0_i32 = arith.constant 0 : i32
    %c0_i32_0 = arith.constant 0 : i32
    %c0_i32_1 = arith.constant 0 : i32
    return %c0_i32, %c0_i32_0 : i32, i32
  }
  func.func @transform_8(%arg0: i32) -> (i32, i32) {
    %c0_i32 = arith.constant 0 : i32
    %c0_i32_0 = arith.constant 0 : i32
    %c0_i32_1 = arith.constant 0 : i32
    return %c0_i32, %c0_i32_0 : i32, i32
  }
  func.func @transform_9(%arg0: i32) -> (i32, i32) {
    %c0_i32 = arith.constant 0 : i32
    %c0_i32_0 = arith.constant 0 : i32
    %c0_i32_1 = arith.constant 0 : i32
    return %c0_i32, %c0_i32_0 : i32, i32
  }
  func.func @transform_10(%arg0: i32) -> (i32, i32) {
    %c0_i32 = arith.constant 0 : i32
    %c0_i32_0 = arith.constant 0 : i32
    %c0_i32_1 = arith.constant 0 : i32
    return %c0_i32, %c0_i32_0 : i32, i32
  }
  func.func @transform_11(%arg0: i32) -> (i32, i32) {
    %c0_i32 = arith.constant 0 : i32
    %c0_i32_0 = arith.constant 0 : i32
    %c0_i32_1 = arith.constant 0 : i32
    return %c0_i32, %c0_i32_0 : i32, i32
  }
  func.func @transform_12(%arg0: i32) -> (i32, i32) {
    %c0_i32 = arith.constant 0 : i32
    %c0_i32_0 = arith.constant 0 : i32
    %c0_i32_1 = arith.constant 0 : i32
    return %c0_i32, %c0_i32_0 : i32, i32
  }
  func.func @transform_13(%arg0: i32) -> (i32, i32) {
    %c0_i32 = arith.constant 0 : i32
    %c0_i32_0 = arith.constant 0 : i32
    %c0_i32_1 = arith.constant 0 : i32
    return %c0_i32, %c0_i32_0 : i32, i32
  }
  func.func @transform_14(%arg0: i32) -> (i32, i32) {
    %c0_i32 = arith.constant 0 : i32
    %c0_i32_0 = arith.constant 0 : i32
    %c0_i32_1 = arith.constant 0 : i32
    return %c0_i32, %c0_i32_0 : i32, i32
  }
  func.func @transform_15(%arg0: i32) -> (i32, i32) {
    %c0_i32 = arith.constant 0 : i32
    %c0_i32_0 = arith.constant 0 : i32
    %c0_i32_1 = arith.constant 0 : i32
    return %c0_i32, %c0_i32_0 : i32, i32
  }
  func.func @transform_16(%arg0: i32) -> (i32, i32) {
    %c0_i32 = arith.constant 0 : i32
    %c0_i32_0 = arith.constant 0 : i32
    %c0_i32_1 = arith.constant 0 : i32
    return %c0_i32, %c0_i32_0 : i32, i32
  }
  func.func @transform_17(%arg0: i32) -> (i32, i32) {
    %c0_i32 = arith.constant 0 : i32
    %c0_i32_0 = arith.constant 0 : i32
    %c0_i32_1 = arith.constant 0 : i32
    return %c0_i32, %c0_i32_0 : i32, i32
  }
  func.func @transform_18(%arg0: i32) -> (i32, i32) {
    %c0_i32 = arith.constant 0 : i32
    %c0_i32_0 = arith.constant 0 : i32
    return %arg0, %c0_i32 : i32, i32
  }
}

</mosaic_0001>

<llo_original>
// kernel: tpu_custom_call.1
$region0: #{tpu_custom_call.1}
  #allocation0 [shape = 'u32[]', space=smem, size = 0x4, offset = 0x4, fixed_abs, tag = 'smem constant byte address 0x4 - core index']
  #allocation1 [shape = 'u32[144,128]{1,0:T(1,128)}', space=vmem, size = 0x12000, scoped, tag = 'internal scratch']
  %s0 = inlined_call_operand.vmem [shape: f32[64,8], index: 0, kind: input, shape index: {}]
  %s1 = inlined_call_operand.vmem [shape: f32[4,12], index: 1, kind: input, shape index: {}]
  %s2 = inlined_call_operand.vmem [shape: f32[16,8], index: 2, kind: input, shape index: {}]
  %s3 = inlined_call_operand.vmem [shape: f32[8,16], index: 3, kind: input, shape index: {}]
  %s4 = inlined_call_operand.vmem [shape: f32[24,16], index: 4, kind: input, shape index: {}]
  %s5 = inlined_call_operand.vmem [shape: f32[1,16], index: 5, kind: input, shape index: {}]
  %s6 = inlined_call_operand.vmem [shape: f32[1,16], index: 6, kind: input, shape index: {}]
  %s7 = inlined_call_operand.vmem [shape: f32[1,16], index: 7, kind: input, shape index: {}]
  %s8 = inlined_call_operand.vmem [shape: f32[48,16], index: 8, kind: input, shape index: {}]
  %s9 = inlined_call_operand.vmem [shape: f32[1,16], index: 9, kind: input, shape index: {}]
  %s10 = inlined_call_operand.vmem [shape: f32[1,16], index: 10, kind: input, shape index: {}]
  %s11 = inlined_call_operand.vmem [shape: f32[1,16], index: 11, kind: input, shape index: {}]
  %s12 = inlined_call_operand.vmem [shape: f32[12,16], index: 12, kind: input, shape index: {}]
  %s13 = inlined_call_operand.vmem [shape: f32[1,16], index: 13, kind: input, shape index: {}]
  %s14 = inlined_call_operand.vmem [shape: f32[12,16], index: 14, kind: input, shape index: {}]
  %s15 = inlined_call_operand.vmem [shape: f32[1,16], index: 15, kind: input, shape index: {}]
  %s16 = inlined_call_operand.vmem [shape: f32[8,16], index: 16, kind: input, shape index: {}]
  %s17 = inlined_call_operand.vmem [shape: f32[1,16], index: 17, kind: input, shape index: {}]
  %s18 = inlined_call_operand.vmem [shape: f32[64,16], index: 18, kind: output, shape index: {}]
  %s19 = sld [smem:[#allocation0]]
  $region105: #{tpu_custom_call.1} parent=0
    _
  %s21 = ssub.s32 1, %s19
  %s22 = scalar_select 0, %s21, %s19
  loop: start=0, step=1, limit=4
  $region2: #{tpu_custom_call.1} parent=0 // loop_pre_header
    _
  $region3: #{tpu_custom_call.1} parent=0 // loop_header
    %s24 = sphi 0, %s28
    %p25 = scmp.ge.s32.totalorder %s24, 4
    %s34 = sphi 0, %s36
    %s37 = sphi 0, %s34
    %s38 = sphi 0, %s37
    %s54 = sphi 0, %s38
    %s58 = sphi 0, %s58
    %s60 = sphi 0, %s58
    %s61 = sphi 0, %s60
    %s75 = sphi 0, %s61
    %s79 = sphi 0, %s79
    %s81 = sphi 0, %s79
    %s82 = sphi 0, %s81
    %s96 = sphi 0, %s82
    %s100 = sphi 0, %s100
    %s102 = sphi 0, %s100
    %s103 = sphi 0, %s102
    %s117 = sphi 0, %s103
    %s121 = sphi 0, %s121
    %s123 = sphi 0, %s121
    %s124 = sphi 0, %s123
    %s138 = sphi 0, %s124
    %s142 = sphi 0, %s142
    %s144 = sphi 0, %s142
    %s145 = sphi 0, %s144
    %s159 = sphi 0, %s145
    %s163 = sphi 0, %s163
    %s165 = sphi 0, %s163
    %s166 = sphi 0, %s165
    %s180 = sphi 0, %s166
    %s184 = sphi 0, %s184
    %s186 = sphi 0, %s184
    %s187 = sphi 0, %s186
    %s201 = sphi 0, %s187
    %s205 = sphi 0, %s205
    %s207 = sphi 0, %s205
    %s208 = sphi 0, %s207
    %s222 = sphi 0, %s208
    %s226 = sphi 0, %s226
    %s228 = sphi 0, %s226
    %s229 = sphi 0, %s228
    %s243 = sphi 0, %s229
    %s247 = sphi 0, %s247
    %s249 = sphi 0, %s247
    %s250 = sphi 0, %s249
    %s264 = sphi 0, %s250
    %s268 = sphi 0, %s268
    %s270 = sphi 0, %s268
    %s271 = sphi 0, %s270
    %s285 = sphi 0, %s271
    %s289 = sphi 0, %s289
    %s291 = sphi 0, %s289
    %s292 = sphi 0, %s291
    %s306 = sphi 0, %s292
    %s310 = sphi 0, %s310
    %s312 = sphi 0, %s310
    %s313 = sphi 0, %s312
    %s327 = sphi 0, %s313
    %s331 = sphi 0, %s331
    %s333 = sphi 0, %s331
    %s334 = sphi 0, %s333
    %s348 = sphi 0, %s334
    %s352 = sphi 0, %s352
    %s354 = sphi 0, %s352
    %s355 = sphi 0, %s354
    %s369 = sphi 0, %s355
    %s373 = sphi 0, %s373
    %s375 = sphi 0, %s373
    %s376 = sphi 0, %s375
    %s390 = sphi 0, %s376
    %s394 = sphi 0, %s394
    %s396 = sphi 0, %s394
    %s397 = sphi 0, %s396
    %s411 = sphi 0, %s397
    %s417 = sphi 0, %s419
    %s420 = sphi 0, %s417
    %s421 = sphi 0, %s420
    %s437 = sphi 0, %s421
  $region4: #{tpu_custom_call.1} parent=0 // loop_header_branch
    %27 = sbr.rel (%p25) target = $region8
  $region5: #{tpu_custom_call.1} parent=0 // loop_body
    %s29 = ssub.s32 %s24, 1
    %s30 = ssub.s32 %s24, 2
    %s31 = sadd.s32 %s24, 1
    %s32 = ssub.s32 %s24, %s31
    %p33 = scmp.eq.s32.totalorder %s32, 0
    %s35 = sadd.s32 %s34, 1
    %s36 = scalar_select %p33, %s34, %s35
    %p39 = pneg %p33
    %p40 = scmp.eq.s32.totalorder %s24, 1
    %p41 = por %p39, %p40
    %p42 = scmp.ne.s32.totalorder %s34, %s37
    %p43 = scmp.eq.s32.totalorder %s24, 0
    %p44 = por %p42, %p43
    %p45 = scmp.ne.s32.totalorder %s34, %s37
    %p46 = scmp.eq.s32.totalorder %s29, 1
    %p47 = por %p45, %p46
    %p48 = scmp.ne.s32.totalorder %s37, %s38
    %p49 = scmp.eq.s32.totalorder %s29, 0
    %p50 = por %p48, %p49
    %p51 = scmp.ne.s32.totalorder %s37, %s38
    %p52 = scmp.eq.s32.totalorder %s30, 1
    %p53 = por %p51, %p52
    %p55 = scmp.ne.s32.totalorder %s38, %s54
    %p56 = scmp.eq.s32.totalorder %s30, 0
    %p57 = por %p55, %p56
    %s59 = sadd.s32 %s58, 1
    %p62 = scmp.eq.s32.totalorder %s24, 1
    %p63 = scmp.ne.s32.totalorder %s58, %s60
    %p64 = scmp.eq.s32.totalorder %s24, 0
    %p65 = por %p63, %p64
    %p66 = scmp.ne.s32.totalorder %s58, %s60
    %p67 = scmp.eq.s32.totalorder %s29, 1
    %p68 = por %p66, %p67
    %p69 = scmp.ne.s32.totalorder %s60, %s61
    %p70 = scmp.eq.s32.totalorder %s29, 0
    %p71 = por %p69, %p70
    %p72 = scmp.ne.s32.totalorder %s60, %s61
    %p73 = scmp.eq.s32.totalorder %s30, 1
    %p74 = por %p72, %p73
    %p76 = scmp.ne.s32.totalorder %s61, %s75
    %p77 = scmp.eq.s32.totalorder %s30, 0
    %p78 = por %p76, %p77
    %s80 = sadd.s32 %s79, 1
    %p83 = scmp.eq.s32.totalorder %s24, 1
    %p84 = scmp.ne.s32.totalorder %s79, %s81
    %p85 = scmp.eq.s32.totalorder %s24, 0
    %p86 = por %p84, %p85
    %p87 = scmp.ne.s32.totalorder %s79, %s81
    %p88 = scmp.eq.s32.totalorder %s29, 1
    %p89 = por %p87, %p88
    %p90 = scmp.ne.s32.totalorder %s81, %s82
    %p91 = scmp.eq.s32.totalorder %s29, 0
    %p92 = por %p90, %p91
    %p93 = scmp.ne.s32.totalorder %s81, %s82
    %p94 = scmp.eq.s32.totalorder %s30, 1
    %p95 = por %p93, %p94
    %p97 = scmp.ne.s32.totalorder %s82, %s96
    %p98 = scmp.eq.s32.totalorder %s30, 0
    %p99 = por %p97, %p98
    %s101 = sadd.s32 %s100, 1
    %p104 = scmp.eq.s32.totalorder %s24, 1
    %p105 = scmp.ne.s32.totalorder %s100, %s102
    %p106 = scmp.eq.s32.totalorder %s24, 0
    %p107 = por %p105, %p106
    %p108 = scmp.ne.s32.totalorder %s100, %s102
    %p109 = scmp.eq.s32.totalorder %s29, 1
    %p110 = por %p108, %p109
    %p111 = scmp.ne.s32.totalorder %s102, %s103
    %p112 = scmp.eq.s32.totalorder %s29, 0
    %p113 = por %p111, %p112
    %p114 = scmp.ne.s32.totalorder %s102, %s103
    %p115 = scmp.eq.s32.totalorder %s30, 1
    %p116 = por %p114, %p115
    %p118 = scmp.ne.s32.totalorder %s103, %s117
    %p119 = scmp.eq.s32.totalorder %s30, 0
    %p120 = por %p118, %p119
    %s122 = sadd.s32 %s121, 1
    %p125 = scmp.eq.s32.totalorder %s24, 1
    %p126 = scmp.ne.s32.totalorder %s121, %s123
    %p127 = scmp.eq.s32.totalorder %s24, 0
    %p128 = por %p126, %p127
    %p129 = scmp.ne.s32.totalorder %s121, %s123
    %p130 = scmp.eq.s32.totalorder %s29, 1
    %p131 = por %p129, %p130
    %p132 = scmp.ne.s32.totalorder %s123, %s124
    %p133 = scmp.eq.s32.totalorder %s29, 0
    %p134 = por %p132, %p133
    %p135 = scmp.ne.s32.totalorder %s123, %s124
    %p136 = scmp.eq.s32.totalorder %s30, 1
    %p137 = por %p135, %p136
    %p139 = scmp.ne.s32.totalorder %s124, %s138
    %p140 = scmp.eq.s32.totalorder %s30, 0
    %p141 = por %p139, %p140
    %s143 = sadd.s32 %s142, 1
    %p146 = scmp.eq.s32.totalorder %s24, 1
    %p147 = scmp.ne.s32.totalorder %s142, %s144
    %p148 = scmp.eq.s32.totalorder %s24, 0
    %p149 = por %p147, %p148
    %p150 = scmp.ne.s32.totalorder %s142, %s144
    %p151 = scmp.eq.s32.totalorder %s29, 1
    %p152 = por %p150, %p151
    %p153 = scmp.ne.s32.totalorder %s144, %s145
    %p154 = scmp.eq.s32.totalorder %s29, 0
    %p155 = por %p153, %p154
    %p156 = scmp.ne.s32.totalorder %s144, %s145
    %p157 = scmp.eq.s32.totalorder %s30, 1
    %p158 = por %p156, %p157
    %p160 = scmp.ne.s32.totalorder %s145, %s159
    %p161 = scmp.eq.s32.totalorder %s30, 0
    %p162 = por %p160, %p161
    %s164 = sadd.s32 %s163, 1
    %p167 = scmp.eq.s32.totalorder %s24, 1
    %p168 = scmp.ne.s32.totalorder %s163, %s165
    %p169 = scmp.eq.s32.totalorder %s24, 0
    %p170 = por %p168, %p169
    %p171 = scmp.ne.s32.totalorder %s163, %s165
    %p172 = scmp.eq.s32.totalorder %s29, 1
    %p173 = por %p171, %p172
    %p174 = scmp.ne.s32.totalorder %s165, %s166
    %p175 = scmp.eq.s32.totalorder %s29, 0
    %p176 = por %p174, %p175
    %p177 = scmp.ne.s32.totalorder %s165, %s166
    %p178 = scmp.eq.s32.totalorder %s30, 1
    %p179 = por %p177, %p178
    %p181 = scmp.ne.s32.totalorder %s166, %s180
    %p182 = scmp.eq.s32.totalorder %s30, 0
    %p183 = por %p181, %p182
    %s185 = sadd.s32 %s184, 1
    %p188 = scmp.eq.s32.totalorder %s24, 1
    %p189 = scmp.ne.s32.totalorder %s184, %s186
    %p190 = scmp.eq.s32.totalorder %s24, 0
    %p191 = por %p189, %p190
    %p192 = scmp.ne.s32.totalorder %s184, %s186
    %p193 = scmp.eq.s32.totalorder %s29, 1
    %p194 = por %p192, %p193
    %p195 = scmp.ne.s32.totalorder %s186, %s187
    %p196 = scmp.eq.s32.totalorder %s29, 0
    %p197 = por %p195, %p196
    %p198 = scmp.ne.s32.totalorder %s186, %s187
    %p199 = scmp.eq.s32.totalorder %s30, 1
    %p200 = por %p198, %p199
    %p202 = scmp.ne.s32.totalorder %s187, %s201
    %p203 = scmp.eq.s32.totalorder %s30, 0
    %p204 = por %p202, %p203
    %s206 = sadd.s32 %s205, 1
    %p209 = scmp.eq.s32.totalorder %s24, 1
    %p210 = scmp.ne.s32.totalorder %s205, %s207
    %p211 = scmp.eq.s32.totalorder %s24, 0
    %p212 = por %p210, %p211
    %p213 = scmp.ne.s32.totalorder %s205, %s207
    %p214 = scmp.eq.s32.totalorder %s29, 1
    %p215 = por %p213, %p214
    %p216 = scmp.ne.s32.totalorder %s207, %s208
    %p217 = scmp.eq.s32.totalorder %s29, 0
    %p218 = por %p216, %p217
    %p219 = scmp.ne.s32.totalorder %s207, %s208
    %p220 = scmp.eq.s32.totalorder %s30, 1
    %p221 = por %p219, %p220
    %p223 = scmp.ne.s32.totalorder %s208, %s222
    %p224 = scmp.eq.s32.totalorder %s30, 0
    %p225 = por %p223, %p224
    %s227 = sadd.s32 %s226, 1
    %p230 = scmp.eq.s32.totalorder %s24, 1
    %p231 = scmp.ne.s32.totalorder %s226, %s228
    %p232 = scmp.eq.s32.totalorder %s24, 0
    %p233 = por %p231, %p232
    %p234 = scmp.ne.s32.totalorder %s226, %s228
    %p235 = scmp.eq.s32.totalorder %s29, 1
    %p236 = por %p234, %p235
    %p237 = scmp.ne.s32.totalorder %s228, %s229
    %p238 = scmp.eq.s32.totalorder %s29, 0
    %p239 = por %p237, %p238
    %p240 = scmp.ne.s32.totalorder %s228, %s229
    %p241 = scmp.eq.s32.totalorder %s30, 1
    %p242 = por %p240, %p241
    %p244 = scmp.ne.s32.totalorder %s229, %s243
    %p245 = scmp.eq.s32.totalorder %s30, 0
    %p246 = por %p244, %p245
    %s248 = sadd.s32 %s247, 1
    %p251 = scmp.eq.s32.totalorder %s24, 1
    %p252 = scmp.ne.s32.totalorder %s247, %s249
    %p253 = scmp.eq.s32.totalorder %s24, 0
    %p254 = por %p252, %p253
    %p255 = scmp.ne.s32.totalorder %s247, %s249
    %p256 = scmp.eq.s32.totalorder %s29, 1
    %p257 = por %p255, %p256
    %p258 = scmp.ne.s32.totalorder %s249, %s250
    %p259 = scmp.eq.s32.totalorder %s29, 0
    %p260 = por %p258, %p259
    %p261 = scmp.ne.s32.totalorder %s249, %s250
    %p262 = scmp.eq.s32.totalorder %s30, 1
    %p263 = por %p261, %p262
    %p265 = scmp.ne.s32.totalorder %s250, %s264
    %p266 = scmp.eq.s32.totalorder %s30, 0
    %p267 = por %p265, %p266
    %s269 = sadd.s32 %s268, 1
    %p272 = scmp.eq.s32.totalorder %s24, 1
    %p273 = scmp.ne.s32.totalorder %s268, %s270
    %p274 = scmp.eq.s32.totalorder %s24, 0
    %p275 = por %p273, %p274
    %p276 = scmp.ne.s32.totalorder %s268, %s270
    %p277 = scmp.eq.s32.totalorder %s29, 1
    %p278 = por %p276, %p277
    %p279 = scmp.ne.s32.totalorder %s270, %s271
    %p280 = scmp.eq.s32.totalorder %s29, 0
    %p281 = por %p279, %p280
    %p282 = scmp.ne.s32.totalorder %s270, %s271
    %p283 = scmp.eq.s32.totalorder %s30, 1
    %p284 = por %p282, %p283
    %p286 = scmp.ne.s32.totalorder %s271, %s285
    %p287 = scmp.eq.s32.totalorder %s30, 0
    %p288 = por %p286, %p287
    %s290 = sadd.s32 %s289, 1
    %p293 = scmp.eq.s32.totalorder %s24, 1
    %p294 = scmp.ne.s32.totalorder %s289, %s291
    %p295 = scmp.eq.s32.totalorder %s24, 0
    %p296 = por %p294, %p295
    %p297 = scmp.ne.s32.totalorder %s289, %s291
    %p298 = scmp.eq.s32.totalorder %s29, 1
    %p299 = por %p297, %p298
    %p300 = scmp.ne.s32.totalorder %s291, %s292
    %p301 = scmp.eq.s32.totalorder %s29, 0
    %p302 = por %p300, %p301
    %p303 = scmp.ne.s32.totalorder %s291, %s292
    %p304 = scmp.eq.s32.totalorder %s30, 1
    %p305 = por %p303, %p304
    %p307 = scmp.ne.s32.totalorder %s292, %s306
    %p308 = scmp.eq.s32.totalorder %s30, 0
    %p309 = por %p307, %p308
    %s311 = sadd.s32 %s310, 1
    %p314 = scmp.eq.s32.totalorder %s24, 1
    %p315 = scmp.ne.s32.totalorder %s310, %s312
    %p316 = scmp.eq.s32.totalorder %s24, 0
    %p317 = por %p315, %p316
    %p318 = scmp.ne.s32.totalorder %s310, %s312
    %p319 = scmp.eq.s32.totalorder %s29, 1
    %p320 = por %p318, %p319
    %p321 = scmp.ne.s32.totalorder %s312, %s313
    %p322 = scmp.eq.s32.totalorder %s29, 0
    %p323 = por %p321, %p322
    %p324 = scmp.ne.s32.totalorder %s312, %s313
    %p325 = scmp.eq.s32.totalorder %s30, 1
    %p326 = por %p324, %p325
    %p328 = scmp.ne.s32.totalorder %s313, %s327
    %p329 = scmp.eq.s32.totalorder %s30, 0
    %p330 = por %p328, %p329
    %s332 = sadd.s32 %s331, 1
    %p335 = scmp.eq.s32.totalorder %s24, 1
    %p336 = scmp.ne.s32.totalorder %s331, %s333
    %p337 = scmp.eq.s32.totalorder %s24, 0
    %p338 = por %p336, %p337
    %p339 = scmp.ne.s32.totalorder %s331, %s333
    %p340 = scmp.eq.s32.totalorder %s29, 1
    %p341 = por %p339, %p340
    %p342 = scmp.ne.s32.totalorder %s333, %s334
    %p343 = scmp.eq.s32.totalorder %s29, 0
    %p344 = por %p342, %p343
    %p345 = scmp.ne.s32.totalorder %s333, %s334
    %p346 = scmp.eq.s32.totalorder %s30, 1
    %p347 = por %p345, %p346
    %p349 = scmp.ne.s32.totalorder %s334, %s348
    %p350 = scmp.eq.s32.totalorder %s30, 0
    %p351 = por %p349, %p350
    %s353 = sadd.s32 %s352, 1
    %p356 = scmp.eq.s32.totalorder %s24, 1
    %p357 = scmp.ne.s32.totalorder %s352, %s354
    %p358 = scmp.eq.s32.totalorder %s24, 0
    %p359 = por %p357, %p358
    %p360 = scmp.ne.s32.totalorder %s352, %s354
    %p361 = scmp.eq.s32.totalorder %s29, 1
    %p362 = por %p360, %p361
    %p363 = scmp.ne.s32.totalorder %s354, %s355
    %p364 = scmp.eq.s32.totalorder %s29, 0
    %p365 = por %p363, %p364
    %p366 = scmp.ne.s32.totalorder %s354, %s355
    %p367 = scmp.eq.s32.totalorder %s30, 1
    %p368 = por %p366, %p367
    %p370 = scmp.ne.s32.totalorder %s355, %s369
    %p371 = scmp.eq.s32.totalorder %s30, 0
    %p372 = por %p370, %p371
    %s374 = sadd.s32 %s373, 1
    %p377 = scmp.eq.s32.totalorder %s24, 1
    %p378 = scmp.ne.s32.totalorder %s373, %s375
    %p379 = scmp.eq.s32.totalorder %s24, 0
    %p380 = por %p378, %p379
    %p381 = scmp.ne.s32.totalorder %s373, %s375
    %p382 = scmp.eq.s32.totalorder %s29, 1
    %p383 = por %p381, %p382
    %p384 = scmp.ne.s32.totalorder %s375, %s376
    %p385 = scmp.eq.s32.totalorder %s29, 0
    %p386 = por %p384, %p385
    %p387 = scmp.ne.s32.totalorder %s375, %s376
    %p388 = scmp.eq.s32.totalorder %s30, 1
    %p389 = por %p387, %p388
    %p391 = scmp.ne.s32.totalorder %s376, %s390
    %p392 = scmp.eq.s32.totalorder %s30, 0
    %p393 = por %p391, %p392
    %s395 = sadd.s32 %s394, 1
    %p398 = scmp.eq.s32.totalorder %s24, 1
    %p399 = scmp.ne.s32.totalorder %s394, %s396
    %p400 = scmp.eq.s32.totalorder %s24, 0
    %p401 = por %p399, %p400
    %p402 = scmp.ne.s32.totalorder %s394, %s396
    %p403 = scmp.eq.s32.totalorder %s29, 1
    %p404 = por %p402, %p403
    %p405 = scmp.ne.s32.totalorder %s396, %s397
    %p406 = scmp.eq.s32.totalorder %s29, 0
    %p407 = por %p405, %p406
    %p408 = scmp.ne.s32.totalorder %s396, %s397
    %p409 = scmp.eq.s32.totalorder %s30, 1
    %p410 = por %p408, %p409
    %p412 = scmp.ne.s32.totalorder %s397, %s411
    %p413 = scmp.eq.s32.totalorder %s30, 0
    %p414 = por %p412, %p413
    %s415 = ssub.s32 %s24, %s31
    %p416 = scmp.eq.s32.totalorder %s415, 0
    %s418 = sadd.s32 %s417, 1
    %s419 = scalar_select %p416, %s417, %s418
    %p422 = pneg %p416
    %p423 = scmp.eq.s32.totalorder %s24, 1
    %p424 = por %p422, %p423
    %p425 = scmp.ne.s32.totalorder %s417, %s420
    %p426 = scmp.eq.s32.totalorder %s24, 0
    %p427 = por %p425, %p426
    %p428 = scmp.ne.s32.totalorder %s417, %s420
    %p429 = scmp.eq.s32.totalorder %s29, 1
    %p430 = por %p428, %p429
    %p431 = scmp.ne.s32.totalorder %s420, %s421
    %p432 = scmp.eq.s32.totalorder %s29, 0
    %p433 = por %p431, %p432
    %p434 = scmp.ne.s32.totalorder %s420, %s421
    %p435 = scmp.eq.s32.totalorder %s30, 1
    %p436 = por %p434, %p435
    %p438 = scmp.ne.s32.totalorder %s421, %s437
    %p439 = scmp.eq.s32.totalorder %s30, 0
    %p440 = por %p438, %p439
    %p441 = scmp.le.s32.totalorder 1, %s24
    %p442 = scmp.lt.s32.totalorder %s24, 3
    %p443 = pnand %p441, %p442
    %p444 = pneg %p443
    // Predicated region
    $region9: #{tpu_custom_call.1} parent=5 // pred_check
      _
    $region10: #{tpu_custom_call.1} parent=5 // pred_check_branch
      %446 = sbr.rel (%p443) target = $region12
    $region11: #{tpu_custom_call.1} parent=5 // pred_region
      %s447 = ssub.s32 %s24, 1
      // Predicated region
      $region13: #{tpu_custom_call.1} parent=11 // pred_check
        %p448 = pneg %p71
      $region14: #{tpu_custom_call.1} parent=11 // pred_check_branch
        %450 = sbr.rel (%p448) target = $region16
      $region15: #{tpu_custom_call.1} parent=11 // pred_region
        _
      $region16: #{tpu_custom_call.1} parent=11 // pred_fallthru
        _
      // Predicated region
      $region17: #{tpu_custom_call.1} parent=11 // pred_check
        %p451 = pneg %p92
      $region18: #{tpu_custom_call.1} parent=11 // pred_check_branch
        %453 = sbr.rel (%p451) target = $region20
      $region19: #{tpu_custom_call.1} parent=11 // pred_region
        _
      $region20: #{tpu_custom_call.1} parent=11 // pred_fallthru
        _
      // Predicated region
      $region21: #{tpu_custom_call.1} parent=11 // pred_check
        %p454 = pneg %p113
      $region22: #{tpu_custom_call.1} parent=11 // pred_check_branch
        %456 = sbr.rel (%p454) target = $region24
      $region23: #{tpu_custom_call.1} parent=11 // pred_region
        _
      $region24: #{tpu_custom_call.1} parent=11 // pred_fallthru
        _
      // Predicated region
      $region25: #{tpu_custom_call.1} parent=11 // pred_check
        %p457 = pneg %p134
      $region26: #{tpu_custom_call.1} parent=11 // pred_check_branch
        %459 = sbr.rel (%p457) target = $region28
      $region27: #{tpu_custom_call.1} parent=11 // pred_region
        _
      $region28: #{tpu_custom_call.1} parent=11 // pred_fallthru
        _
      // Predicated region
      $region29: #{tpu_custom_call.1} parent=11 // pred_check
        %p460 = pneg %p155
      $region30: #{tpu_custom_call.1} parent=11 // pred_check_branch
        %462 = sbr.rel (%p460) target = $region32
      $region31: #{tpu_custom_call.1} parent=11 // pred_region
        _
      $region32: #{tpu_custom_call.1} parent=11 // pred_fallthru
        _
      // Predicated region
      $region33: #{tpu_custom_call.1} parent=11 // pred_check
        %p463 = pneg %p176
      $region34: #{tpu_custom_call.1} parent=11 // pred_check_branch
        %465 = sbr.rel (%p463) target = $region36
      $region35: #{tpu_custom_call.1} parent=11 // pred_region
        _
      $region36: #{tpu_custom_call.1} parent=11 // pred_fallthru
        _
      // Predicated region
      $region37: #{tpu_custom_call.1} parent=11 // pred_check
        %p466 = pneg %p197
      $region38: #{tpu_custom_call.1} parent=11 // pred_check_branch
        %468 = sbr.rel (%p466) target = $region40
      $region39: #{tpu_custom_call.1} parent=11 // pred_region
        _
      $region40: #{tpu_custom_call.1} parent=11 // pred_fallthru
        _
      // Predicated region
      $region41: #{tpu_custom_call.1} parent=11 // pred_check
        %p469 = pneg %p218
      $region42: #{tpu_custom_call.1} parent=11 // pred_check_branch
        %471 = sbr.rel (%p469) target = $region44
      $region43: #{tpu_custom_call.1} parent=11 // pred_region
        _
      $region44: #{tpu_custom_call.1} parent=11 // pred_fallthru
        _
      // Predicated region
      $region45: #{tpu_custom_call.1} parent=11 // pred_check
        %p472 = pneg %p239
      $region46: #{tpu_custom_call.1} parent=11 // pred_check_branch
        %474 = sbr.rel (%p472) target = $region48
      $region47: #{tpu_custom_call.1} parent=11 // pred_region
        _
      $region48: #{tpu_custom_call.1} parent=11 // pred_fallthru
        _
      // Predicated region
      $region49: #{tpu_custom_call.1} parent=11 // pred_check
        %p475 = pneg %p260
      $region50: #{tpu_custom_call.1} parent=11 // pred_check_branch
        %477 = sbr.rel (%p475) target = $region52
      $region51: #{tpu_custom_call.1} parent=11 // pred_region
        _
      $region52: #{tpu_custom_call.1} parent=11 // pred_fallthru
        _
      // Predicated region
      $region53: #{tpu_custom_call.1} parent=11 // pred_check
        %p478 = pneg %p281
      $region54: #{tpu_custom_call.1} parent=11 // pred_check_branch
        %480 = sbr.rel (%p478) target = $region56
      $region55: #{tpu_custom_call.1} parent=11 // pred_region
        _
      $region56: #{tpu_custom_call.1} parent=11 // pred_fallthru
        _
      // Predicated region
      $region57: #{tpu_custom_call.1} parent=11 // pred_check
        %p481 = pneg %p302
      $region58: #{tpu_custom_call.1} parent=11 // pred_check_branch
        %483 = sbr.rel (%p481) target = $region60
      $region59: #{tpu_custom_call.1} parent=11 // pred_region
        _
      $region60: #{tpu_custom_call.1} parent=11 // pred_fallthru
        _
      // Predicated region
      $region61: #{tpu_custom_call.1} parent=11 // pred_check
        %p484 = pneg %p323
      $region62: #{tpu_custom_call.1} parent=11 // pred_check_branch
        %486 = sbr.rel (%p484) target = $region64
      $region63: #{tpu_custom_call.1} parent=11 // pred_region
        _
      $region64: #{tpu_custom_call.1} parent=11 // pred_fallthru
        _
      // Predicated region
      $region65: #{tpu_custom_call.1} parent=11 // pred_check
        %p487 = pneg %p344
      $region66: #{tpu_custom_call.1} parent=11 // pred_check_branch
        %489 = sbr.rel (%p487) target = $region68
      $region67: #{tpu_custom_call.1} parent=11 // pred_region
        _
      $region68: #{tpu_custom_call.1} parent=11 // pred_fallthru
        _
      // Predicated region
      $region69: #{tpu_custom_call.1} parent=11 // pred_check
        %p490 = pneg %p365
      $region70: #{tpu_custom_call.1} parent=11 // pred_check_branch
        %492 = sbr.rel (%p490) target = $region72
      $region71: #{tpu_custom_call.1} parent=11 // pred_region
        _
      $region72: #{tpu_custom_call.1} parent=11 // pred_fallthru
        _
      // Predicated region
      $region73: #{tpu_custom_call.1} parent=11 // pred_check
        %p493 = pneg %p386
      $region74: #{tpu_custom_call.1} parent=11 // pred_check_branch
        %495 = sbr.rel (%p493) target = $region76
      $region75: #{tpu_custom_call.1} parent=11 // pred_region
        _
      $region76: #{tpu_custom_call.1} parent=11 // pred_fallthru
        _
      // Predicated region
      $region77: #{tpu_custom_call.1} parent=11 // pred_check
        %p496 = pneg %p407
      $region78: #{tpu_custom_call.1} parent=11 // pred_check_branch
        %498 = sbr.rel (%p496) target = $region80
      $region79: #{tpu_custom_call.1} parent=11 // pred_region
        _
      $region80: #{tpu_custom_call.1} parent=11 // pred_fallthru
        _
    $region12: #{tpu_custom_call.1} parent=5 // pred_fallthru
      _
    %p499 = scmp.lt.s32.totalorder %s24, 2
    // Predicated region
    $region81: #{tpu_custom_call.1} parent=5 // pred_check
      %p500 = pneg %p499
    $region82: #{tpu_custom_call.1} parent=5 // pred_check_branch
      %502 = sbr.rel (%p500) target = $region84
    $region83: #{tpu_custom_call.1} parent=5 // pred_region
      // Predicated region
      $region85: #{tpu_custom_call.1} parent=83 // pred_check
        %p503 = pneg %p44
      $region86: #{tpu_custom_call.1} parent=83 // pred_check_branch
        %505 = sbr.rel (%p503) target = $region88
      $region87: #{tpu_custom_call.1} parent=83 // pred_region
        %s506 = smul.u32 4, %s24
        %p507 = scmp.lt.s32.totalorder %s506, 7
        %s508 = scalar_select %p507, %s506, 7
        %s509 = smul.addr %s508, 8
        %s510 = scalar_lea.vmem %s0, %s509
        %s511 = smul.u32 4, %s24
      $region88: #{tpu_custom_call.1} parent=83 // pred_fallthru
        _
    $region84: #{tpu_custom_call.1} parent=5 // pred_fallthru
      _
    %p512 = scmp.le.s32.totalorder 1, %s24
    %p513 = scmp.lt.s32.totalorder %s24, 3
    %p514 = pnand %p512, %p513
    %p515 = pneg %p514
    // Predicated region
    $region89: #{tpu_custom_call.1} parent=5 // pred_check
      _
    $region90: #{tpu_custom_call.1} parent=5 // pred_check_branch
      %517 = sbr.rel (%p514) target = $region92
    $region91: #{tpu_custom_call.1} parent=5 // pred_region
      %s518 = ssub.s32 %s24, 1
      %s519 = smul.u32 4, %s29
      %p520 = scmp.lt.s32.totalorder %s519, 7
      %s521 = scalar_select %p520, %s519, 7
      %s522 = smul.addr %s521, 8
      %s523 = scalar_lea.vmem %s0, %s522
      %p524 = pneg %p50
      %p525 = pneg %p47
      %p526 = pneg %p71
      %p527 = pneg %p68
      %p528 = pneg %p92
      %p529 = pneg %p89
      %p530 = pneg %p113
      %p531 = pneg %p110
      %p532 = pneg %p134
      %p533 = pneg %p131
      %p534 = pneg %p155
      %p535 = pneg %p152
      %p536 = pneg %p176
      %p537 = pneg %p173
      %p538 = pneg %p197
      %p539 = pneg %p194
      %p540 = pneg %p218
      %p541 = pneg %p215
      %p542 = pneg %p239
      %p543 = pneg %p236
      %p544 = pneg %p260
      %p545 = pneg %p257
      %p546 = pneg %p281
      %p547 = pneg %p278
      %p548 = pneg %p302
      %p549 = pneg %p299
      %p550 = pneg %p323
      %p551 = pneg %p320
      %p552 = pneg %p344
      %p553 = pneg %p341
      %p554 = pneg %p365
      %p555 = pneg %p362
      %p556 = pneg %p386
      %p557 = pneg %p383
      %p558 = pneg %p407
      %p559 = pneg %p404
      %p560 = pneg %p433
      %p561 = pneg %p430
      %s562 = smul.u32 4, %s29
      %p563 = scmp.lt.s32.totalorder %s562, 7
      %s564 = scalar_select %p563, %s562, 7
      %s565 = smul.addr %s564, 8
      %s566 = scalar_lea.vmem %s18, %s565
      %s567 = smul.u32 4, %s29
      %p568 = scmp.lt.s32.totalorder %s567, 7
      %s569 = scalar_select %p568, %s567, 7
      %s570 = smul.addr %s569, 8
      %s571 = scalar_lea.vmem %s0, %s570
      %s572 = smul.u32 4, %s29
      %s573 = smul.u32 4, %s29
      %p574 = scmp.lt.s32.totalorder %s573, 7
      %s575 = scalar_select %p574, %s573, 7
      %s576 = smul.addr %s575, 8
      %s577 = scalar_lea.vmem %s18, %s576
      %s578 = smul.u32 4, %s29
      %v579 = vld [vmem:[%s571] sm:$0xff]
      %v580 = vld [vmem:[%s571 + $0x8] sm:$0xff]
      %v581 = vld [vmem:[%s571 + $0x10] sm:$0xff]
      %v582 = vld [vmem:[%s571 + $0x18] sm:$0xff]
      %v583 = vlaneseq
      %v584 = vshrl.u32 %v583, 7
      %v585 = vadd.s32 %v584, 8
      %v586 = vadd.s32 %v584, 16
      %v587 = vadd.s32 %v584, 24
      %vm588 = vcmp.lt.s32.totalorder %v584, 0
      %v589 = vsub.s32 0, %v584
      %v590 = vsel %vm588, %v589, %v584
      %v591 = vshrl.u32 %v590, 4
      %v592 = vand.u32 %v590, 15
      %v593 = vsub.s32 0, %v592
      %v594 = vsel %vm588, %v593, %v592
      %vm595 = vcmp.lt.s32.totalorder %v585, 0
      %v596 = vsub.s32 0, %v585
      %v597 = vsel %vm595, %v596, %v585
      %v598 = vshrl.u32 %v597, 4
      %v599 = vand.u32 %v597, 15
      %v600 = vsub.s32 0, %v599
      %v601 = vsel %vm595, %v600, %v599
      %vm602 = vcmp.lt.s32.totalorder %v586, 0
      %v603 = vsub.s32 0, %v586
      %v604 = vsel %vm602, %v603, %v586
      %v605 = vshrl.u32 %v604, 4
      %v606 = vand.u32 %v604, 15
      %v607 = vsub.s32 0, %v606
      %v608 = vsel %vm602, %v607, %v606
      %vm609 = vcmp.lt.s32.totalorder %v587, 0
      %v610 = vsub.s32 0, %v587
      %v611 = vsel %vm609, %v610, %v587
      %v612 = vshrl.u32 %v611, 4
      %v613 = vand.u32 %v611, 15
      %v614 = vsub.s32 0, %v613
      %v615 = vsel %vm609, %v614, %v613
      %vm616 = vcmp.ne.s32.totalorder %v594, 0
      %vm617 = vcmp.ne.s32.totalorder %v601, 0
      %vm618 = vcmp.ne.s32.totalorder %v608, 0
      %vm619 = vcmp.ne.s32.totalorder %v615, 0
      %vm620 = vcmp.lt.s32.totalorder %v594, 0
      %vm621 = vcmp.lt.s32.totalorder %v601, 0
      %vm622 = vcmp.lt.s32.totalorder %v608, 0
      %vm623 = vcmp.lt.s32.totalorder %v615, 0
      %vm624 = vmand %vm620, %vm616
      %vm625 = vmand %vm621, %vm617
      %vm626 = vmand %vm622, %vm618
      %vm627 = vmand %vm623, %vm619
      %v628 = vadd.s32 %v594, 16
      %v629 = vadd.s32 %v601, 16
      %v630 = vadd.s32 %v608, 16
      %v631 = vadd.s32 %v615, 16
      %v632 = vsel %vm624, %v628, %v594
      %v633 = vsel %vm625, %v629, %v601
      %v634 = vsel %vm626, %v630, %v608
      %v635 = vsel %vm627, %v631, %v615
      %v636 = vrot.slane %v579, 7
      %v637 = vrot.slane %v580, 7
      %v638 = vrot.slane %v581, 7
      %v639 = vrot.slane %v582, 7
      %vm640 = vcmp.lt.s32.totalorder %v584, 1
      %v641 = vsel %vm640, %v638, %v639
      %v642 = vsel %vm640, %v637, %v638
      %v643 = vsel %vm640, %v636, %v637
      %v644 = vsel %vm640, %v639, %v636
      %v645 = vadd.s32 %v632, 4294967295
      %v646 = vadd.s32 %v633, 4294967295
      %v647 = vadd.s32 %v634, 4294967295
      %v648 = vadd.s32 %v635, 4294967295
      %vm649 = vcmp.ge.s32.totalorder %v645, 0
      %vm650 = vcmp.ge.s32.totalorder %v646, 0
      %vm651 = vcmp.ge.s32.totalorder %v647, 0
      %vm652 = vcmp.ge.s32.totalorder %v648, 0
      %vm653 = vcmp.lt.s32.totalorder %v645, 16
      %vm654 = vcmp.lt.s32.totalorder %v646, 16
      %vm655 = vcmp.lt.s32.totalorder %v647, 16
      %vm656 = vcmp.lt.s32.totalorder %v648, 16
      %vm657 = vmand %vm649, %vm653
      %vm658 = vmand %vm650, %vm654
      %vm659 = vmand %vm651, %vm655
      %vm660 = vmand %vm652, %vm656
      %v661 = vsel %vm657, 1, 0
      %v662 = vsel %vm658, 1, 0
      %v663 = vsel %vm659, 1, 0
      %v664 = vsel %vm660, 1, 0
      %vm665 = vcmp.eq.s32.totalorder %v661, 1
      %vm666 = vcmp.eq.s32.totalorder %v662, 1
      %vm667 = vcmp.eq.s32.totalorder %v663, 1
      %vm668 = vcmp.eq.s32.totalorder %v664, 1
      %v669 = vsel %vm665, %v644, 0.0
      %v670 = vsel %vm666, %v643, 0.0
      %v671 = vsel %vm667, %v642, 0.0
      %v672 = vsel %vm668, %v641, 0.0
      %v673 = vld [vmem:[%s4] sm:$0xff]
      %v674 = vld [vmem:[%s4 + $0x8] sm:$0xff]
      %vm675 = vcmask 64512
      %v677 = vsel %vm675, %v579, 0
      %v680 = vsel %vm675, %v580, 0
      %v683 = vsel %vm675, %v581, 0
      %v686 = vsel %vm675, %v582, 0
      %688 = vmatprep.subr.mxu0 0.0
      %689 = vmatpush1.msra.mxu0 0.0
      %690 = vmatprep.subr.mxu0 0.0
      %691 = vmatpush1.msra.mxu0 0.0
      %692 = vmatprep.subr.mxu0 0.0
      %693 = vmatpush1.msra.mxu0 0.0
      %694 = vmatprep.subr.mxu0 0.0
      %695 = vmatpush1.msra.mxu0 0.0
      %696 = vmatprep.subr.mxu0 0.0
      %697 = vmatpush1.msra.mxu0 0.0
      %698 = vmatprep.subr.mxu0 0.0
      %699 = vmatpush1.msra.mxu0 0.0
      %700 = vmatprep.subr.mxu0 0.0
      %701 = vmatpush1.msra.mxu0 0.0
      %702 = vmatprep.subr.mxu0 0.0
      %703 = vmatpush1.msra.mxu0 0.0
      %704 = vmatprep.subr.mxu0 0.0
      %705 = vmatpush1.msra.mxu0 0.0
      %706 = vmatprep.subr.mxu0 0.0
      %707 = vmatpush1.msra.mxu0 0.0
      %708 = vmatprep.subr.mxu0 0.0
      %709 = vmatpush1.msra.mxu0 0.0
      %710 = vmatprep.subr.mxu0 0.0
      %711 = vmatpush1.msra.mxu0 0.0
      %712 = vmatprep.subr.mxu0 0.0
      %713 = vmatpush1.msra.mxu0 0.0
      %714 = vmatprep.subr.mxu0 0.0
      %715 = vmatpush1.msra.mxu0 0.0
      %716 = vmatprep.subr.mxu0 0.0
      %717 = vmatpush1.msra.mxu0 0.0
      %718 = vmatprep.subr.mxu0 0.0
      %719 = vmatpush1.msra.mxu0 %v674
      %720 = vmatprep.subr.mxu0 0.0
      %721 = vmatpush2.msra.mxu0 0.0
      %722 = vmatprep.subr.mxu0 0.0
      %723 = vmatpush2.msra.mxu0 0.0
      %724 = vmatprep.subr.mxu0 0.0
      %725 = vmatpush2.msra.mxu0 0.0
      %726 = vmatprep.subr.mxu0 0.0
      %727 = vmatpush2.msra.mxu0 0.0
      %728 = vmatprep.subr.mxu0 0.0
      %729 = vmatpush2.msra.mxu0 0.0
      %730 = vmatprep.subr.mxu0 0.0
      %731 = vmatpush2.msra.mxu0 0.0
      %732 = vmatprep.subr.mxu0 0.0
      %733 = vmatpush2.msra.mxu0 0.0
      %734 = vmatprep.subr.mxu0 0.0
      %735 = vmatpush2.msra.mxu0 0.0
      %736 = vmatprep.subr.mxu0 0.0
      %737 = vmatpush2.msra.mxu0 0.0
      %738 = vmatprep.subr.mxu0 0.0
      %739 = vmatpush2.msra.mxu0 0.0
      %740 = vmatprep.subr.mxu0 0.0
      %741 = vmatpush2.msra.mxu0 0.0
      %742 = vmatprep.subr.mxu0 0.0
      %743 = vmatpush2.msra.mxu0 0.0
      %744 = vmatprep.subr.mxu0 0.0
      %745 = vmatpush2.msra.mxu0 0.0
      %746 = vmatprep.subr.mxu0 0.0
      %747 = vmatpush2.msra.mxu0 0.0
      %748 = vmatprep.subr.mxu0 0.0
      %749 = vmatpush2.msra.mxu0 0.0
      %750 = vmatprep.subr.mxu0 0.0
      %751 = vmatpush2.msra.mxu0 0.0
      %752 = vmatprep.mubr.f32.mxu0 0.0
      %753 = vmatmul.mubr.f32.gmra.mxu0 %v677
      %v754 = vpop.f32.mrf.mxu0
      %v755 = vadd.f32 0.0, %v754
      %v756 = vpop.f32.mrf.mxu0
      %757 = vmatprep.mubr.f32.mxu0 0.0
      %758 = vmatmul.mubr.f32.gmra.mxu0 %v680
      %v759 = vpop.f32.mrf.mxu0
      %v760 = vadd.f32 0.0, %v759
      %v761 = vpop.f32.mrf.mxu0
      %762 = vmatprep.mubr.f32.mxu0 0.0
      %763 = vmatmul.mubr.f32.gmra.mxu0 %v683
      %v764 = vpop.f32.mrf.mxu0
      %v765 = vadd.f32 0.0, %v764
      %v766 = vpop.f32.mrf.mxu0
      %767 = vmatprep.mubr.f32.mxu0 0.0
      %768 = vmatmul.mubr.f32.gmra.mxu0 %v686
      %v769 = vpop.f32.mrf.mxu0
      %v770 = vadd.f32 0.0, %v769
      %v771 = vpop.f32.mrf.mxu0
      %772 = vdwg.mxu0
      %v774 = vsel %vm675, %v669, 0
      %v777 = vsel %vm675, %v670, 0
      %v780 = vsel %vm675, %v671, 0
      %v783 = vsel %vm675, %v672, 0
      %785 = vmatprep.subr.mxu0 0.0
      %786 = vmatpush1.msra.mxu0 0.0
      %787 = vmatprep.subr.mxu0 0.0
      %788 = vmatpush1.msra.mxu0 0.0
      %789 = vmatprep.subr.mxu0 0.0
      %790 = vmatpush1.msra.mxu0 0.0
      %791 = vmatprep.subr.mxu0 0.0
      %792 = vmatpush1.msra.mxu0 0.0
      %793 = vmatprep.subr.mxu0 0.0
      %794 = vmatpush1.msra.mxu0 0.0
      %795 = vmatprep.subr.mxu0 0.0
      %796 = vmatpush1.msra.mxu0 0.0
      %797 = vmatprep.subr.mxu0 0.0
      %798 = vmatpush1.msra.mxu0 0.0
      %799 = vmatprep.subr.mxu0 0.0
      %800 = vmatpush1.msra.mxu0 0.0
      %801 = vmatprep.subr.mxu0 0.0
      %802 = vmatpush1.msra.mxu0 0.0
      %803 = vmatprep.subr.mxu0 0.0
      %804 = vmatpush1.msra.mxu0 0.0
      %805 = vmatprep.subr.mxu0 0.0
      %806 = vmatpush1.msra.mxu0 0.0
      %807 = vmatprep.subr.mxu0 0.0
      %808 = vmatpush1.msra.mxu0 0.0
      %809 = vmatprep.subr.mxu0 0.0
      %810 = vmatpush1.msra.mxu0 0.0
      %811 = vmatprep.subr.mxu0 0.0
      %812 = vmatpush1.msra.mxu0 0.0
      %813 = vmatprep.subr.mxu0 0.0
      %814 = vmatpush1.msra.mxu0 0.0
      %815 = vmatprep.subr.mxu0 0.0
      %816 = vmatpush1.msra.mxu0 %v673
      %817 = vmatprep.subr.mxu0 0.0
      %818 = vmatpush2.msra.mxu0 0.0
      %819 = vmatprep.subr.mxu0 0.0
      %820 = vmatpush2.msra.mxu0 0.0
      %821 = vmatprep.subr.mxu0 0.0
      %822 = vmatpush2.msra.mxu0 0.0
      %823 = vmatprep.subr.mxu0 0.0
      %824 = vmatpush2.msra.mxu0 0.0
      %825 = vmatprep.subr.mxu0 0.0
      %826 = vmatpush2.msra.mxu0 0.0
      %827 = vmatprep.subr.mxu0 0.0
      %828 = vmatpush2.msra.mxu0 0.0
      %829 = vmatprep.subr.mxu0 0.0
      %830 = vmatpush2.msra.mxu0 0.0
      %831 = vmatprep.subr.mxu0 0.0
      %832 = vmatpush2.msra.mxu0 0.0
      %833 = vmatprep.subr.mxu0 0.0
      %834 = vmatpush2.msra.mxu0 0.0
      %835 = vmatprep.subr.mxu0 0.0
      %836 = vmatpush2.msra.mxu0 0.0
      %837 = vmatprep.subr.mxu0 0.0
      %838 = vmatpush2.msra.mxu0 0.0
      %839 = vmatprep.subr.mxu0 0.0
      %840 = vmatpush2.msra.mxu0 0.0
      %841 = vmatprep.subr.mxu0 0.0
      %842 = vmatpush2.msra.mxu0 0.0
      %843 = vmatprep.subr.mxu0 0.0
      %844 = vmatpush2.msra.mxu0 0.0
      %845 = vmatprep.subr.mxu0 0.0
      %846 = vmatpush2.msra.mxu0 0.0
      %847 = vmatprep.subr.mxu0 0.0
      %848 = vmatpush2.msra.mxu0 0.0
      %849 = vmatprep.mubr.f32.mxu0 0.0
      %850 = vmatmul.mubr.f32.gmra.mxu0 %v774
      %v851 = vpop.f32.mrf.mxu0
      %v852 = vadd.f32 %v755, %v851
      %v853 = vpop.f32.mrf.mxu0
      %854 = vmatprep.mubr.f32.mxu0 0.0
      %855 = vmatmul.mubr.f32.gmra.mxu0 %v777
      %v856 = vpop.f32.mrf.mxu0
      %v857 = vadd.f32 %v760, %v856
      %v858 = vpop.f32.mrf.mxu0
      %859 = vmatprep.mubr.f32.mxu0 0.0
      %860 = vmatmul.mubr.f32.gmra.mxu0 %v780
      %v861 = vpop.f32.mrf.mxu0
      %v862 = vadd.f32 %v765, %v861
      %v863 = vpop.f32.mrf.mxu0
      %864 = vmatprep.mubr.f32.mxu0 0.0
      %865 = vmatmul.mubr.f32.gmra.mxu0 %v783
      %v866 = vpop.f32.mrf.mxu0
      %v867 = vadd.f32 %v770, %v866
      %v868 = vpop.f32.mrf.mxu0
      %869 = vdwg.mxu0
      %v870 = vrot.slane %v579, 1
      %v871 = vrot.slane %v580, 1
      %v872 = vrot.slane %v581, 1
      %v873 = vrot.slane %v582, 1
      %vm874 = vcmp.lt.s32.totalorder %v584, 7
      %v875 = vsel %vm874, %v872, %v873
      %v876 = vsel %vm874, %v871, %v872
      %v877 = vsel %vm874, %v870, %v871
      %v878 = vsel %vm874, %v873, %v870
      %v879 = vadd.s32 %v632, 1
      %v880 = vadd.s32 %v633, 1
      %v881 = vadd.s32 %v634, 1
      %v882 = vadd.s32 %v635, 1
      %vm883 = vcmp.ge.s32.totalorder %v879, 0
      %vm884 = vcmp.ge.s32.totalorder %v880, 0
      %vm885 = vcmp.ge.s32.totalorder %v881, 0
      %vm886 = vcmp.ge.s32.totalorder %v882, 0
      %vm887 = vcmp.lt.s32.totalorder %v879, 16
      %vm888 = vcmp.lt.s32.totalorder %v880, 16
      %vm889 = vcmp.lt.s32.totalorder %v881, 16
      %vm890 = vcmp.lt.s32.totalorder %v882, 16
      %vm891 = vmand %vm883, %vm887
      %vm892 = vmand %vm884, %vm888
      %vm893 = vmand %vm885, %vm889
      %vm894 = vmand %vm886, %vm890
      %v895 = vsel %vm891, 1, 0
      %v896 = vsel %vm892, 1, 0
      %v897 = vsel %vm893, 1, 0
      %v898 = vsel %vm894, 1, 0
      %vm899 = vcmp.eq.s32.totalorder %v895, 1
      %vm900 = vcmp.eq.s32.totalorder %v896, 1
      %vm901 = vcmp.eq.s32.totalorder %v897, 1
      %vm902 = vcmp.eq.s32.totalorder %v898, 1
      %v903 = vsel %vm899, %v877, 0.0
      %v904 = vsel %vm900, %v876, 0.0
      %v905 = vsel %vm901, %v875, 0.0
      %v906 = vsel %vm902, %v878, 0.0
      %v907 = vld [vmem:[%s4 + $0x10] sm:$0xff]
      %v909 = vsel %vm675, %v903, 0
      %v912 = vsel %vm675, %v904, 0
      %v915 = vsel %vm675, %v905, 0
      %v918 = vsel %vm675, %v906, 0
      %920 = vmatprep.subr.mxu0 0.0
      %921 = vmatpush1.msra.mxu0 0.0
      %922 = vmatprep.subr.mxu0 0.0
      %923 = vmatpush1.msra.mxu0 0.0
      %924 = vmatprep.subr.mxu0 0.0
      %925 = vmatpush1.msra.mxu0 0.0
      %926 = vmatprep.subr.mxu0 0.0
      %927 = vmatpush1.msra.mxu0 0.0
      %928 = vmatprep.subr.mxu0 0.0
      %929 = vmatpush1.msra.mxu0 0.0
      %930 = vmatprep.subr.mxu0 0.0
      %931 = vmatpush1.msra.mxu0 0.0
      %932 = vmatprep.subr.mxu0 0.0
      %933 = vmatpush1.msra.mxu0 0.0
      %934 = vmatprep.subr.mxu0 0.0
      %935 = vmatpush1.msra.mxu0 0.0
      %936 = vmatprep.subr.mxu0 0.0
      %937 = vmatpush1.msra.mxu0 0.0
      %938 = vmatprep.subr.mxu0 0.0
      %939 = vmatpush1.msra.mxu0 0.0
      %940 = vmatprep.subr.mxu0 0.0
      %941 = vmatpush1.msra.mxu0 0.0
      %942 = vmatprep.subr.mxu0 0.0
      %943 = vmatpush1.msra.mxu0 0.0
      %944 = vmatprep.subr.mxu0 0.0
      %945 = vmatpush1.msra.mxu0 0.0
      %946 = vmatprep.subr.mxu0 0.0
      %947 = vmatpush1.msra.mxu0 0.0
      %948 = vmatprep.subr.mxu0 0.0
      %949 = vmatpush1.msra.mxu0 0.0
      %950 = vmatprep.subr.mxu0 0.0
      %951 = vmatpush1.msra.mxu0 %v907
      %952 = vmatprep.subr.mxu0 0.0
      %953 = vmatpush2.msra.mxu0 0.0
      %954 = vmatprep.subr.mxu0 0.0
      %955 = vmatpush2.msra.mxu0 0.0
      %956 = vmatprep.subr.mxu0 0.0
      %957 = vmatpush2.msra.mxu0 0.0
      %958 = vmatprep.subr.mxu0 0.0
      %959 = vmatpush2.msra.mxu0 0.0
      %960 = vmatprep.subr.mxu0 0.0
      %961 = vmatpush2.msra.mxu0 0.0
      %962 = vmatprep.subr.mxu0 0.0
      %963 = vmatpush2.msra.mxu0 0.0
      %964 = vmatprep.subr.mxu0 0.0
      %965 = vmatpush2.msra.mxu0 0.0
      %966 = vmatprep.subr.mxu0 0.0
      %967 = vmatpush2.msra.mxu0 0.0
      %968 = vmatprep.subr.mxu0 0.0
      %969 = vmatpush2.msra.mxu0 0.0
      %970 = vmatprep.subr.mxu0 0.0
      %971 = vmatpush2.msra.mxu0 0.0
      %972 = vmatprep.subr.mxu0 0.0
      %973 = vmatpush2.msra.mxu0 0.0
      %974 = vmatprep.subr.mxu0 0.0
      %975 = vmatpush2.msra.mxu0 0.0
      %976 = vmatprep.subr.mxu0 0.0
      %977 = vmatpush2.msra.mxu0 0.0
      %978 = vmatprep.subr.mxu0 0.0
      %979 = vmatpush2.msra.mxu0 0.0
      %980 = vmatprep.subr.mxu0 0.0
      %981 = vmatpush2.msra.mxu0 0.0
      %982 = vmatprep.subr.mxu0 0.0
      %983 = vmatpush2.msra.mxu0 0.0
      %984 = vmatprep.mubr.f32.mxu0 0.0
      %985 = vmatmul.mubr.f32.gmra.mxu0 %v909
      %v986 = vpop.f32.mrf.mxu0
      %v987 = vadd.f32 0.0, %v986
      %v988 = vpop.f32.mrf.mxu0
      %989 = vmatprep.mubr.f32.mxu0 0.0
      %990 = vmatmul.mubr.f32.gmra.mxu0 %v912
      %v991 = vpop.f32.mrf.mxu0
      %v992 = vadd.f32 0.0, %v991
      %v993 = vpop.f32.mrf.mxu0
      %994 = vmatprep.mubr.f32.mxu0 0.0
      %995 = vmatmul.mubr.f32.gmra.mxu0 %v915
      %v996 = vpop.f32.mrf.mxu0
      %v997 = vadd.f32 0.0, %v996
      %v998 = vpop.f32.mrf.mxu0
      %999 = vmatprep.mubr.f32.mxu0 0.0
      %1000 = vmatmul.mubr.f32.gmra.mxu0 %v918
      %v1001 = vpop.f32.mrf.mxu0
      %v1002 = vadd.f32 0.0, %v1001
      %v1003 = vpop.f32.mrf.mxu0
      %1004 = vdwg.mxu0
      %v1005 = vadd.f32 %v852, %v987
      %v1006 = vadd.f32 %v857, %v992
      %v1007 = vadd.f32 %v862, %v997
      %v1008 = vadd.f32 %v867, %v1002
      %v1009 = vld [vmem:[%s5] sm:$0x1]
      %v1011 = vlaneseq
      %v1012 = vshrl.u32 %v1011, 7
      %v1013 = vsub.s32 0, %v1012
      %v1014 = vrot.slane %v1009, %v1013
      %v1016 = vadd.f32 %v1005, %v1014
      %v1017 = vadd.f32 %v1006, %v1014
      %v1018 = vadd.f32 %v1007, %v1014
      %v1019 = vadd.f32 %v1008, %v1014
      %vm1020 = vcmask 130048
      %v1021 = vsel %vm1020, %v1016, 0.0
      %v1022 = vsel %vm1020, %v1017, 0.0
      %v1023 = vadd.f32 %v1021, %v1022
      %v1024 = vrot.slane %v1023, 4
      %v1025 = vadd.f32 %v1023, %v1024
      %v1026 = vrot.slane %v1025, 2
      %v1027 = vadd.f32 %v1025, %v1026
      %v1028 = vrot.slane %v1027, 1
      %v1029 = vadd.f32 %v1027, %v1028
      %v1030 = vsel %vm1020, %v1018, 0.0
      %v1031 = vsel %vm1020, %v1019, 0.0
      %v1032 = vadd.f32 %v1030, %v1031
      %v1033 = vrot.slane %v1032, 4
      %v1034 = vadd.f32 %v1032, %v1033
      %v1035 = vrot.slane %v1034, 2
      %v1036 = vadd.f32 %v1034, %v1035
      %v1037 = vrot.slane %v1036, 1
      %v1038 = vadd.f32 %v1036, %v1037
      %v1039 = vmul.f32 %v1016, %v1016
      %v1040 = vmul.f32 %v1017, %v1017
      %v1041 = vmul.f32 %v1018, %v1018
      %v1042 = vmul.f32 %v1019, %v1019
      %v1043 = vsel %vm1020, %v1039, 0.0
      %v1044 = vsel %vm1020, %v1040, 0.0
      %v1045 = vadd.f32 %v1043, %v1044
      %v1046 = vrot.slane %v1045, 4
      %v1047 = vadd.f32 %v1045, %v1046
      %v1048 = vrot.slane %v1047, 2
      %v1049 = vadd.f32 %v1047, %v1048
      %v1050 = vrot.slane %v1049, 1
      %v1051 = vadd.f32 %v1049, %v1050
      %v1052 = vsel %vm1020, %v1041, 0.0
      %v1053 = vsel %vm1020, %v1042, 0.0
      %v1054 = vadd.f32 %v1052, %v1053
      %v1055 = vrot.slane %v1054, 4
      %v1056 = vadd.f32 %v1054, %v1055
      %v1057 = vrot.slane %v1056, 2
      %v1058 = vadd.f32 %v1056, %v1057
      %v1059 = vrot.slane %v1058, 1
      %v1060 = vadd.f32 %v1058, %v1059
      %vm1063 = vcmask 1041409
      %v1064 = vsel %vm1063, %v1038, %v1029
      %vm1068 = vcmask 1043459
      %v1069 = vsel %vm1068, %v1060, %v1051
      %vm1071 = vcmask 1041408
      %v1072 = vsel %vm1071, %v1064, %v1069
      %v1073 = vld [vmem:[%s2] sm:$0xff]
      %v1074 = vld [vmem:[%s2 + $0x8] sm:$0xff]
      %v1076 = vsel %vm1020, %v1072, 0
      %1078 = vmatprep.subr.mxu0 0.0
      %1079 = vmatpush1.msra.mxu0 0.0
      %1080 = vmatprep.subr.mxu0 0.0
      %1081 = vmatpush1.msra.mxu0 0.0
      %1082 = vmatprep.subr.mxu0 0.0
      %1083 = vmatpush1.msra.mxu0 0.0
      %1084 = vmatprep.subr.mxu0 0.0
      %1085 = vmatpush1.msra.mxu0 0.0
      %1086 = vmatprep.subr.mxu0 0.0
      %1087 = vmatpush1.msra.mxu0 0.0
      %1088 = vmatprep.subr.mxu0 0.0
      %1089 = vmatpush1.msra.mxu0 0.0
      %1090 = vmatprep.subr.mxu0 0.0
      %1091 = vmatpush1.msra.mxu0 0.0
      %1092 = vmatprep.subr.mxu0 0.0
      %1093 = vmatpush1.msra.mxu0 0.0
      %1094 = vmatprep.subr.mxu0 0.0
      %1095 = vmatpush1.msra.mxu0 0.0
      %1096 = vmatprep.subr.mxu0 0.0
      %1097 = vmatpush1.msra.mxu0 0.0
      %1098 = vmatprep.subr.mxu0 0.0
      %1099 = vmatpush1.msra.mxu0 0.0
      %1100 = vmatprep.subr.mxu0 0.0
      %1101 = vmatpush1.msra.mxu0 0.0
      %1102 = vmatprep.subr.mxu0 0.0
      %1103 = vmatpush1.msra.mxu0 0.0
      %1104 = vmatprep.subr.mxu0 0.0
      %1105 = vmatpush1.msra.mxu0 0.0
      %1106 = vmatprep.subr.mxu0 0.0
      %1107 = vmatpush1.msra.mxu0 %v1074
      %1108 = vmatprep.subr.mxu0 0.0
      %1109 = vmatpush1.msra.mxu0 %v1073
      %1110 = vmatprep.subr.mxu0 0.0
      %1111 = vmatpush2.msra.mxu0 0.0
      %1112 = vmatprep.subr.mxu0 0.0
      %1113 = vmatpush2.msra.mxu0 0.0
      %1114 = vmatprep.subr.mxu0 0.0
      %1115 = vmatpush2.msra.mxu0 0.0
      %1116 = vmatprep.subr.mxu0 0.0
      %1117 = vmatpush2.msra.mxu0 0.0
      %1118 = vmatprep.subr.mxu0 0.0
      %1119 = vmatpush2.msra.mxu0 0.0
      %1120 = vmatprep.subr.mxu0 0.0
      %1121 = vmatpush2.msra.mxu0 0.0
      %1122 = vmatprep.subr.mxu0 0.0
      %1123 = vmatpush2.msra.mxu0 0.0
      %1124 = vmatprep.subr.mxu0 0.0
      %1125 = vmatpush2.msra.mxu0 0.0
      %1126 = vmatprep.subr.mxu0 0.0
      %1127 = vmatpush2.msra.mxu0 0.0
      %1128 = vmatprep.subr.mxu0 0.0
      %1129 = vmatpush2.msra.mxu0 0.0
      %1130 = vmatprep.subr.mxu0 0.0
      %1131 = vmatpush2.msra.mxu0 0.0
      %1132 = vmatprep.subr.mxu0 0.0
      %1133 = vmatpush2.msra.mxu0 0.0
      %1134 = vmatprep.subr.mxu0 0.0
      %1135 = vmatpush2.msra.mxu0 0.0
      %1136 = vmatprep.subr.mxu0 0.0
      %1137 = vmatpush2.msra.mxu0 0.0
      %1138 = vmatprep.subr.mxu0 0.0
      %1139 = vmatpush2.msra.mxu0 0.0
      %1140 = vmatprep.subr.mxu0 0.0
      %1141 = vmatpush2.msra.mxu0 0.0
      %1142 = vmatprep.mubr.f32.mxu0 0.0
      %1143 = vmatmul.mubr.f32.gmra.mxu0 %v1076
      %v1144 = vpop.f32.mrf.mxu0
      %v1145 = vadd.f32 0.0, %v1144
      %v1146 = vpop.f32.mrf.mxu0
      %1147 = vdwg.mxu0
      %v1148 = vmul.f32 %v1145, 0.03125
      %v1149 = vmul.f32 %v1148, %v1148
      %v1151 = vrot.slane %v1149, 6
      %v1153 = vsub.f32 %v1148, %v1151
      %v1154 = vmax.f32 %v1153, 0.0
      %v1155 = vadd.f32 %v1154, 1e-05
      %v1156 = vrsqrt.pop %v1155
      %v1157 = vsub.f32 0.0, %v1148
      %v1159 = vrot.slane %v1156, 2
      %v1161 = vmul.f32 %v1157, %v1159
      %v1163 = vrot.slane %v1161, 6
      %v1165 = vsel %vm1071, %v1159, %v1163
      %v1166 = vld [vmem:[%s3] sm:$0xff]
      %v1168 = vsel %vm675, %v1165, 0
      %1170 = vmatprep.subr.mxu0 0.0
      %1171 = vmatpush1.msra.mxu0 0.0
      %1172 = vmatprep.subr.mxu0 0.0
      %1173 = vmatpush1.msra.mxu0 0.0
      %1174 = vmatprep.subr.mxu0 0.0
      %1175 = vmatpush1.msra.mxu0 0.0
      %1176 = vmatprep.subr.mxu0 0.0
      %1177 = vmatpush1.msra.mxu0 0.0
      %1178 = vmatprep.subr.mxu0 0.0
      %1179 = vmatpush1.msra.mxu0 0.0
      %1180 = vmatprep.subr.mxu0 0.0
      %1181 = vmatpush1.msra.mxu0 0.0
      %1182 = vmatprep.subr.mxu0 0.0
      %1183 = vmatpush1.msra.mxu0 0.0
      %1184 = vmatprep.subr.mxu0 0.0
      %1185 = vmatpush1.msra.mxu0 0.0
      %1186 = vmatprep.subr.mxu0 0.0
      %1187 = vmatpush1.msra.mxu0 0.0
      %1188 = vmatprep.subr.mxu0 0.0
      %1189 = vmatpush1.msra.mxu0 0.0
      %1190 = vmatprep.subr.mxu0 0.0
      %1191 = vmatpush1.msra.mxu0 0.0
      %1192 = vmatprep.subr.mxu0 0.0
      %1193 = vmatpush1.msra.mxu0 0.0
      %1194 = vmatprep.subr.mxu0 0.0
      %1195 = vmatpush1.msra.mxu0 0.0
      %1196 = vmatprep.subr.mxu0 0.0
      %1197 = vmatpush1.msra.mxu0 0.0
      %1198 = vmatprep.subr.mxu0 0.0
      %1199 = vmatpush1.msra.mxu0 0.0
      %1200 = vmatprep.subr.mxu0 0.0
      %1201 = vmatpush1.msra.mxu0 %v1166
      %1202 = vmatprep.subr.mxu0 0.0
      %1203 = vmatpush2.msra.mxu0 0.0
      %1204 = vmatprep.subr.mxu0 0.0
      %1205 = vmatpush2.msra.mxu0 0.0
      %1206 = vmatprep.subr.mxu0 0.0
      %1207 = vmatpush2.msra.mxu0 0.0
      %1208 = vmatprep.subr.mxu0 0.0
      %1209 = vmatpush2.msra.mxu0 0.0
      %1210 = vmatprep.subr.mxu0 0.0
      %1211 = vmatpush2.msra.mxu0 0.0
      %1212 = vmatprep.subr.mxu0 0.0
      %1213 = vmatpush2.msra.mxu0 0.0
      %1214 = vmatprep.subr.mxu0 0.0
      %1215 = vmatpush2.msra.mxu0 0.0
      %1216 = vmatprep.subr.mxu0 0.0
      %1217 = vmatpush2.msra.mxu0 0.0
      %1218 = vmatprep.subr.mxu0 0.0
      %1219 = vmatpush2.msra.mxu0 0.0
      %1220 = vmatprep.subr.mxu0 0.0
      %1221 = vmatpush2.msra.mxu0 0.0
      %1222 = vmatprep.subr.mxu0 0.0
      %1223 = vmatpush2.msra.mxu0 0.0
      %1224 = vmatprep.subr.mxu0 0.0
      %1225 = vmatpush2.msra.mxu0 0.0
      %1226 = vmatprep.subr.mxu0 0.0
      %1227 = vmatpush2.msra.mxu0 0.0
      %1228 = vmatprep.subr.mxu0 0.0
      %1229 = vmatpush2.msra.mxu0 0.0
      %1230 = vmatprep.subr.mxu0 0.0
      %1231 = vmatpush2.msra.mxu0 0.0
      %1232 = vmatprep.subr.mxu0 0.0
      %1233 = vmatpush2.msra.mxu0 0.0
      %1234 = vmatprep.mubr.f32.mxu0 0.0
      %1235 = vmatmul.mubr.f32.gmra.mxu0 %v1168
      %v1236 = vpop.f32.mrf.mxu0
      %v1237 = vadd.f32 0.0, %v1236
      %v1238 = vpop.f32.mrf.mxu0
      %1239 = vdwg.mxu0
      %v1240 = vld [vmem:[%s6] sm:$0x1]
      %v1241 = vld [vmem:[%s7] sm:$0x1]
      %v1243 = vlaneseq
      %v1244 = vshrl.u32 %v1243, 7
      %v1245 = vsub.s32 0, %v1244
      %v1246 = vrot.slane %v1240, %v1245
      %v1248 = vmul.f32 %v1237, %v1246
      %v1251 = vunpack.c.l.s4 1966171168
      %v1252 = vunpack.c.0.s8 %v1251
      %v1253 = vlaneseq
      %v1254 = vshrl.u32 %v1253, 7
      %v1255 = vsub.s32 %v1252, %v1254
      %v1256 = vrot.slane %v1248, %v1255
      %v1257 = vcombine.high %v1256, %v1256
      %v1259 = vunpack.c.l.s4 1966171168
      %v1260 = vunpack.c.0.s8 %v1259
      %v1261 = vlaneseq
      %v1262 = vshrl.u32 %v1261, 7
      %v1263 = vsub.s32 %v1260, %v1262
      %v1264 = vrot.slane %v1256, %v1263
      %v1266 = vunpack.c.l.s4 1966171168
      %v1267 = vunpack.c.0.s8 %v1266
      %v1268 = vlaneseq
      %v1269 = vshrl.u32 %v1268, 7
      %v1270 = vsub.s32 %v1267, %v1269
      %v1271 = vrot.slane %v1257, %v1270
      %v1273 = vlaneseq
      %v1274 = vshrl.u32 %v1273, 7
      %v1275 = vsub.s32 0, %v1274
      %v1276 = vrot.slane %v1241, %v1275
      %v1278 = vadd.f32 %v1248, %v1276
      %v1281 = vunpack.c.l.s4 1966171168
      %v1282 = vunpack.c.0.s8 %v1281
      %v1283 = vlaneseq
      %v1284 = vshrl.u32 %v1283, 7
      %v1285 = vsub.s32 %v1282, %v1284
      %v1286 = vrot.slane %v1278, %v1285
      %v1287 = vcombine.high %v1286, %v1286
      %v1289 = vunpack.c.l.s4 1966171168
      %v1290 = vunpack.c.0.s8 %v1289
      %v1291 = vlaneseq
      %v1292 = vshrl.u32 %v1291, 7
      %v1293 = vsub.s32 %v1290, %v1292
      %v1294 = vrot.slane %v1286, %v1293
      %v1296 = vunpack.c.l.s4 1966171168
      %v1297 = vunpack.c.0.s8 %v1296
      %v1298 = vlaneseq
      %v1299 = vshrl.u32 %v1298, 7
      %v1300 = vsub.s32 %v1297, %v1299
      %v1301 = vrot.slane %v1287, %v1300
      %v1302 = vcombine.high %v1294, %v1294
      %v1303 = vcombine.high %v1301, %v1301
      %v1304 = vlaneseq
      %v1305 = vshrl.u32 %v1304, 7
      %v1306 = vsub.s32 0, %v1305
      %v1307 = vrot.slane %v1264, %v1306
      %v1308 = vlaneseq
      %v1309 = vshrl.u32 %v1308, 7
      %v1310 = vsub.s32 0, %v1309
      %v1311 = vrot.slane %v1271, %v1310
      %v1314 = vmul.f32 %v1016, %v1307
      %v1315 = vmul.f32 %v1017, %v1307
      %v1316 = vmul.f32 %v1018, %v1311
      %v1317 = vmul.f32 %v1019, %v1311
      %v1318 = vlaneseq
      %v1319 = vshrl.u32 %v1318, 7
      %v1320 = vsub.s32 0, %v1319
      %v1321 = vrot.slane %v1302, %v1320
      %v1322 = vlaneseq
      %v1323 = vshrl.u32 %v1322, 7
      %v1324 = vsub.s32 0, %v1323
      %v1325 = vrot.slane %v1303, %v1324
      %v1328 = vadd.f32 %v1314, %v1321
      %v1329 = vadd.f32 %v1315, %v1321
      %v1330 = vadd.f32 %v1316, %v1325
      %v1331 = vadd.f32 %v1317, %v1325
      %v1332 = vmin.f32 %v1328, 20.0
      %v1333 = vmin.f32 %v1329, 20.0
      %v1334 = vmin.f32 %v1330, 20.0
      %v1335 = vmin.f32 %v1331, 20.0
      %v1336 = vmul.f32 %v1332, 1.442695
      %v1337 = vpow.pop %v1336
      %v1338 = vmul.f32 %v1333, 1.442695
      %v1339 = vpow.pop %v1338
      %v1340 = vmul.f32 %v1334, 1.442695
      %v1341 = vpow.pop %v1340
      %v1342 = vmul.f32 %v1335, 1.442695
      %v1343 = vpow.pop %v1342
      %v1344 = vadd.f32 %v1337, 1.0
      %v1345 = vadd.f32 %v1339, 1.0
      %v1346 = vadd.f32 %v1341, 1.0
      %v1347 = vadd.f32 %v1343, 1.0
      %v1348 = vmul.f32 %v1344, %v1344
      %v1349 = vmul.f32 %v1345, %v1345
      %v1350 = vmul.f32 %v1346, %v1346
      %v1351 = vmul.f32 %v1347, %v1347
      %v1352 = vadd.f32 %v1348, 1.0
      %v1353 = vadd.f32 %v1349, 1.0
      %v1354 = vadd.f32 %v1350, 1.0
      %v1355 = vadd.f32 %v1351, 1.0
      %v1356 = vrcp.pop %v1352
      %v1357 = vrcp.pop %v1353
      %v1358 = vrcp.pop %v1354
      %v1359 = vrcp.pop %v1355
      %v1360 = vmul.f32 %v1352, %v1356
      %v1361 = vmul.f32 %v1353, %v1357
      %v1362 = vmul.f32 %v1354, %v1358
      %v1363 = vmul.f32 %v1355, %v1359
      %v1364 = vsub.f32 2.0, %v1360
      %v1365 = vsub.f32 2.0, %v1361
      %v1366 = vsub.f32 2.0, %v1362
      %v1367 = vsub.f32 2.0, %v1363
      %v1368 = vmul.f32 %v1356, %v1364
      %v1369 = vmul.f32 %v1357, %v1365
      %v1370 = vmul.f32 %v1358, %v1366
      %v1371 = vmul.f32 %v1359, %v1367
      %v1372 = vsub.f32 %v1348, 1.0
      %v1373 = vsub.f32 %v1349, 1.0
      %v1374 = vsub.f32 %v1350, 1.0
      %v1375 = vsub.f32 %v1351, 1.0
      %v1376 = vmul.f32 %v1328, %v1372
      %v1377 = vmul.f32 %v1329, %v1373
      %v1378 = vmul.f32 %v1330, %v1374
      %v1379 = vmul.f32 %v1331, %v1375
      %v1380 = vmul.f32 %v1376, %v1368
      %v1381 = vmul.f32 %v1377, %v1369
      %v1382 = vmul.f32 %v1378, %v1370
      %v1383 = vmul.f32 %v1379, %v1371
      %v1384 = vlaneseq
      %v1385 = vand.u32 %v1384, 127
      %s1386 = smul.u32 %s29, 2
      %v1387 = vstv %s1386
      %v1388 = vadd.s32 %v584, %v1387
      %vm1389 = vcmp.eq.s32.totalorder %v1385, %v1388
      %v1390 = vsel %vm1389, 1, 0
      %v1391 = vcvt.s32.f32 %v1390
      %v1392 = vld [vmem:[%s1] sm:$0xf]
      %vm1393 = vcmask 31744
      %v1395 = vsel %vm1393, %v1391, 0
      %vm1397 = vcmask 1043456
      %v1399 = vsel %vm1397, %v1392, 0
      %1401 = vmatprep.subr.mxu0 0.0
      %1402 = vmatpush1.msra.mxu0 0.0
      %1403 = vmatprep.subr.mxu0 0.0
      %1404 = vmatpush1.msra.mxu0 0.0
      %1405 = vmatprep.subr.mxu0 0.0
      %1406 = vmatpush1.msra.mxu0 0.0
      %1407 = vmatprep.subr.mxu0 0.0
      %1408 = vmatpush1.msra.mxu0 0.0
      %1409 = vmatprep.subr.mxu0 0.0
      %1410 = vmatpush1.msra.mxu0 0.0
      %1411 = vmatprep.subr.mxu0 0.0
      %1412 = vmatpush1.msra.mxu0 0.0
      %1413 = vmatprep.subr.mxu0 0.0
      %1414 = vmatpush1.msra.mxu0 0.0
      %1415 = vmatprep.subr.mxu0 0.0
      %1416 = vmatpush1.msra.mxu0 0.0
      %1417 = vmatprep.subr.mxu0 0.0
      %1418 = vmatpush1.msra.mxu0 0.0
      %1419 = vmatprep.subr.mxu0 0.0
      %1420 = vmatpush1.msra.mxu0 0.0
      %1421 = vmatprep.subr.mxu0 0.0
      %1422 = vmatpush1.msra.mxu0 0.0
      %1423 = vmatprep.subr.mxu0 0.0
      %1424 = vmatpush1.msra.mxu0 0.0
      %1425 = vmatprep.subr.mxu0 0.0
      %1426 = vmatpush1.msra.mxu0 0.0
      %1427 = vmatprep.subr.mxu0 0.0
      %1428 = vmatpush1.msra.mxu0 0.0
      %1429 = vmatprep.subr.mxu0 0.0
      %1430 = vmatpush1.msra.mxu0 0.0
      %1431 = vmatprep.subr.mxu0 0.0
      %1432 = vmatpush1.msra.mxu0 %v1399
      %1433 = vmatprep.subr.mxu0 0.0
      %1434 = vmatpush2.msra.mxu0 0.0
      %1435 = vmatprep.subr.mxu0 0.0
      %1436 = vmatpush2.msra.mxu0 0.0
      %1437 = vmatprep.subr.mxu0 0.0
      %1438 = vmatpush2.msra.mxu0 0.0
      %1439 = vmatprep.subr.mxu0 0.0
      %1440 = vmatpush2.msra.mxu0 0.0
      %1441 = vmatprep.subr.mxu0 0.0
      %1442 = vmatpush2.msra.mxu0 0.0
      %1443 = vmatprep.subr.mxu0 0.0
      %1444 = vmatpush2.msra.mxu0 0.0
      %1445 = vmatprep.subr.mxu0 0.0
      %1446 = vmatpush2.msra.mxu0 0.0
      %1447 = vmatprep.subr.mxu0 0.0
      %1448 = vmatpush2.msra.mxu0 0.0
      %1449 = vmatprep.subr.mxu0 0.0
      %1450 = vmatpush2.msra.mxu0 0.0
      %1451 = vmatprep.subr.mxu0 0.0
      %1452 = vmatpush2.msra.mxu0 0.0
      %1453 = vmatprep.subr.mxu0 0.0
      %1454 = vmatpush2.msra.mxu0 0.0
      %1455 = vmatprep.subr.mxu0 0.0
      %1456 = vmatpush2.msra.mxu0 0.0
      %1457 = vmatprep.subr.mxu0 0.0
      %1458 = vmatpush2.msra.mxu0 0.0
      %1459 = vmatprep.subr.mxu0 0.0
      %1460 = vmatpush2.msra.mxu0 0.0
      %1461 = vmatprep.subr.mxu0 0.0
      %1462 = vmatpush2.msra.mxu0 0.0
      %1463 = vmatprep.subr.mxu0 0.0
      %1464 = vmatpush2.msra.mxu0 0.0
      %1465 = vmatprep.mubr.f32.mxu0 0.0
      %1466 = vmatmul.mubr.f32.gmra.mxu0 %v1395
      %v1467 = vpop.f32.mrf.mxu0
      %v1468 = vadd.f32 0.0, %v1467
      %v1469 = vpop.f32.mrf.mxu0
      %1470 = vdwg.mxu0
      %v1471 = vmin.f32 %v1468, 20.0
      %v1472 = vmul.f32 %v1471, 1.442695
      %v1473 = vpow.pop %v1472
      %v1474 = vadd.f32 %v1473, 1.0
      %v1475 = vmul.f32 %v1474, %v1474
      %v1476 = vadd.f32 %v1475, 1.0
      %v1477 = vrcp.pop %v1476
      %v1478 = vmul.f32 %v1476, %v1477
      %v1479 = vsub.f32 2.0, %v1478
      %v1480 = vmul.f32 %v1477, %v1479
      %v1481 = vsub.f32 %v1475, 1.0
      %v1482 = vmul.f32 %v1468, %v1481
      %v1483 = vmul.f32 %v1482, %v1480
      %v1484 = vld [vmem:[%s12] sm:$0xff]
      %v1485 = vld [vmem:[%s12 + $0x8] sm:$0xf]
      %v1486 = vld [vmem:[%s14] sm:$0xff]
      %v1487 = vld [vmem:[%s14 + $0x8] sm:$0xf]
      %v1488 = vld [vmem:[%s13] sm:$0x1]
      %v1490 = vlaneseq
      %v1491 = vshrl.u32 %v1490, 7
      %v1492 = vsub.s32 0, %v1491
      %v1493 = vrot.slane %v1488, %v1492
      %vm1495 = vcmask 97280
      %v1497 = vsel %vm1495, %v1483, 0
      %v1500 = vsel %vm1397, %v1485, 0
      %1502 = vmatprep.subr.mxu0 0.0
      %1503 = vmatpush1.msra.mxu0 0.0
      %1504 = vmatprep.subr.mxu0 0.0
      %1505 = vmatpush1.msra.mxu0 0.0
      %1506 = vmatprep.subr.mxu0 0.0
      %1507 = vmatpush1.msra.mxu0 0.0
      %1508 = vmatprep.subr.mxu0 0.0
      %1509 = vmatpush1.msra.mxu0 0.0
      %1510 = vmatprep.subr.mxu0 0.0
      %1511 = vmatpush1.msra.mxu0 0.0
      %1512 = vmatprep.subr.mxu0 0.0
      %1513 = vmatpush1.msra.mxu0 0.0
      %1514 = vmatprep.subr.mxu0 0.0
      %1515 = vmatpush1.msra.mxu0 0.0
      %1516 = vmatprep.subr.mxu0 0.0
      %1517 = vmatpush1.msra.mxu0 0.0
      %1518 = vmatprep.subr.mxu0 0.0
      %1519 = vmatpush1.msra.mxu0 0.0
      %1520 = vmatprep.subr.mxu0 0.0
      %1521 = vmatpush1.msra.mxu0 0.0
      %1522 = vmatprep.subr.mxu0 0.0
      %1523 = vmatpush1.msra.mxu0 0.0
      %1524 = vmatprep.subr.mxu0 0.0
      %1525 = vmatpush1.msra.mxu0 0.0
      %1526 = vmatprep.subr.mxu0 0.0
      %1527 = vmatpush1.msra.mxu0 0.0
      %1528 = vmatprep.subr.mxu0 0.0
      %1529 = vmatpush1.msra.mxu0 0.0
      %1530 = vmatprep.subr.mxu0 0.0
      %1531 = vmatpush1.msra.mxu0 %v1500
      %1532 = vmatprep.subr.mxu0 0.0
      %1533 = vmatpush1.msra.mxu0 %v1484
      %1534 = vmatprep.subr.mxu0 0.0
      %1535 = vmatpush2.msra.mxu0 0.0
      %1536 = vmatprep.subr.mxu0 0.0
      %1537 = vmatpush2.msra.mxu0 0.0
      %1538 = vmatprep.subr.mxu0 0.0
      %1539 = vmatpush2.msra.mxu0 0.0
      %1540 = vmatprep.subr.mxu0 0.0
      %1541 = vmatpush2.msra.mxu0 0.0
      %1542 = vmatprep.subr.mxu0 0.0
      %1543 = vmatpush2.msra.mxu0 0.0
      %1544 = vmatprep.subr.mxu0 0.0
      %1545 = vmatpush2.msra.mxu0 0.0
      %1546 = vmatprep.subr.mxu0 0.0
      %1547 = vmatpush2.msra.mxu0 0.0
      %1548 = vmatprep.subr.mxu0 0.0
      %1549 = vmatpush2.msra.mxu0 0.0
      %1550 = vmatprep.subr.mxu0 0.0
      %1551 = vmatpush2.msra.mxu0 0.0
      %1552 = vmatprep.subr.mxu0 0.0
      %1553 = vmatpush2.msra.mxu0 0.0
      %1554 = vmatprep.subr.mxu0 0.0
      %1555 = vmatpush2.msra.mxu0 0.0
      %1556 = vmatprep.subr.mxu0 0.0
      %1557 = vmatpush2.msra.mxu0 0.0
      %1558 = vmatprep.subr.mxu0 0.0
      %1559 = vmatpush2.msra.mxu0 0.0
      %1560 = vmatprep.subr.mxu0 0.0
      %1561 = vmatpush2.msra.mxu0 0.0
      %1562 = vmatprep.subr.mxu0 0.0
      %1563 = vmatpush2.msra.mxu0 0.0
      %1564 = vmatprep.subr.mxu0 0.0
      %1565 = vmatpush2.msra.mxu0 0.0
      %1566 = vmatprep.mubr.f32.mxu0 0.0
      %1567 = vmatmul.mubr.f32.gmra.mxu0 %v1497
      %v1568 = vpop.f32.mrf.mxu0
      %v1569 = vadd.f32 %v1493, %v1568
      %v1570 = vpop.f32.mrf.mxu0
      %1571 = vdwg.mxu0
      %v1572 = vld [vmem:[%s15] sm:$0x1]
      %v1574 = vlaneseq
      %v1575 = vshrl.u32 %v1574, 7
      %v1576 = vsub.s32 0, %v1575
      %v1577 = vrot.slane %v1572, %v1576
      %v1580 = vsel %vm1397, %v1487, 0
      %1582 = vmatprep.subr.mxu0 0.0
      %1583 = vmatpush1.msra.mxu0 0.0
      %1584 = vmatprep.subr.mxu0 0.0
      %1585 = vmatpush1.msra.mxu0 0.0
      %1586 = vmatprep.subr.mxu0 0.0
      %1587 = vmatpush1.msra.mxu0 0.0
      %1588 = vmatprep.subr.mxu0 0.0
      %1589 = vmatpush1.msra.mxu0 0.0
      %1590 = vmatprep.subr.mxu0 0.0
      %1591 = vmatpush1.msra.mxu0 0.0
      %1592 = vmatprep.subr.mxu0 0.0
      %1593 = vmatpush1.msra.mxu0 0.0
      %1594 = vmatprep.subr.mxu0 0.0
      %1595 = vmatpush1.msra.mxu0 0.0
      %1596 = vmatprep.subr.mxu0 0.0
      %1597 = vmatpush1.msra.mxu0 0.0
      %1598 = vmatprep.subr.mxu0 0.0
      %1599 = vmatpush1.msra.mxu0 0.0
      %1600 = vmatprep.subr.mxu0 0.0
      %1601 = vmatpush1.msra.mxu0 0.0
      %1602 = vmatprep.subr.mxu0 0.0
      %1603 = vmatpush1.msra.mxu0 0.0
      %1604 = vmatprep.subr.mxu0 0.0
      %1605 = vmatpush1.msra.mxu0 0.0
      %1606 = vmatprep.subr.mxu0 0.0
      %1607 = vmatpush1.msra.mxu0 0.0
      %1608 = vmatprep.subr.mxu0 0.0
      %1609 = vmatpush1.msra.mxu0 0.0
      %1610 = vmatprep.subr.mxu0 0.0
      %1611 = vmatpush1.msra.mxu0 %v1580
      %1612 = vmatprep.subr.mxu0 0.0
      %1613 = vmatpush1.msra.mxu0 %v1486
      %1614 = vmatprep.subr.mxu0 0.0
      %1615 = vmatpush2.msra.mxu0 0.0
      %1616 = vmatprep.subr.mxu0 0.0
      %1617 = vmatpush2.msra.mxu0 0.0
      %1618 = vmatprep.subr.mxu0 0.0
      %1619 = vmatpush2.msra.mxu0 0.0
      %1620 = vmatprep.subr.mxu0 0.0
      %1621 = vmatpush2.msra.mxu0 0.0
      %1622 = vmatprep.subr.mxu0 0.0
      %1623 = vmatpush2.msra.mxu0 0.0
      %1624 = vmatprep.subr.mxu0 0.0
      %1625 = vmatpush2.msra.mxu0 0.0
      %1626 = vmatprep.subr.mxu0 0.0
      %1627 = vmatpush2.msra.mxu0 0.0
      %1628 = vmatprep.subr.mxu0 0.0
      %1629 = vmatpush2.msra.mxu0 0.0
      %1630 = vmatprep.subr.mxu0 0.0
      %1631 = vmatpush2.msra.mxu0 0.0
      %1632 = vmatprep.subr.mxu0 0.0
      %1633 = vmatpush2.msra.mxu0 0.0
      %1634 = vmatprep.subr.mxu0 0.0
      %1635 = vmatpush2.msra.mxu0 0.0
      %1636 = vmatprep.subr.mxu0 0.0
      %1637 = vmatpush2.msra.mxu0 0.0
      %1638 = vmatprep.subr.mxu0 0.0
      %1639 = vmatpush2.msra.mxu0 0.0
      %1640 = vmatprep.subr.mxu0 0.0
      %1641 = vmatpush2.msra.mxu0 0.0
      %1642 = vmatprep.subr.mxu0 0.0
      %1643 = vmatpush2.msra.mxu0 0.0
      %1644 = vmatprep.subr.mxu0 0.0
      %1645 = vmatpush2.msra.mxu0 0.0
      %1646 = vmatprep.mubr.f32.mxu0 0.0
      %1647 = vmatmul.mubr.f32.gmra.mxu0 %v1497
      %v1648 = vpop.f32.mrf.mxu0
      %v1649 = vadd.f32 %v1577, %v1648
      %v1650 = vpop.f32.mrf.mxu0
      %1651 = vdwg.mxu0
      %v1654 = vunpack.c.l.s4 1966171168
      %v1655 = vunpack.c.0.s8 %v1654
      %v1656 = vlaneseq
      %v1657 = vshrl.u32 %v1656, 7
      %v1658 = vsub.s32 %v1655, %v1657
      %v1659 = vrot.slane %v1569, %v1658
      %v1660 = vcombine.high %v1659, %v1659
      %v1662 = vunpack.c.l.s4 1966171168
      %v1663 = vunpack.c.0.s8 %v1662
      %v1664 = vlaneseq
      %v1665 = vshrl.u32 %v1664, 7
      %v1666 = vsub.s32 %v1663, %v1665
      %v1667 = vrot.slane %v1659, %v1666
      %v1669 = vunpack.c.l.s4 1966171168
      %v1670 = vunpack.c.0.s8 %v1669
      %v1671 = vlaneseq
      %v1672 = vshrl.u32 %v1671, 7
      %v1673 = vsub.s32 %v1670, %v1672
      %v1674 = vrot.slane %v1660, %v1673
      %v1675 = vlaneseq
      %v1676 = vshrl.u32 %v1675, 7
      %v1677 = vsub.s32 0, %v1676
      %v1678 = vrot.slane %v1667, %v1677
      %v1679 = vlaneseq
      %v1680 = vshrl.u32 %v1679, 7
      %v1681 = vsub.s32 0, %v1680
      %v1682 = vrot.slane %v1674, %v1681
      %v1685 = vmul.f32 %v1380, %v1678
      %v1686 = vmul.f32 %v1381, %v1678
      %v1687 = vmul.f32 %v1382, %v1682
      %v1688 = vmul.f32 %v1383, %v1682
      %v1691 = vunpack.c.l.s4 1966171168
      %v1692 = vunpack.c.0.s8 %v1691
      %v1693 = vlaneseq
      %v1694 = vshrl.u32 %v1693, 7
      %v1695 = vsub.s32 %v1692, %v1694
      %v1696 = vrot.slane %v1649, %v1695
      %v1697 = vcombine.high %v1696, %v1696
      %v1699 = vunpack.c.l.s4 1966171168
      %v1700 = vunpack.c.0.s8 %v1699
      %v1701 = vlaneseq
      %v1702 = vshrl.u32 %v1701, 7
      %v1703 = vsub.s32 %v1700, %v1702
      %v1704 = vrot.slane %v1696, %v1703
      %v1706 = vunpack.c.l.s4 1966171168
      %v1707 = vunpack.c.0.s8 %v1706
      %v1708 = vlaneseq
      %v1709 = vshrl.u32 %v1708, 7
      %v1710 = vsub.s32 %v1707, %v1709
      %v1711 = vrot.slane %v1697, %v1710
      %v1712 = vlaneseq
      %v1713 = vshrl.u32 %v1712, 7
      %v1714 = vsub.s32 0, %v1713
      %v1715 = vrot.slane %v1704, %v1714
      %v1716 = vlaneseq
      %v1717 = vshrl.u32 %v1716, 7
      %v1718 = vsub.s32 0, %v1717
      %v1719 = vrot.slane %v1711, %v1718
      %v1722 = vadd.f32 %v1685, %v1715
      %v1723 = vadd.f32 %v1686, %v1715
      %v1724 = vadd.f32 %v1687, %v1719
      %v1725 = vadd.f32 %v1688, %v1719
      %v1726 = vrot.slane %v1722, 7
      %v1727 = vrot.slane %v1723, 7
      %v1728 = vrot.slane %v1724, 7
      %v1729 = vrot.slane %v1725, 7
      %v1730 = vsel %vm640, %v1728, %v1729
      %v1731 = vsel %vm640, %v1727, %v1728
      %v1732 = vsel %vm640, %v1726, %v1727
      %v1733 = vsel %vm640, %v1729, %v1726
      %v1734 = vsel %vm665, %v1733, 0.0
      %v1735 = vsel %vm666, %v1732, 0.0
      %v1736 = vsel %vm667, %v1731, 0.0
      %v1737 = vsel %vm668, %v1730, 0.0
      %v1738 = vld [vmem:[%s8] sm:$0xff]
      %v1739 = vld [vmem:[%s8 + $0x8] sm:$0xff]
      %v1740 = vld [vmem:[%s8 + $0x10] sm:$0xff]
      %v1741 = vld [vmem:[%s8 + $0x18] sm:$0xff]
      %v1743 = vsel %vm1020, %v1722, 0
      %v1746 = vsel %vm1020, %v1723, 0
      %v1749 = vsel %vm1020, %v1724, 0
      %v1752 = vsel %vm1020, %v1725, 0
      %1754 = vmatprep.subr.mxu0 0.0
      %1755 = vmatpush1.msra.mxu0 0.0
      %1756 = vmatprep.subr.mxu0 0.0
      %1757 = vmatpush1.msra.mxu0 0.0
      %1758 = vmatprep.subr.mxu0 0.0
      %1759 = vmatpush1.msra.mxu0 0.0
      %1760 = vmatprep.subr.mxu0 0.0
      %1761 = vmatpush1.msra.mxu0 0.0
      %1762 = vmatprep.subr.mxu0 0.0
      %1763 = vmatpush1.msra.mxu0 0.0
      %1764 = vmatprep.subr.mxu0 0.0
      %1765 = vmatpush1.msra.mxu0 0.0
      %1766 = vmatprep.subr.mxu0 0.0
      %1767 = vmatpush1.msra.mxu0 0.0
      %1768 = vmatprep.subr.mxu0 0.0
      %1769 = vmatpush1.msra.mxu0 0.0
      %1770 = vmatprep.subr.mxu0 0.0
      %1771 = vmatpush1.msra.mxu0 0.0
      %1772 = vmatprep.subr.mxu0 0.0
      %1773 = vmatpush1.msra.mxu0 0.0
      %1774 = vmatprep.subr.mxu0 0.0
      %1775 = vmatpush1.msra.mxu0 0.0
      %1776 = vmatprep.subr.mxu0 0.0
      %1777 = vmatpush1.msra.mxu0 0.0
      %1778 = vmatprep.subr.mxu0 0.0
      %1779 = vmatpush1.msra.mxu0 0.0
      %1780 = vmatprep.subr.mxu0 0.0
      %1781 = vmatpush1.msra.mxu0 0.0
      %1782 = vmatprep.subr.mxu0 0.0
      %1783 = vmatpush1.msra.mxu0 %v1741
      %1784 = vmatprep.subr.mxu0 0.0
      %1785 = vmatpush1.msra.mxu0 %v1740
      %1786 = vmatprep.subr.mxu0 0.0
      %1787 = vmatpush2.msra.mxu0 0.0
      %1788 = vmatprep.subr.mxu0 0.0
      %1789 = vmatpush2.msra.mxu0 0.0
      %1790 = vmatprep.subr.mxu0 0.0
      %1791 = vmatpush2.msra.mxu0 0.0
      %1792 = vmatprep.subr.mxu0 0.0
      %1793 = vmatpush2.msra.mxu0 0.0
      %1794 = vmatprep.subr.mxu0 0.0
      %1795 = vmatpush2.msra.mxu0 0.0
      %1796 = vmatprep.subr.mxu0 0.0
      %1797 = vmatpush2.msra.mxu0 0.0
      %1798 = vmatprep.subr.mxu0 0.0
      %1799 = vmatpush2.msra.mxu0 0.0
      %1800 = vmatprep.subr.mxu0 0.0
      %1801 = vmatpush2.msra.mxu0 0.0
      %1802 = vmatprep.subr.mxu0 0.0
      %1803 = vmatpush2.msra.mxu0 0.0
      %1804 = vmatprep.subr.mxu0 0.0
      %1805 = vmatpush2.msra.mxu0 0.0
      %1806 = vmatprep.subr.mxu0 0.0
      %1807 = vmatpush2.msra.mxu0 0.0
      %1808 = vmatprep.subr.mxu0 0.0
      %1809 = vmatpush2.msra.mxu0 0.0
      %1810 = vmatprep.subr.mxu0 0.0
      %1811 = vmatpush2.msra.mxu0 0.0
      %1812 = vmatprep.subr.mxu0 0.0
      %1813 = vmatpush2.msra.mxu0 0.0
      %1814 = vmatprep.subr.mxu0 0.0
      %1815 = vmatpush2.msra.mxu0 0.0
      %1816 = vmatprep.subr.mxu0 0.0
      %1817 = vmatpush2.msra.mxu0 0.0
      %1818 = vmatprep.mubr.f32.mxu0 0.0
      %1819 = vmatmul.mubr.f32.gmra.mxu0 %v1743
      %v1820 = vpop.f32.mrf.mxu0
      %v1821 = vadd.f32 0.0, %v1820
      %v1822 = vpop.f32.mrf.mxu0
      %1823 = vmatprep.mubr.f32.mxu0 0.0
      %1824 = vmatmul.mubr.f32.gmra.mxu0 %v1746
      %v1825 = vpop.f32.mrf.mxu0
      %v1826 = vadd.f32 0.0, %v1825
      %v1827 = vpop.f32.mrf.mxu0
      %1828 = vmatprep.mubr.f32.mxu0 0.0
      %1829 = vmatmul.mubr.f32.gmra.mxu0 %v1749
      %v1830 = vpop.f32.mrf.mxu0
      %v1831 = vadd.f32 0.0, %v1830
      %v1832 = vpop.f32.mrf.mxu0
      %1833 = vmatprep.mubr.f32.mxu0 0.0
      %1834 = vmatmul.mubr.f32.gmra.mxu0 %v1752
      %v1835 = vpop.f32.mrf.mxu0
      %v1836 = vadd.f32 0.0, %v1835
      %v1837 = vpop.f32.mrf.mxu0
      %1838 = vdwg.mxu0
      %v1840 = vsel %vm1020, %v1734, 0
      %v1843 = vsel %vm1020, %v1735, 0
      %v1846 = vsel %vm1020, %v1736, 0
      %v1849 = vsel %vm1020, %v1737, 0
      %1851 = vmatprep.subr.mxu0 0.0
      %1852 = vmatpush1.msra.mxu0 0.0
      %1853 = vmatprep.subr.mxu0 0.0
      %1854 = vmatpush1.msra.mxu0 0.0
      %1855 = vmatprep.subr.mxu0 0.0
      %1856 = vmatpush1.msra.mxu0 0.0
      %1857 = vmatprep.subr.mxu0 0.0
      %1858 = vmatpush1.msra.mxu0 0.0
      %1859 = vmatprep.subr.mxu0 0.0
      %1860 = vmatpush1.msra.mxu0 0.0
      %1861 = vmatprep.subr.mxu0 0.0
      %1862 = vmatpush1.msra.mxu0 0.0
      %1863 = vmatprep.subr.mxu0 0.0
      %1864 = vmatpush1.msra.mxu0 0.0
      %1865 = vmatprep.subr.mxu0 0.0
      %1866 = vmatpush1.msra.mxu0 0.0
      %1867 = vmatprep.subr.mxu0 0.0
      %1868 = vmatpush1.msra.mxu0 0.0
      %1869 = vmatprep.subr.mxu0 0.0
      %1870 = vmatpush1.msra.mxu0 0.0
      %1871 = vmatprep.subr.mxu0 0.0
      %1872 = vmatpush1.msra.mxu0 0.0
      %1873 = vmatprep.subr.mxu0 0.0
      %1874 = vmatpush1.msra.mxu0 0.0
      %1875 = vmatprep.subr.mxu0 0.0
      %1876 = vmatpush1.msra.mxu0 0.0
      %1877 = vmatprep.subr.mxu0 0.0
      %1878 = vmatpush1.msra.mxu0 0.0
      %1879 = vmatprep.subr.mxu0 0.0
      %1880 = vmatpush1.msra.mxu0 %v1739
      %1881 = vmatprep.subr.mxu0 0.0
      %1882 = vmatpush1.msra.mxu0 %v1738
      %1883 = vmatprep.subr.mxu0 0.0
      %1884 = vmatpush2.msra.mxu0 0.0
      %1885 = vmatprep.subr.mxu0 0.0
      %1886 = vmatpush2.msra.mxu0 0.0
      %1887 = vmatprep.subr.mxu0 0.0
      %1888 = vmatpush2.msra.mxu0 0.0
      %1889 = vmatprep.subr.mxu0 0.0
      %1890 = vmatpush2.msra.mxu0 0.0
      %1891 = vmatprep.subr.mxu0 0.0
      %1892 = vmatpush2.msra.mxu0 0.0
      %1893 = vmatprep.subr.mxu0 0.0
      %1894 = vmatpush2.msra.mxu0 0.0
      %1895 = vmatprep.subr.mxu0 0.0
      %1896 = vmatpush2.msra.mxu0 0.0
      %1897 = vmatprep.subr.mxu0 0.0
      %1898 = vmatpush2.msra.mxu0 0.0
      %1899 = vmatprep.subr.mxu0 0.0
      %1900 = vmatpush2.msra.mxu0 0.0
      %1901 = vmatprep.subr.mxu0 0.0
      %1902 = vmatpush2.msra.mxu0 0.0
      %1903 = vmatprep.subr.mxu0 0.0
      %1904 = vmatpush2.msra.mxu0 0.0
      %1905 = vmatprep.subr.mxu0 0.0
      %1906 = vmatpush2.msra.mxu0 0.0
      %1907 = vmatprep.subr.mxu0 0.0
      %1908 = vmatpush2.msra.mxu0 0.0
      %1909 = vmatprep.subr.mxu0 0.0
      %1910 = vmatpush2.msra.mxu0 0.0
      %1911 = vmatprep.subr.mxu0 0.0
      %1912 = vmatpush2.msra.mxu0 0.0
      %1913 = vmatprep.subr.mxu0 0.0
      %1914 = vmatpush2.msra.mxu0 0.0
      %1915 = vmatprep.mubr.f32.mxu0 0.0
      %1916 = vmatmul.mubr.f32.gmra.mxu0 %v1840
      %v1917 = vpop.f32.mrf.mxu0
      %v1918 = vadd.f32 %v1821, %v1917
      %v1919 = vpop.f32.mrf.mxu0
      %1920 = vmatprep.mubr.f32.mxu0 0.0
      %1921 = vmatmul.mubr.f32.gmra.mxu0 %v1843
      %v1922 = vpop.f32.mrf.mxu0
      %v1923 = vadd.f32 %v1826, %v1922
      %v1924 = vpop.f32.mrf.mxu0
      %1925 = vmatprep.mubr.f32.mxu0 0.0
      %1926 = vmatmul.mubr.f32.gmra.mxu0 %v1846
      %v1927 = vpop.f32.mrf.mxu0
      %v1928 = vadd.f32 %v1831, %v1927
      %v1929 = vpop.f32.mrf.mxu0
      %1930 = vmatprep.mubr.f32.mxu0 0.0
      %1931 = vmatmul.mubr.f32.gmra.mxu0 %v1849
      %v1932 = vpop.f32.mrf.mxu0
      %v1933 = vadd.f32 %v1836, %v1932
      %v1934 = vpop.f32.mrf.mxu0
      %1935 = vdwg.mxu0
      %v1936 = vrot.slane %v1722, 1
      %v1937 = vrot.slane %v1723, 1
      %v1938 = vrot.slane %v1724, 1
      %v1939 = vrot.slane %v1725, 1
      %v1940 = vsel %vm874, %v1938, %v1939
      %v1941 = vsel %vm874, %v1937, %v1938
      %v1942 = vsel %vm874, %v1936, %v1937
      %v1943 = vsel %vm874, %v1939, %v1936
      %v1944 = vsel %vm899, %v1942, 0.0
      %v1945 = vsel %vm900, %v1941, 0.0
      %v1946 = vsel %vm901, %v1940, 0.0
      %v1947 = vsel %vm902, %v1943, 0.0
      %v1948 = vld [vmem:[%s8 + $0x20] sm:$0xff]
      %v1949 = vld [vmem:[%s8 + $0x28] sm:$0xff]
      %v1951 = vsel %vm1020, %v1944, 0
      %v1954 = vsel %vm1020, %v1945, 0
      %v1957 = vsel %vm1020, %v1946, 0
      %v1960 = vsel %vm1020, %v1947, 0
      %1962 = vmatprep.subr.mxu0 0.0
      %1963 = vmatpush1.msra.mxu0 0.0
      %1964 = vmatprep.subr.mxu0 0.0
      %1965 = vmatpush1.msra.mxu0 0.0
      %1966 = vmatprep.subr.mxu0 0.0
      %1967 = vmatpush1.msra.mxu0 0.0
      %1968 = vmatprep.subr.mxu0 0.0
      %1969 = vmatpush1.msra.mxu0 0.0
      %1970 = vmatprep.subr.mxu0 0.0
      %1971 = vmatpush1.msra.mxu0 0.0
      %1972 = vmatprep.subr.mxu0 0.0
      %1973 = vmatpush1.msra.mxu0 0.0
      %1974 = vmatprep.subr.mxu0 0.0
      %1975 = vmatpush1.msra.mxu0 0.0
      %1976 = vmatprep.subr.mxu0 0.0
      %1977 = vmatpush1.msra.mxu0 0.0
      %1978 = vmatprep.subr.mxu0 0.0
      %1979 = vmatpush1.msra.mxu0 0.0
      %1980 = vmatprep.subr.mxu0 0.0
      %1981 = vmatpush1.msra.mxu0 0.0
      %1982 = vmatprep.subr.mxu0 0.0
      %1983 = vmatpush1.msra.mxu0 0.0
      %1984 = vmatprep.subr.mxu0 0.0
      %1985 = vmatpush1.msra.mxu0 0.0
      %1986 = vmatprep.subr.mxu0 0.0
      %1987 = vmatpush1.msra.mxu0 0.0
      %1988 = vmatprep.subr.mxu0 0.0
      %1989 = vmatpush1.msra.mxu0 0.0
      %1990 = vmatprep.subr.mxu0 0.0
      %1991 = vmatpush1.msra.mxu0 %v1949
      %1992 = vmatprep.subr.mxu0 0.0
      %1993 = vmatpush1.msra.mxu0 %v1948
      %1994 = vmatprep.subr.mxu0 0.0
      %1995 = vmatpush2.msra.mxu0 0.0
      %1996 = vmatprep.subr.mxu0 0.0
      %1997 = vmatpush2.msra.mxu0 0.0
      %1998 = vmatprep.subr.mxu0 0.0
      %1999 = vmatpush2.msra.mxu0 0.0
      %2000 = vmatprep.subr.mxu0 0.0
      %2001 = vmatpush2.msra.mxu0 0.0
      %2002 = vmatprep.subr.mxu0 0.0
      %2003 = vmatpush2.msra.mxu0 0.0
      %2004 = vmatprep.subr.mxu0 0.0
      %2005 = vmatpush2.msra.mxu0 0.0
      %2006 = vmatprep.subr.mxu0 0.0
      %2007 = vmatpush2.msra.mxu0 0.0
      %2008 = vmatprep.subr.mxu0 0.0
      %2009 = vmatpush2.msra.mxu0 0.0
      %2010 = vmatprep.subr.mxu0 0.0
      %2011 = vmatpush2.msra.mxu0 0.0
      %2012 = vmatprep.subr.mxu0 0.0
      %2013 = vmatpush2.msra.mxu0 0.0
      %2014 = vmatprep.subr.mxu0 0.0
      %2015 = vmatpush2.msra.mxu0 0.0
      %2016 = vmatprep.subr.mxu0 0.0
      %2017 = vmatpush2.msra.mxu0 0.0
      %2018 = vmatprep.subr.mxu0 0.0
      %2019 = vmatpush2.msra.mxu0 0.0
      %2020 = vmatprep.subr.mxu0 0.0
      %2021 = vmatpush2.msra.mxu0 0.0
      %2022 = vmatprep.subr.mxu0 0.0
      %2023 = vmatpush2.msra.mxu0 0.0
      %2024 = vmatprep.subr.mxu0 0.0
      %2025 = vmatpush2.msra.mxu0 0.0
      %2026 = vmatprep.mubr.f32.mxu0 0.0
      %2027 = vmatmul.mubr.f32.gmra.mxu0 %v1951
      %v2028 = vpop.f32.mrf.mxu0
      %v2029 = vadd.f32 0.0, %v2028
      %v2030 = vpop.f32.mrf.mxu0
      %2031 = vmatprep.mubr.f32.mxu0 0.0
      %2032 = vmatmul.mubr.f32.gmra.mxu0 %v1954
      %v2033 = vpop.f32.mrf.mxu0
      %v2034 = vadd.f32 0.0, %v2033
      %v2035 = vpop.f32.mrf.mxu0
      %2036 = vmatprep.mubr.f32.mxu0 0.0
      %2037 = vmatmul.mubr.f32.gmra.mxu0 %v1957
      %v2038 = vpop.f32.mrf.mxu0
      %v2039 = vadd.f32 0.0, %v2038
      %v2040 = vpop.f32.mrf.mxu0
      %2041 = vmatprep.mubr.f32.mxu0 0.0
      %2042 = vmatmul.mubr.f32.gmra.mxu0 %v1960
      %v2043 = vpop.f32.mrf.mxu0
      %v2044 = vadd.f32 0.0, %v2043
      %v2045 = vpop.f32.mrf.mxu0
      %2046 = vdwg.mxu0
      %v2047 = vadd.f32 %v1918, %v2029
      %v2048 = vadd.f32 %v1923, %v2034
      %v2049 = vadd.f32 %v1928, %v2039
      %v2050 = vadd.f32 %v1933, %v2044
      %v2051 = vld [vmem:[%s9] sm:$0x1]
      %v2053 = vlaneseq
      %v2054 = vshrl.u32 %v2053, 7
      %v2055 = vsub.s32 0, %v2054
      %v2056 = vrot.slane %v2051, %v2055
      %v2058 = vadd.f32 %v2047, %v2056
      %v2059 = vadd.f32 %v2048, %v2056
      %v2060 = vadd.f32 %v2049, %v2056
      %v2061 = vadd.f32 %v2050, %v2056
      %v2062 = vsel %vm1020, %v2058, 0.0
      %v2063 = vsel %vm1020, %v2059, 0.0
      %v2064 = vadd.f32 %v2062, %v2063
      %v2065 = vrot.slane %v2064, 4
      %v2066 = vadd.f32 %v2064, %v2065
      %v2067 = vrot.slane %v2066, 2
      %v2068 = vadd.f32 %v2066, %v2067
      %v2069 = vrot.slane %v2068, 1
      %v2070 = vadd.f32 %v2068, %v2069
      %v2071 = vsel %vm1020, %v2060, 0.0
      %v2072 = vsel %vm1020, %v2061, 0.0
      %v2073 = vadd.f32 %v2071, %v2072
      %v2074 = vrot.slane %v2073, 4
      %v2075 = vadd.f32 %v2073, %v2074
      %v2076 = vrot.slane %v2075, 2
      %v2077 = vadd.f32 %v2075, %v2076
      %v2078 = vrot.slane %v2077, 1
      %v2079 = vadd.f32 %v2077, %v2078
      %v2080 = vmul.f32 %v2058, %v2058
      %v2081 = vmul.f32 %v2059, %v2059
      %v2082 = vmul.f32 %v2060, %v2060
      %v2083 = vmul.f32 %v2061, %v2061
      %v2084 = vsel %vm1020, %v2080, 0.0
      %v2085 = vsel %vm1020, %v2081, 0.0
      %v2086 = vadd.f32 %v2084, %v2085
      %v2087 = vrot.slane %v2086, 4
      %v2088 = vadd.f32 %v2086, %v2087
      %v2089 = vrot.slane %v2088, 2
      %v2090 = vadd.f32 %v2088, %v2089
      %v2091 = vrot.slane %v2090, 1
      %v2092 = vadd.f32 %v2090, %v2091
      %v2093 = vsel %vm1020, %v2082, 0.0
      %v2094 = vsel %vm1020, %v2083, 0.0
      %v2095 = vadd.f32 %v2093, %v2094
      %v2096 = vrot.slane %v2095, 4
      %v2097 = vadd.f32 %v2095, %v2096
      %v2098 = vrot.slane %v2097, 2
      %v2099 = vadd.f32 %v2097, %v2098
      %v2100 = vrot.slane %v2099, 1
      %v2101 = vadd.f32 %v2099, %v2100
      %v2104 = vsel %vm1063, %v2079, %v2070
      %v2108 = vsel %vm1068, %v2101, %v2092
      %v2110 = vsel %vm1071, %v2104, %v2108
      %v2112 = vsel %vm1020, %v2110, 0
      %2114 = vmatprep.subr.mxu0 0.0
      %2115 = vmatpush1.msra.mxu0 0.0
      %2116 = vmatprep.subr.mxu0 0.0
      %2117 = vmatpush1.msra.mxu0 0.0
      %2118 = vmatprep.subr.mxu0 0.0
      %2119 = vmatpush1.msra.mxu0 0.0
      %2120 = vmatprep.subr.mxu0 0.0
      %2121 = vmatpush1.msra.mxu0 0.0
      %2122 = vmatprep.subr.mxu0 0.0
      %2123 = vmatpush1.msra.mxu0 0.0
      %2124 = vmatprep.subr.mxu0 0.0
      %2125 = vmatpush1.msra.mxu0 0.0
      %2126 = vmatprep.subr.mxu0 0.0
      %2127 = vmatpush1.msra.mxu0 0.0
      %2128 = vmatprep.subr.mxu0 0.0
      %2129 = vmatpush1.msra.mxu0 0.0
      %2130 = vmatprep.subr.mxu0 0.0
      %2131 = vmatpush1.msra.mxu0 0.0
      %2132 = vmatprep.subr.mxu0 0.0
      %2133 = vmatpush1.msra.mxu0 0.0
      %2134 = vmatprep.subr.mxu0 0.0
      %2135 = vmatpush1.msra.mxu0 0.0
      %2136 = vmatprep.subr.mxu0 0.0
      %2137 = vmatpush1.msra.mxu0 0.0
      %2138 = vmatprep.subr.mxu0 0.0
      %2139 = vmatpush1.msra.mxu0 0.0
      %2140 = vmatprep.subr.mxu0 0.0
      %2141 = vmatpush1.msra.mxu0 0.0
      %2142 = vmatprep.subr.mxu0 0.0
      %2143 = vmatpush1.msra.mxu0 %v1074
      %2144 = vmatprep.subr.mxu0 0.0
      %2145 = vmatpush1.msra.mxu0 %v1073
      %2146 = vmatprep.subr.mxu0 0.0
      %2147 = vmatpush2.msra.mxu0 0.0
      %2148 = vmatprep.subr.mxu0 0.0
      %2149 = vmatpush2.msra.mxu0 0.0
      %2150 = vmatprep.subr.mxu0 0.0
      %2151 = vmatpush2.msra.mxu0 0.0
      %2152 = vmatprep.subr.mxu0 0.0
      %2153 = vmatpush2.msra.mxu0 0.0
      %2154 = vmatprep.subr.mxu0 0.0
      %2155 = vmatpush2.msra.mxu0 0.0
      %2156 = vmatprep.subr.mxu0 0.0
      %2157 = vmatpush2.msra.mxu0 0.0
      %2158 = vmatprep.subr.mxu0 0.0
      %2159 = vmatpush2.msra.mxu0 0.0
      %2160 = vmatprep.subr.mxu0 0.0
      %2161 = vmatpush2.msra.mxu0 0.0
      %2162 = vmatprep.subr.mxu0 0.0
      %2163 = vmatpush2.msra.mxu0 0.0
      %2164 = vmatprep.subr.mxu0 0.0
      %2165 = vmatpush2.msra.mxu0 0.0
      %2166 = vmatprep.subr.mxu0 0.0
      %2167 = vmatpush2.msra.mxu0 0.0
      %2168 = vmatprep.subr.mxu0 0.0
      %2169 = vmatpush2.msra.mxu0 0.0
      %2170 = vmatprep.subr.mxu0 0.0
      %2171 = vmatpush2.msra.mxu0 0.0
      %2172 = vmatprep.subr.mxu0 0.0
      %2173 = vmatpush2.msra.mxu0 0.0
      %2174 = vmatprep.subr.mxu0 0.0
      %2175 = vmatpush2.msra.mxu0 0.0
      %2176 = vmatprep.subr.mxu0 0.0
      %2177 = vmatpush2.msra.mxu0 0.0
      %2178 = vmatprep.mubr.f32.mxu0 0.0
      %2179 = vmatmul.mubr.f32.gmra.mxu0 %v2112
      %v2180 = vpop.f32.mrf.mxu0
      %v2181 = vadd.f32 0.0, %v2180
      %v2182 = vpop.f32.mrf.mxu0
      %2183 = vdwg.mxu0
      %v2184 = vmul.f32 %v2181, 0.03125
      %v2185 = vmul.f32 %v2184, %v2184
      %v2187 = vrot.slane %v2185, 6
      %v2189 = vsub.f32 %v2184, %v2187
      %v2190 = vmax.f32 %v2189, 0.0
      %v2191 = vadd.f32 %v2190, 1e-05
      %v2192 = vrsqrt.pop %v2191
      %v2193 = vsub.f32 0.0, %v2184
      %v2195 = vrot.slane %v2192, 2
      %v2197 = vmul.f32 %v2193, %v2195
      %v2199 = vrot.slane %v2197, 6
      %v2201 = vsel %vm1071, %v2195, %v2199
      %v2203 = vsel %vm675, %v2201, 0
      %2205 = vmatprep.subr.mxu0 0.0
      %2206 = vmatpush1.msra.mxu0 0.0
      %2207 = vmatprep.subr.mxu0 0.0
      %2208 = vmatpush1.msra.mxu0 0.0
      %2209 = vmatprep.subr.mxu0 0.0
      %2210 = vmatpush1.msra.mxu0 0.0
      %2211 = vmatprep.subr.mxu0 0.0
      %2212 = vmatpush1.msra.mxu0 0.0
      %2213 = vmatprep.subr.mxu0 0.0
      %2214 = vmatpush1.msra.mxu0 0.0
      %2215 = vmatprep.subr.mxu0 0.0
      %2216 = vmatpush1.msra.mxu0 0.0
      %2217 = vmatprep.subr.mxu0 0.0
      %2218 = vmatpush1.msra.mxu0 0.0
      %2219 = vmatprep.subr.mxu0 0.0
      %2220 = vmatpush1.msra.mxu0 0.0
      %2221 = vmatprep.subr.mxu0 0.0
      %2222 = vmatpush1.msra.mxu0 0.0
      %2223 = vmatprep.subr.mxu0 0.0
      %2224 = vmatpush1.msra.mxu0 0.0
      %2225 = vmatprep.subr.mxu0 0.0
      %2226 = vmatpush1.msra.mxu0 0.0
      %2227 = vmatprep.subr.mxu0 0.0
      %2228 = vmatpush1.msra.mxu0 0.0
      %2229 = vmatprep.subr.mxu0 0.0
      %2230 = vmatpush1.msra.mxu0 0.0
      %2231 = vmatprep.subr.mxu0 0.0
      %2232 = vmatpush1.msra.mxu0 0.0
      %2233 = vmatprep.subr.mxu0 0.0
      %2234 = vmatpush1.msra.mxu0 0.0
      %2235 = vmatprep.subr.mxu0 0.0
      %2236 = vmatpush1.msra.mxu0 %v1166
      %2237 = vmatprep.subr.mxu0 0.0
      %2238 = vmatpush2.msra.mxu0 0.0
      %2239 = vmatprep.subr.mxu0 0.0
      %2240 = vmatpush2.msra.mxu0 0.0
      %2241 = vmatprep.subr.mxu0 0.0
      %2242 = vmatpush2.msra.mxu0 0.0
      %2243 = vmatprep.subr.mxu0 0.0
      %2244 = vmatpush2.msra.mxu0 0.0
      %2245 = vmatprep.subr.mxu0 0.0
      %2246 = vmatpush2.msra.mxu0 0.0
      %2247 = vmatprep.subr.mxu0 0.0
      %2248 = vmatpush2.msra.mxu0 0.0
      %2249 = vmatprep.subr.mxu0 0.0
      %2250 = vmatpush2.msra.mxu0 0.0
      %2251 = vmatprep.subr.mxu0 0.0
      %2252 = vmatpush2.msra.mxu0 0.0
      %2253 = vmatprep.subr.mxu0 0.0
      %2254 = vmatpush2.msra.mxu0 0.0
      %2255 = vmatprep.subr.mxu0 0.0
      %2256 = vmatpush2.msra.mxu0 0.0
      %2257 = vmatprep.subr.mxu0 0.0
      %2258 = vmatpush2.msra.mxu0 0.0
      %2259 = vmatprep.subr.mxu0 0.0
      %2260 = vmatpush2.msra.mxu0 0.0
      %2261 = vmatprep.subr.mxu0 0.0
      %2262 = vmatpush2.msra.mxu0 0.0
      %2263 = vmatprep.subr.mxu0 0.0
      %2264 = vmatpush2.msra.mxu0 0.0
      %2265 = vmatprep.subr.mxu0 0.0
      %2266 = vmatpush2.msra.mxu0 0.0
      %2267 = vmatprep.subr.mxu0 0.0
      %2268 = vmatpush2.msra.mxu0 0.0
      %2269 = vmatprep.mubr.f32.mxu0 0.0
      %2270 = vmatmul.mubr.f32.gmra.mxu0 %v2203
      %v2271 = vpop.f32.mrf.mxu0
      %v2272 = vadd.f32 0.0, %v2271
      %v2273 = vpop.f32.mrf.mxu0
      %2274 = vdwg.mxu0
      %v2275 = vld [vmem:[%s10] sm:$0x1]
      %v2276 = vld [vmem:[%s11] sm:$0x1]
      %v2278 = vlaneseq
      %v2279 = vshrl.u32 %v2278, 7
      %v2280 = vsub.s32 0, %v2279
      %v2281 = vrot.slane %v2275, %v2280
      %v2283 = vmul.f32 %v2272, %v2281
      %v2286 = vunpack.c.l.s4 1966171168
      %v2287 = vunpack.c.0.s8 %v2286
      %v2288 = vlaneseq
      %v2289 = vshrl.u32 %v2288, 7
      %v2290 = vsub.s32 %v2287, %v2289
      %v2291 = vrot.slane %v2283, %v2290
      %v2292 = vcombine.high %v2291, %v2291
      %v2294 = vunpack.c.l.s4 1966171168
      %v2295 = vunpack.c.0.s8 %v2294
      %v2296 = vlaneseq
      %v2297 = vshrl.u32 %v2296, 7
      %v2298 = vsub.s32 %v2295, %v2297
      %v2299 = vrot.slane %v2291, %v2298
      %v2301 = vunpack.c.l.s4 1966171168
      %v2302 = vunpack.c.0.s8 %v2301
      %v2303 = vlaneseq
      %v2304 = vshrl.u32 %v2303, 7
      %v2305 = vsub.s32 %v2302, %v2304
      %v2306 = vrot.slane %v2292, %v2305
      %v2308 = vlaneseq
      %v2309 = vshrl.u32 %v2308, 7
      %v2310 = vsub.s32 0, %v2309
      %v2311 = vrot.slane %v2276, %v2310
      %v2313 = vadd.f32 %v2283, %v2311
      %v2316 = vunpack.c.l.s4 1966171168
      %v2317 = vunpack.c.0.s8 %v2316
      %v2318 = vlaneseq
      %v2319 = vshrl.u32 %v2318, 7
      %v2320 = vsub.s32 %v2317, %v2319
      %v2321 = vrot.slane %v2313, %v2320
      %v2322 = vcombine.high %v2321, %v2321
      %v2324 = vunpack.c.l.s4 1966171168
      %v2325 = vunpack.c.0.s8 %v2324
      %v2326 = vlaneseq
      %v2327 = vshrl.u32 %v2326, 7
      %v2328 = vsub.s32 %v2325, %v2327
      %v2329 = vrot.slane %v2321, %v2328
      %v2331 = vunpack.c.l.s4 1966171168
      %v2332 = vunpack.c.0.s8 %v2331
      %v2333 = vlaneseq
      %v2334 = vshrl.u32 %v2333, 7
      %v2335 = vsub.s32 %v2332, %v2334
      %v2336 = vrot.slane %v2322, %v2335
      %v2337 = vcombine.high %v2329, %v2329
      %v2338 = vcombine.high %v2336, %v2336
      %v2339 = vlaneseq
      %v2340 = vshrl.u32 %v2339, 7
      %v2341 = vsub.s32 0, %v2340
      %v2342 = vrot.slane %v2299, %v2341
      %v2343 = vlaneseq
      %v2344 = vshrl.u32 %v2343, 7
      %v2345 = vsub.s32 0, %v2344
      %v2346 = vrot.slane %v2306, %v2345
      %v2349 = vmul.f32 %v2058, %v2342
      %v2350 = vmul.f32 %v2059, %v2342
      %v2351 = vmul.f32 %v2060, %v2346
      %v2352 = vmul.f32 %v2061, %v2346
      %v2353 = vlaneseq
      %v2354 = vshrl.u32 %v2353, 7
      %v2355 = vsub.s32 0, %v2354
      %v2356 = vrot.slane %v2337, %v2355
      %v2357 = vlaneseq
      %v2358 = vshrl.u32 %v2357, 7
      %v2359 = vsub.s32 0, %v2358
      %v2360 = vrot.slane %v2338, %v2359
      %v2363 = vadd.f32 %v2349, %v2356
      %v2364 = vadd.f32 %v2350, %v2356
      %v2365 = vadd.f32 %v2351, %v2360
      %v2366 = vadd.f32 %v2352, %v2360
      %v2367 = vmin.f32 %v2363, 20.0
      %v2368 = vmin.f32 %v2364, 20.0
      %v2369 = vmin.f32 %v2365, 20.0
      %v2370 = vmin.f32 %v2366, 20.0
      %v2371 = vmul.f32 %v2367, 1.442695
      %v2372 = vpow.pop %v2371
      %v2373 = vmul.f32 %v2368, 1.442695
      %v2374 = vpow.pop %v2373
      %v2375 = vmul.f32 %v2369, 1.442695
      %v2376 = vpow.pop %v2375
      %v2377 = vmul.f32 %v2370, 1.442695
      %v2378 = vpow.pop %v2377
      %v2379 = vadd.f32 %v2372, 1.0
      %v2380 = vadd.f32 %v2374, 1.0
      %v2381 = vadd.f32 %v2376, 1.0
      %v2382 = vadd.f32 %v2378, 1.0
      %v2383 = vmul.f32 %v2379, %v2379
      %v2384 = vmul.f32 %v2380, %v2380
      %v2385 = vmul.f32 %v2381, %v2381
      %v2386 = vmul.f32 %v2382, %v2382
      %v2387 = vadd.f32 %v2383, 1.0
      %v2388 = vadd.f32 %v2384, 1.0
      %v2389 = vadd.f32 %v2385, 1.0
      %v2390 = vadd.f32 %v2386, 1.0
      %v2391 = vrcp.pop %v2387
      %v2392 = vrcp.pop %v2388
      %v2393 = vrcp.pop %v2389
      %v2394 = vrcp.pop %v2390
      %v2395 = vmul.f32 %v2387, %v2391
      %v2396 = vmul.f32 %v2388, %v2392
      %v2397 = vmul.f32 %v2389, %v2393
      %v2398 = vmul.f32 %v2390, %v2394
      %v2399 = vsub.f32 2.0, %v2395
      %v2400 = vsub.f32 2.0, %v2396
      %v2401 = vsub.f32 2.0, %v2397
      %v2402 = vsub.f32 2.0, %v2398
      %v2403 = vmul.f32 %v2391, %v2399
      %v2404 = vmul.f32 %v2392, %v2400
      %v2405 = vmul.f32 %v2393, %v2401
      %v2406 = vmul.f32 %v2394, %v2402
      %v2407 = vsub.f32 %v2383, 1.0
      %v2408 = vsub.f32 %v2384, 1.0
      %v2409 = vsub.f32 %v2385, 1.0
      %v2410 = vsub.f32 %v2386, 1.0
      %v2411 = vmul.f32 %v2363, %v2407
      %v2412 = vmul.f32 %v2364, %v2408
      %v2413 = vmul.f32 %v2365, %v2409
      %v2414 = vmul.f32 %v2366, %v2410
      %v2415 = vmul.f32 %v2411, %v2403
      %v2416 = vmul.f32 %v2412, %v2404
      %v2417 = vmul.f32 %v2413, %v2405
      %v2418 = vmul.f32 %v2414, %v2406
      %v2419 = vld [vmem:[%s16] sm:$0xff]
      %v2420 = vld [vmem:[%s17] sm:$0x1]
      %v2422 = vlaneseq
      %v2423 = vshrl.u32 %v2422, 7
      %v2424 = vsub.s32 0, %v2423
      %v2425 = vrot.slane %v2420, %v2424
      %2427 = vmatprep.subr.mxu0 0.0
      %2428 = vmatpush1.msra.mxu0 0.0
      %2429 = vmatprep.subr.mxu0 0.0
      %2430 = vmatpush1.msra.mxu0 0.0
      %2431 = vmatprep.subr.mxu0 0.0
      %2432 = vmatpush1.msra.mxu0 0.0
      %2433 = vmatprep.subr.mxu0 0.0
      %2434 = vmatpush1.msra.mxu0 0.0
      %2435 = vmatprep.subr.mxu0 0.0
      %2436 = vmatpush1.msra.mxu0 0.0
      %2437 = vmatprep.subr.mxu0 0.0
      %2438 = vmatpush1.msra.mxu0 0.0
      %2439 = vmatprep.subr.mxu0 0.0
      %2440 = vmatpush1.msra.mxu0 0.0
      %2441 = vmatprep.subr.mxu0 0.0
      %2442 = vmatpush1.msra.mxu0 0.0
      %2443 = vmatprep.subr.mxu0 0.0
      %2444 = vmatpush1.msra.mxu0 0.0
      %2445 = vmatprep.subr.mxu0 0.0
      %2446 = vmatpush1.msra.mxu0 0.0
      %2447 = vmatprep.subr.mxu0 0.0
      %2448 = vmatpush1.msra.mxu0 0.0
      %2449 = vmatprep.subr.mxu0 0.0
      %2450 = vmatpush1.msra.mxu0 0.0
      %2451 = vmatprep.subr.mxu0 0.0
      %2452 = vmatpush1.msra.mxu0 0.0
      %2453 = vmatprep.subr.mxu0 0.0
      %2454 = vmatpush1.msra.mxu0 0.0
      %2455 = vmatprep.subr.mxu0 0.0
      %2456 = vmatpush1.msra.mxu0 0.0
      %2457 = vmatprep.subr.mxu0 0.0
      %2458 = vmatpush1.msra.mxu0 %v2419
      %2459 = vmatprep.subr.mxu0 0.0
      %2460 = vmatpush2.msra.mxu0 0.0
      %2461 = vmatprep.subr.mxu0 0.0
      %2462 = vmatpush2.msra.mxu0 0.0
      %2463 = vmatprep.subr.mxu0 0.0
      %2464 = vmatpush2.msra.mxu0 0.0
      %2465 = vmatprep.subr.mxu0 0.0
      %2466 = vmatpush2.msra.mxu0 0.0
      %2467 = vmatprep.subr.mxu0 0.0
      %2468 = vmatpush2.msra.mxu0 0.0
      %2469 = vmatprep.subr.mxu0 0.0
      %2470 = vmatpush2.msra.mxu0 0.0
      %2471 = vmatprep.subr.mxu0 0.0
      %2472 = vmatpush2.msra.mxu0 0.0
      %2473 = vmatprep.subr.mxu0 0.0
      %2474 = vmatpush2.msra.mxu0 0.0
      %2475 = vmatprep.subr.mxu0 0.0
      %2476 = vmatpush2.msra.mxu0 0.0
      %2477 = vmatprep.subr.mxu0 0.0
      %2478 = vmatpush2.msra.mxu0 0.0
      %2479 = vmatprep.subr.mxu0 0.0
      %2480 = vmatpush2.msra.mxu0 0.0
      %2481 = vmatprep.subr.mxu0 0.0
      %2482 = vmatpush2.msra.mxu0 0.0
      %2483 = vmatprep.subr.mxu0 0.0
      %2484 = vmatpush2.msra.mxu0 0.0
      %2485 = vmatprep.subr.mxu0 0.0
      %2486 = vmatpush2.msra.mxu0 0.0
      %2487 = vmatprep.subr.mxu0 0.0
      %2488 = vmatpush2.msra.mxu0 0.0
      %2489 = vmatprep.subr.mxu0 0.0
      %2490 = vmatpush2.msra.mxu0 0.0
      %2491 = vmatprep.mubr.f32.mxu0 0.0
      %2492 = vmatmul.mubr.f32.gmra.mxu0 %v677
      %v2493 = vpop.f32.mrf.mxu0
      %v2494 = vadd.f32 %v2425, %v2493
      %v2495 = vpop.f32.mrf.mxu0
      %2496 = vmatprep.mubr.f32.mxu0 0.0
      %2497 = vmatmul.mubr.f32.gmra.mxu0 %v680
      %v2498 = vpop.f32.mrf.mxu0
      %v2499 = vadd.f32 %v2425, %v2498
      %v2500 = vpop.f32.mrf.mxu0
      %2501 = vmatprep.mubr.f32.mxu0 0.0
      %2502 = vmatmul.mubr.f32.gmra.mxu0 %v683
      %v2503 = vpop.f32.mrf.mxu0
      %v2504 = vadd.f32 %v2425, %v2503
      %v2505 = vpop.f32.mrf.mxu0
      %2506 = vmatprep.mubr.f32.mxu0 0.0
      %2507 = vmatmul.mubr.f32.gmra.mxu0 %v686
      %v2508 = vpop.f32.mrf.mxu0
      %v2509 = vadd.f32 %v2425, %v2508
      %v2510 = vpop.f32.mrf.mxu0
      %2511 = vdwg.mxu0
      %v2512 = vadd.f32 %v2415, %v2494
      %v2513 = vadd.f32 %v2416, %v2499
      %v2514 = vadd.f32 %v2417, %v2504
      %v2515 = vadd.f32 %v2418, %v2509
      %2516 = vst.msk [vmem:[%s577] sm:$0xff] %vm1020, %v2512
      %2517 = vst.msk [vmem:[%s577 + $0x8] sm:$0xff] %vm1020, %v2513
      %2518 = vst.msk [vmem:[%s577 + $0x10] sm:$0xff] %vm1020, %v2514
      %2519 = vst.msk [vmem:[%s577 + $0x18] sm:$0xff] %vm1020, %v2515
      %s2520 = smul.u32 4, %s29
      %p2521 = scmp.lt.s32.totalorder %s2520, 7
      %s2522 = scalar_select %p2521, %s2520, 7
      %s2523 = smul.addr %s2522, 8
      %s2524 = scalar_lea.vmem %s18, %s2523
      // Predicated region
      $region93: #{tpu_custom_call.1} parent=91 // pred_check
        %p2525 = pneg %p430
      $region94: #{tpu_custom_call.1} parent=91 // pred_check_branch
        %2527 = sbr.rel (%p2525) target = $region96
      $region95: #{tpu_custom_call.1} parent=91 // pred_region
        %s2528 = smul.u32 4, %s29
      $region96: #{tpu_custom_call.1} parent=91 // pred_fallthru
        _
    $region92: #{tpu_custom_call.1} parent=5 // pred_fallthru
      _
    %p2529 = scmp.le.s32.totalorder 2, %s24
    // Predicated region
    $region97: #{tpu_custom_call.1} parent=5 // pred_check
      %p2530 = pneg %p2529
    $region98: #{tpu_custom_call.1} parent=5 // pred_check_branch
      %2532 = sbr.rel (%p2530) target = $region100
    $region99: #{tpu_custom_call.1} parent=5 // pred_region
      %s2533 = ssub.s32 %s24, 2
      // Predicated region
      $region101: #{tpu_custom_call.1} parent=99 // pred_check
        %p2534 = pneg %p436
      $region102: #{tpu_custom_call.1} parent=99 // pred_check_branch
        %2536 = sbr.rel (%p2534) target = $region104
      $region103: #{tpu_custom_call.1} parent=99 // pred_region
        %s2537 = smul.u32 4, %s30
        %p2538 = scmp.lt.s32.totalorder %s2537, 7
        %s2539 = scalar_select %p2538, %s2537, 7
        %s2540 = smul.addr %s2539, 8
        %s2541 = scalar_lea.vmem %s18, %s2540
      $region104: #{tpu_custom_call.1} parent=99 // pred_fallthru
        _
    $region100: #{tpu_custom_call.1} parent=5 // pred_fallthru
      _
  $region6: #{tpu_custom_call.1} parent=0 // loop_footer
    %s28 = sadd.s32 1, %s24
  $region7: #{tpu_custom_call.1} parent=0 // loop_footer_branch
    %23 = sbr.rel target = $region3
  $region8: #{tpu_custom_call.1} parent=0 // loop_exit
    _

// kernel: tpu_custom_call.1
$region0: #{tpu_custom_call.1}
  #allocation0 [shape = 'u32[]', space=smem, size = 0x4, offset = 0x4, fixed_abs, tag = 'smem constant byte address 0x4 - core index']
  #allocation1 [shape = 'u32[144,128]{1,0:T(1,128)}', space=vmem, size = 0x12000, scoped, tag = 'internal scratch']
  %s0 = inlined_call_operand.vmem [shape: f32[64,8], index: 0, kind: input, shape index: {}]
  %s1 = inlined_call_operand.vmem [shape: f32[4,12], index: 1, kind: input, shape index: {}]
  %s2 = inlined_call_operand.vmem [shape: f32[16,8], index: 2, kind: input, shape index: {}]
  %s3 = inlined_call_operand.vmem [shape: f32[8,16], index: 3, kind: input, shape index: {}]
  %s4 = inlined_call_operand.vmem [shape: f32[24,16], index: 4, kind: input, shape index: {}]
  %s5 = inlined_call_operand.vmem [shape: f32[1,16], index: 5, kind: input, shape index: {}]
  %s6 = inlined_call_operand.vmem [shape: f32[1,16], index: 6, kind: input, shape index: {}]
  %s7 = inlined_call_operand.vmem [shape: f32[1,16], index: 7, kind: input, shape index: {}]
  %s8 = inlined_call_operand.vmem [shape: f32[48,16], index: 8, kind: input, shape index: {}]
  %s9 = inlined_call_operand.vmem [shape: f32[1,16], index: 9, kind: input, shape index: {}]
  %s10 = inlined_call_operand.vmem [shape: f32[1,16], index: 10, kind: input, shape index: {}]
  %s11 = inlined_call_operand.vmem [shape: f32[1,16], index: 11, kind: input, shape index: {}]
  %s12 = inlined_call_operand.vmem [shape: f32[12,16], index: 12, kind: input, shape index: {}]
  %s13 = inlined_call_operand.vmem [shape: f32[1,16], index: 13, kind: input, shape index: {}]
  %s14 = inlined_call_operand.vmem [shape: f32[12,16], index: 14, kind: input, shape index: {}]
  %s15 = inlined_call_operand.vmem [shape: f32[1,16], index: 15, kind: input, shape index: {}]
  %s16 = inlined_call_operand.vmem [shape: f32[8,16], index: 16, kind: input, shape index: {}]
  %s17 = inlined_call_operand.vmem [shape: f32[1,16], index: 17, kind: input, shape index: {}]
  %s18 = inlined_call_operand.vmem [shape: f32[64,16], index: 18, kind: output, shape index: {}]
  %s19 = sld [smem:[#allocation0]]
  $region105: #{tpu_custom_call.1} parent=0
    _
  %s21 = ssub.s32 1, %s19
  %s22 = scalar_select 0, %s21, %s19
  loop: start=0, step=1, limit=4
  $region2: #{tpu_custom_call.1} parent=0 // loop_pre_header
    _
  $region3: #{tpu_custom_call.1} parent=0 // loop_header
    %s24 = sphi 0, %s28
    %p25 = scmp.ge.s32.totalorder %s24, 4
    %s34 = sphi 0, %s36
    %s37 = sphi 0, %s34
    %s38 = sphi 0, %s37
    %s54 = sphi 0, %s38
    %s58 = sphi 0, %s58
    %s60 = sphi 0, %s58
    %s61 = sphi 0, %s60
    %s75 = sphi 0, %s61
    %s79 = sphi 0, %s79
    %s81 = sphi 0, %s79
    %s82 = sphi 0, %s81
    %s96 = sphi 0, %s82
    %s100 = sphi 0, %s100
    %s102 = sphi 0, %s100
    %s103 = sphi 0, %s102
    %s117 = sphi 0, %s103
    %s121 = sphi 0, %s121
    %s123 = sphi 0, %s121
    %s124 = sphi 0, %s123
    %s138 = sphi 0, %s124
    %s142 = sphi 0, %s142
    %s144 = sphi 0, %s142
    %s145 = sphi 0, %s144
    %s159 = sphi 0, %s145
    %s163 = sphi 0, %s163
    %s165 = sphi 0, %s163
    %s166 = sphi 0, %s165
    %s180 = sphi 0, %s166
    %s184 = sphi 0, %s184
    %s186 = sphi 0, %s184
    %s187 = sphi 0, %s186
    %s201 = sphi 0, %s187
    %s205 = sphi 0, %s205
    %s207 = sphi 0, %s205
    %s208 = sphi 0, %s207
    %s222 = sphi 0, %s208
    %s226 = sphi 0, %s226
    %s228 = sphi 0, %s226
    %s229 = sphi 0, %s228
    %s243 = sphi 0, %s229
    %s247 = sphi 0, %s247
    %s249 = sphi 0, %s247
    %s250 = sphi 0, %s249
    %s264 = sphi 0, %s250
    %s268 = sphi 0, %s268
    %s270 = sphi 0, %s268
    %s271 = sphi 0, %s270
    %s285 = sphi 0, %s271
    %s289 = sphi 0, %s289
    %s291 = sphi 0, %s289
    %s292 = sphi 0, %s291
    %s306 = sphi 0, %s292
    %s310 = sphi 0, %s310
    %s312 = sphi 0, %s310
    %s313 = sphi 0, %s312
    %s327 = sphi 0, %s313
    %s331 = sphi 0, %s331
    %s333 = sphi 0, %s331
    %s334 = sphi 0, %s333
    %s348 = sphi 0, %s334
    %s352 = sphi 0, %s352
    %s354 = sphi 0, %s352
    %s355 = sphi 0, %s354
    %s369 = sphi 0, %s355
    %s373 = sphi 0, %s373
    %s375 = sphi 0, %s373
    %s376 = sphi 0, %s375
    %s390 = sphi 0, %s376
    %s394 = sphi 0, %s394
    %s396 = sphi 0, %s394
    %s397 = sphi 0, %s396
    %s411 = sphi 0, %s397
    %s417 = sphi 0, %s419
    %s420 = sphi 0, %s417
    %s421 = sphi 0, %s420
    %s437 = sphi 0, %s421
  $region4: #{tpu_custom_call.1} parent=0 // loop_header_branch
    %27 = sbr.rel (%p25) target = $region8
  $region5: #{tpu_custom_call.1} parent=0 // loop_body
    %s29 = ssub.s32 %s24, 1
    %s30 = ssub.s32 %s24, 2
    %s31 = sadd.s32 %s24, 1
    %s32 = ssub.s32 %s24, %s31
    %p33 = scmp.eq.s32.totalorder %s32, 0
    %s35 = sadd.s32 %s34, 1
    %s36 = scalar_select %p33, %s34, %s35
    %p39 = pneg %p33
    %p40 = scmp.eq.s32.totalorder %s24, 1
    %p41 = por %p39, %p40
    %p42 = scmp.ne.s32.totalorder %s34, %s37
    %p43 = scmp.eq.s32.totalorder %s24, 0
    %p44 = por %p42, %p43
    %p45 = scmp.ne.s32.totalorder %s34, %s37
    %p46 = scmp.eq.s32.totalorder %s29, 1
    %p47 = por %p45, %p46
    %p48 = scmp.ne.s32.totalorder %s37, %s38
    %p49 = scmp.eq.s32.totalorder %s29, 0
    %p50 = por %p48, %p49
    %p51 = scmp.ne.s32.totalorder %s37, %s38
    %p52 = scmp.eq.s32.totalorder %s30, 1
    %p53 = por %p51, %p52
    %p55 = scmp.ne.s32.totalorder %s38, %s54
    %p56 = scmp.eq.s32.totalorder %s30, 0
    %p57 = por %p55, %p56
    %s59 = sadd.s32 %s58, 1
    %p62 = scmp.eq.s32.totalorder %s24, 1
    %p63 = scmp.ne.s32.totalorder %s58, %s60
    %p64 = scmp.eq.s32.totalorder %s24, 0
    %p65 = por %p63, %p64
    %p66 = scmp.ne.s32.totalorder %s58, %s60
    %p67 = scmp.eq.s32.totalorder %s29, 1
    %p68 = por %p66, %p67
    %p69 = scmp.ne.s32.totalorder %s60, %s61
    %p70 = scmp.eq.s32.totalorder %s29, 0
    %p71 = por %p69, %p70
    %p72 = scmp.ne.s32.totalorder %s60, %s61
    %p73 = scmp.eq.s32.totalorder %s30, 1
    %p74 = por %p72, %p73
    %p76 = scmp.ne.s32.totalorder %s61, %s75
    %p77 = scmp.eq.s32.totalorder %s30, 0
    %p78 = por %p76, %p77
    %s80 = sadd.s32 %s79, 1
    %p83 = scmp.eq.s32.totalorder %s24, 1
    %p84 = scmp.ne.s32.totalorder %s79, %s81
    %p85 = scmp.eq.s32.totalorder %s24, 0
    %p86 = por %p84, %p85
    %p87 = scmp.ne.s32.totalorder %s79, %s81
    %p88 = scmp.eq.s32.totalorder %s29, 1
    %p89 = por %p87, %p88
    %p90 = scmp.ne.s32.totalorder %s81, %s82
    %p91 = scmp.eq.s32.totalorder %s29, 0
    %p92 = por %p90, %p91
    %p93 = scmp.ne.s32.totalorder %s81, %s82
    %p94 = scmp.eq.s32.totalorder %s30, 1
    %p95 = por %p93, %p94
    %p97 = scmp.ne.s32.totalorder %s82, %s96
    %p98 = scmp.eq.s32.totalorder %s30, 0
    %p99 = por %p97, %p98
    %s101 = sadd.s32 %s100, 1
    %p104 = scmp.eq.s32.totalorder %s24, 1
    %p105 = scmp.ne.s32.totalorder %s100, %s102
    %p106 = scmp.eq.s32.totalorder %s24, 0
    %p107 = por %p105, %p106
    %p108 = scmp.ne.s32.totalorder %s100, %s102
    %p109 = scmp.eq.s32.totalorder %s29, 1
    %p110 = por %p108, %p109
    %p111 = scmp.ne.s32.totalorder %s102, %s103
    %p112 = scmp.eq.s32.totalorder %s29, 0
    %p113 = por %p111, %p112
    %p114 = scmp.ne.s32.totalorder %s102, %s103
    %p115 = scmp.eq.s32.totalorder %s30, 1
    %p116 = por %p114, %p115
    %p118 = scmp.ne.s32.totalorder %s103, %s117
    %p119 = scmp.eq.s32.totalorder %s30, 0
    %p120 = por %p118, %p119
    %s122 = sadd.s32 %s121, 1
    %p125 = scmp.eq.s32.totalorder %s24, 1
    %p126 = scmp.ne.s32.totalorder %s121, %s123
    %p127 = scmp.eq.s32.totalorder %s24, 0
    %p128 = por %p126, %p127
    %p129 = scmp.ne.s32.totalorder %s121, %s123
    %p130 = scmp.eq.s32.totalorder %s29, 1
    %p131 = por %p129, %p130
    %p132 = scmp.ne.s32.totalorder %s123, %s124
    %p133 = scmp.eq.s32.totalorder %s29, 0
    %p134 = por %p132, %p133
    %p135 = scmp.ne.s32.totalorder %s123, %s124
    %p136 = scmp.eq.s32.totalorder %s30, 1
    %p137 = por %p135, %p136
    %p139 = scmp.ne.s32.totalorder %s124, %s138
    %p140 = scmp.eq.s32.totalorder %s30, 0
    %p141 = por %p139, %p140
    %s143 = sadd.s32 %s142, 1
    %p146 = scmp.eq.s32.totalorder %s24, 1
    %p147 = scmp.ne.s32.totalorder %s142, %s144
    %p148 = scmp.eq.s32.totalorder %s24, 0
    %p149 = por %p147, %p148
    %p150 = scmp.ne.s32.totalorder %s142, %s144
    %p151 = scmp.eq.s32.totalorder %s29, 1
    %p152 = por %p150, %p151
    %p153 = scmp.ne.s32.totalorder %s144, %s145
    %p154 = scmp.eq.s32.totalorder %s29, 0
    %p155 = por %p153, %p154
    %p156 = scmp.ne.s32.totalorder %s144, %s145
    %p157 = scmp.eq.s32.totalorder %s30, 1
    %p158 = por %p156, %p157
    %p160 = scmp.ne.s32.totalorder %s145, %s159
    %p161 = scmp.eq.s32.totalorder %s30, 0
    %p162 = por %p160, %p161
    %s164 = sadd.s32 %s163, 1
    %p167 = scmp.eq.s32.totalorder %s24, 1
    %p168 = scmp.ne.s32.totalorder %s163, %s165
    %p169 = scmp.eq.s32.totalorder %s24, 0
    %p170 = por %p168, %p169
    %p171 = scmp.ne.s32.totalorder %s163, %s165
    %p172 = scmp.eq.s32.totalorder %s29, 1
    %p173 = por %p171, %p172
    %p174 = scmp.ne.s32.totalorder %s165, %s166
    %p175 = scmp.eq.s32.totalorder %s29, 0
    %p176 = por %p174, %p175
    %p177 = scmp.ne.s32.totalorder %s165, %s166
    %p178 = scmp.eq.s32.totalorder %s30, 1
    %p179 = por %p177, %p178
    %p181 = scmp.ne.s32.totalorder %s166, %s180
    %p182 = scmp.eq.s32.totalorder %s30, 0
    %p183 = por %p181, %p182
    %s185 = sadd.s32 %s184, 1
    %p188 = scmp.eq.s32.totalorder %s24, 1
    %p189 = scmp.ne.s32.totalorder %s184, %s186
    %p190 = scmp.eq.s32.totalorder %s24, 0
    %p191 = por %p189, %p190
    %p192 = scmp.ne.s32.totalorder %s184, %s186
    %p193 = scmp.eq.s32.totalorder %s29, 1
    %p194 = por %p192, %p193
    %p195 = scmp.ne.s32.totalorder %s186, %s187
    %p196 = scmp.eq.s32.totalorder %s29, 0
    %p197 = por %p195, %p196
    %p198 = scmp.ne.s32.totalorder %s186, %s187
    %p199 = scmp.eq.s32.totalorder %s30, 1
    %p200 = por %p198, %p199
    %p202 = scmp.ne.s32.totalorder %s187, %s201
    %p203 = scmp.eq.s32.totalorder %s30, 0
    %p204 = por %p202, %p203
    %s206 = sadd.s32 %s205, 1
    %p209 = scmp.eq.s32.totalorder %s24, 1
    %p210 = scmp.ne.s32.totalorder %s205, %s207
    %p211 = scmp.eq.s32.totalorder %s24, 0
    %p212 = por %p210, %p211
    %p213 = scmp.ne.s32.totalorder %s205, %s207
    %p214 = scmp.eq.s32.totalorder %s29, 1
    %p215 = por %p213, %p214
    %p216 = scmp.ne.s32.totalorder %s207, %s208
    %p217 = scmp.eq.s32.totalorder %s29, 0
    %p218 = por %p216, %p217
    %p219 = scmp.ne.s32.totalorder %s207, %s208
    %p220 = scmp.eq.s32.totalorder %s30, 1
    %p221 = por %p219, %p220
    %p223 = scmp.ne.s32.totalorder %s208, %s222
    %p224 = scmp.eq.s32.totalorder %s30, 0
    %p225 = por %p223, %p224
    %s227 = sadd.s32 %s226, 1
    %p230 = scmp.eq.s32.totalorder %s24, 1
    %p231 = scmp.ne.s32.totalorder %s226, %s228
    %p232 = scmp.eq.s32.totalorder %s24, 0
    %p233 = por %p231, %p232
    %p234 = scmp.ne.s32.totalorder %s226, %s228
    %p235 = scmp.eq.s32.totalorder %s29, 1
    %p236 = por %p234, %p235
    %p237 = scmp.ne.s32.totalorder %s228, %s229
    %p238 = scmp.eq.s32.totalorder %s29, 0
    %p239 = por %p237, %p238
    %p240 = scmp.ne.s32.totalorder %s228, %s229
    %p241 = scmp.eq.s32.totalorder %s30, 1
    %p242 = por %p240, %p241
    %p244 = scmp.ne.s32.totalorder %s229, %s243
    %p245 = scmp.eq.s32.totalorder %s30, 0
    %p246 = por %p244, %p245
    %s248 = sadd.s32 %s247, 1
    %p251 = scmp.eq.s32.totalorder %s24, 1
    %p252 = scmp.ne.s32.totalorder %s247, %s249
    %p253 = scmp.eq.s32.totalorder %s24, 0
    %p254 = por %p252, %p253
    %p255 = scmp.ne.s32.totalorder %s247, %s249
    %p256 = scmp.eq.s32.totalorder %s29, 1
    %p257 = por %p255, %p256
    %p258 = scmp.ne.s32.totalorder %s249, %s250
    %p259 = scmp.eq.s32.totalorder %s29, 0
    %p260 = por %p258, %p259
    %p261 = scmp.ne.s32.totalorder %s249, %s250
    %p262 = scmp.eq.s32.totalorder %s30, 1
    %p263 = por %p261, %p262
    %p265 = scmp.ne.s32.totalorder %s250, %s264
    %p266 = scmp.eq.s32.totalorder %s30, 0
    %p267 = por %p265, %p266
    %s269 = sadd.s32 %s268, 1
    %p272 = scmp.eq.s32.totalorder %s24, 1
    %p273 = scmp.ne.s32.totalorder %s268, %s270
    %p274 = scmp.eq.s32.totalorder %s24, 0
    %p275 = por %p273, %p274
    %p276 = scmp.ne.s32.totalorder %s268, %s270
    %p277 = scmp.eq.s32.totalorder %s29, 1
    %p278 = por %p276, %p277
    %p279 = scmp.ne.s32.totalorder %s270, %s271
    %p280 = scmp.eq.s32.totalorder %s29, 0
    %p281 = por %p279, %p280
    %p282 = scmp.ne.s32.totalorder %s270, %s271
    %p283 = scmp.eq.s32.totalorder %s30, 1
    %p284 = por %p282, %p283
    %p286 = scmp.ne.s32.totalorder %s271, %s285
    %p287 = scmp.eq.s32.totalorder %s30, 0
    %p288 = por %p286, %p287
    %s290 = sadd.s32 %s289, 1
    %p293 = scmp.eq.s32.totalorder %s24, 1
    %p294 = scmp.ne.s32.totalorder %s289, %s291
    %p295 = scmp.eq.s32.totalorder %s24, 0
    %p296 = por %p294, %p295
    %p297 = scmp.ne.s32.totalorder %s289, %s291
    %p298 = scmp.eq.s32.totalorder %s29, 1
    %p299 = por %p297, %p298
    %p300 = scmp.ne.s32.totalorder %s291, %s292
    %p301 = scmp.eq.s32.totalorder %s29, 0
    %p302 = por %p300, %p301
    %p303 = scmp.ne.s32.totalorder %s291, %s292
    %p304 = scmp.eq.s32.totalorder %s30, 1
    %p305 = por %p303, %p304
    %p307 = scmp.ne.s32.totalorder %s292, %s306
    %p308 = scmp.eq.s32.totalorder %s30, 0
    %p309 = por %p307, %p308
    %s311 = sadd.s32 %s310, 1
    %p314 = scmp.eq.s32.totalorder %s24, 1
    %p315 = scmp.ne.s32.totalorder %s310, %s312
    %p316 = scmp.eq.s32.totalorder %s24, 0
    %p317 = por %p315, %p316
    %p318 = scmp.ne.s32.totalorder %s310, %s312
    %p319 = scmp.eq.s32.totalorder %s29, 1
    %p320 = por %p318, %p319
    %p321 = scmp.ne.s32.totalorder %s312, %s313
    %p322 = scmp.eq.s32.totalorder %s29, 0
    %p323 = por %p321, %p322
    %p324 = scmp.ne.s32.totalorder %s312, %s313
    %p325 = scmp.eq.s32.totalorder %s30, 1
    %p326 = por %p324, %p325
    %p328 = scmp.ne.s32.totalorder %s313, %s327
    %p329 = scmp.eq.s32.totalorder %s30, 0
    %p330 = por %p328, %p329
    %s332 = sadd.s32 %s331, 1
    %p335 = scmp.eq.s32.totalorder %s24, 1
    %p336 = scmp.ne.s32.totalorder %s331, %s333
    %p337 = scmp.eq.s32.totalorder %s24, 0
    %p338 = por %p336, %p337
    %p339 = scmp.ne.s32.totalorder %s331, %s333
    %p340 = scmp.eq.s32.totalorder %s29, 1
    %p341 = por %p339, %p340
    %p342 = scmp.ne.s32.totalorder %s333, %s334
    %p343 = scmp.eq.s32.totalorder %s29, 0
    %p344 = por %p342, %p343
    %p345 = scmp.ne.s32.totalorder %s333, %s334
    %p346 = scmp.eq.s32.totalorder %s30, 1
    %p347 = por %p345, %p346
    %p349 = scmp.ne.s32.totalorder %s334, %s348
    %p350 = scmp.eq.s32.totalorder %s30, 0
    %p351 = por %p349, %p350
    %s353 = sadd.s32 %s352, 1
    %p356 = scmp.eq.s32.totalorder %s24, 1
    %p357 = scmp.ne.s32.totalorder %s352, %s354
    %p358 = scmp.eq.s32.totalorder %s24, 0
    %p359 = por %p357, %p358
    %p360 = scmp.ne.s32.totalorder %s352, %s354
    %p361 = scmp.eq.s32.totalorder %s29, 1
    %p362 = por %p360, %p361
    %p363 = scmp.ne.s32.totalorder %s354, %s355
    %p364 = scmp.eq.s32.totalorder %s29, 0
    %p365 = por %p363, %p364
    %p366 = scmp.ne.s32.totalorder %s354, %s355
    %p367 = scmp.eq.s32.totalorder %s30, 1
    %p368 = por %p366, %p367
    %p370 = scmp.ne.s32.totalorder %s355, %s369
    %p371 = scmp.eq.s32.totalorder %s30, 0
    %p372 = por %p370, %p371
    %s374 = sadd.s32 %s373, 1
    %p377 = scmp.eq.s32.totalorder %s24, 1
    %p378 = scmp.ne.s32.totalorder %s373, %s375
    %p379 = scmp.eq.s32.totalorder %s24, 0
    %p380 = por %p378, %p379
    %p381 = scmp.ne.s32.totalorder %s373, %s375
    %p382 = scmp.eq.s32.totalorder %s29, 1
    %p383 = por %p381, %p382
    %p384 = scmp.ne.s32.totalorder %s375, %s376
    %p385 = scmp.eq.s32.totalorder %s29, 0
    %p386 = por %p384, %p385
    %p387 = scmp.ne.s32.totalorder %s375, %s376
    %p388 = scmp.eq.s32.totalorder %s30, 1
    %p389 = por %p387, %p388
    %p391 = scmp.ne.s32.totalorder %s376, %s390
    %p392 = scmp.eq.s32.totalorder %s30, 0
    %p393 = por %p391, %p392
    %s395 = sadd.s32 %s394, 1
    %p398 = scmp.eq.s32.totalorder %s24, 1
    %p399 = scmp.ne.s32.totalorder %s394, %s396
    %p400 = scmp.eq.s32.totalorder %s24, 0
    %p401 = por %p399, %p400
    %p402 = scmp.ne.s32.totalorder %s394, %s396
    %p403 = scmp.eq.s32.totalorder %s29, 1
    %p404 = por %p402, %p403
    %p405 = scmp.ne.s32.totalorder %s396, %s397
    %p406 = scmp.eq.s32.totalorder %s29, 0
    %p407 = por %p405, %p406
    %p408 = scmp.ne.s32.totalorder %s396, %s397
    %p409 = scmp.eq.s32.totalorder %s30, 1
    %p410 = por %p408, %p409
    %p412 = scmp.ne.s32.totalorder %s397, %s411
    %p413 = scmp.eq.s32.totalorder %s30, 0
    %p414 = por %p412, %p413
    %s415 = ssub.s32 %s24, %s31
    %p416 = scmp.eq.s32.totalorder %s415, 0
    %s418 = sadd.s32 %s417, 1
    %s419 = scalar_select %p416, %s417, %s418
    %p422 = pneg %p416
    %p423 = scmp.eq.s32.totalorder %s24, 1
    %p424 = por %p422, %p423
    %p425 = scmp.ne.s32.totalorder %s417, %s420
    %p426 = scmp.eq.s32.totalorder %s24, 0
    %p427 = por %p425, %p426
    %p428 = scmp.ne.s32.totalorder %s417, %s420
    %p429 = scmp.eq.s32.totalorder %s29, 1
    %p430 = por %p428, %p429
    %p431 = scmp.ne.s32.totalorder %s420, %s421
    %p432 = scmp.eq.s32.totalorder %s29, 0
    %p433 = por %p431, %p432
    %p434 = scmp.ne.s32.totalorder %s420, %s421
    %p435 = scmp.eq.s32.totalorder %s30, 1
    %p436 = por %p434, %p435
    %p438 = scmp.ne.s32.totalorder %s421, %s437
    %p439 = scmp.eq.s32.totalorder %s30, 0
    %p440 = por %p438, %p439
    %p441 = scmp.le.s32.totalorder 1, %s24
    %p442 = scmp.lt.s32.totalorder %s24, 3
    %p443 = pnand %p441, %p442
    %p444 = pneg %p443
    // Predicated region
    $region9: #{tpu_custom_call.1} parent=5 // pred_check
      _
    $region10: #{tpu_custom_call.1} parent=5 // pred_check_branch
      %446 = sbr.rel (%p443) target = $region12
    $region11: #{tpu_custom_call.1} parent=5 // pred_region
      %s447 = ssub.s32 %s24, 1
      // Predicated region
      $region13: #{tpu_custom_call.1} parent=11 // pred_check
        %p448 = pneg %p71
      $region14: #{tpu_custom_call.1} parent=11 // pred_check_branch
        %450 = sbr.rel (%p448) target = $region16
      $region15: #{tpu_custom_call.1} parent=11 // pred_region
        _
      $region16: #{tpu_custom_call.1} parent=11 // pred_fallthru
        _
      // Predicated region
      $region17: #{tpu_custom_call.1} parent=11 // pred_check
        %p451 = pneg %p92
      $region18: #{tpu_custom_call.1} parent=11 // pred_check_branch
        %453 = sbr.rel (%p451) target = $region20
      $region19: #{tpu_custom_call.1} parent=11 // pred_region
        _
      $region20: #{tpu_custom_call.1} parent=11 // pred_fallthru
        _
      // Predicated region
      $region21: #{tpu_custom_call.1} parent=11 // pred_check
        %p454 = pneg %p113
      $region22: #{tpu_custom_call.1} parent=11 // pred_check_branch
        %456 = sbr.rel (%p454) target = $region24
      $region23: #{tpu_custom_call.1} parent=11 // pred_region
        _
      $region24: #{tpu_custom_call.1} parent=11 // pred_fallthru
        _
      // Predicated region
      $region25: #{tpu_custom_call.1} parent=11 // pred_check
        %p457 = pneg %p134
      $region26: #{tpu_custom_call.1} parent=11 // pred_check_branch
        %459 = sbr.rel (%p457) target = $region28
      $region27: #{tpu_custom_call.1} parent=11 // pred_region
        _
      $region28: #{tpu_custom_call.1} parent=11 // pred_fallthru
        _
      // Predicated region
      $region29: #{tpu_custom_call.1} parent=11 // pred_check
        %p460 = pneg %p155
      $region30: #{tpu_custom_call.1} parent=11 // pred_check_branch
        %462 = sbr.rel (%p460) target = $region32
      $region31: #{tpu_custom_call.1} parent=11 // pred_region
        _
      $region32: #{tpu_custom_call.1} parent=11 // pred_fallthru
        _
      // Predicated region
      $region33: #{tpu_custom_call.1} parent=11 // pred_check
        %p463 = pneg %p176
      $region34: #{tpu_custom_call.1} parent=11 // pred_check_branch
        %465 = sbr.rel (%p463) target = $region36
      $region35: #{tpu_custom_call.1} parent=11 // pred_region
        _
      $region36: #{tpu_custom_call.1} parent=11 // pred_fallthru
        _
      // Predicated region
      $region37: #{tpu_custom_call.1} parent=11 // pred_check
        %p466 = pneg %p197
      $region38: #{tpu_custom_call.1} parent=11 // pred_check_branch
        %468 = sbr.rel (%p466) target = $region40
      $region39: #{tpu_custom_call.1} parent=11 // pred_region
        _
      $region40: #{tpu_custom_call.1} parent=11 // pred_fallthru
        _
      // Predicated region
      $region41: #{tpu_custom_call.1} parent=11 // pred_check
        %p469 = pneg %p218
      $region42: #{tpu_custom_call.1} parent=11 // pred_check_branch
        %471 = sbr.rel (%p469) target = $region44
      $region43: #{tpu_custom_call.1} parent=11 // pred_region
        _
      $region44: #{tpu_custom_call.1} parent=11 // pred_fallthru
        _
      // Predicated region
      $region45: #{tpu_custom_call.1} parent=11 // pred_check
        %p472 = pneg %p239
      $region46: #{tpu_custom_call.1} parent=11 // pred_check_branch
        %474 = sbr.rel (%p472) target = $region48
      $region47: #{tpu_custom_call.1} parent=11 // pred_region
        _
      $region48: #{tpu_custom_call.1} parent=11 // pred_fallthru
        _
      // Predicated region
      $region49: #{tpu_custom_call.1} parent=11 // pred_check
        %p475 = pneg %p260
      $region50: #{tpu_custom_call.1} parent=11 // pred_check_branch
        %477 = sbr.rel (%p475) target = $region52
      $region51: #{tpu_custom_call.1} parent=11 // pred_region
        _
      $region52: #{tpu_custom_call.1} parent=11 // pred_fallthru
        _
      // Predicated region
      $region53: #{tpu_custom_call.1} parent=11 // pred_check
        %p478 = pneg %p281
      $region54: #{tpu_custom_call.1} parent=11 // pred_check_branch
        %480 = sbr.rel (%p478) target = $region56
      $region55: #{tpu_custom_call.1} parent=11 // pred_region
        _
      $region56: #{tpu_custom_call.1} parent=11 // pred_fallthru
        _
      // Predicated region
      $region57: #{tpu_custom_call.1} parent=11 // pred_check
        %p481 = pneg %p302
      $region58: #{tpu_custom_call.1} parent=11 // pred_check_branch
        %483 = sbr.rel (%p481) target = $region60
      $region59: #{tpu_custom_call.1} parent=11 // pred_region
        _
      $region60: #{tpu_custom_call.1} parent=11 // pred_fallthru
        _
      // Predicated region
      $region61: #{tpu_custom_call.1} parent=11 // pred_check
        %p484 = pneg %p323
      $region62: #{tpu_custom_call.1} parent=11 // pred_check_branch
        %486 = sbr.rel (%p484) target = $region64
      $region63: #{tpu_custom_call.1} parent=11 // pred_region
        _
      $region64: #{tpu_custom_call.1} parent=11 // pred_fallthru
        _
      // Predicated region
      $region65: #{tpu_custom_call.1} parent=11 // pred_check
        %p487 = pneg %p344
      $region66: #{tpu_custom_call.1} parent=11 // pred_check_branch
        %489 = sbr.rel (%p487) target = $region68
      $region67: #{tpu_custom_call.1} parent=11 // pred_region
        _
      $region68: #{tpu_custom_call.1} parent=11 // pred_fallthru
        _
      // Predicated region
      $region69: #{tpu_custom_call.1} parent=11 // pred_check
        %p490 = pneg %p365
      $region70: #{tpu_custom_call.1} parent=11 // pred_check_branch
        %492 = sbr.rel (%p490) target = $region72
      $region71: #{tpu_custom_call.1} parent=11 // pred_region
        _
      $region72: #{tpu_custom_call.1} parent=11 // pred_fallthru
        _
      // Predicated region
      $region73: #{tpu_custom_call.1} parent=11 // pred_check
        %p493 = pneg %p386
      $region74: #{tpu_custom_call.1} parent=11 // pred_check_branch
        %495 = sbr.rel (%p493) target = $region76
      $region75: #{tpu_custom_call.1} parent=11 // pred_region
        _
      $region76: #{tpu_custom_call.1} parent=11 // pred_fallthru
        _
      // Predicated region
      $region77: #{tpu_custom_call.1} parent=11 // pred_check
        %p496 = pneg %p407
      $region78: #{tpu_custom_call.1} parent=11 // pred_check_branch
        %498 = sbr.rel (%p496) target = $region80
      $region79: #{tpu_custom_call.1} parent=11 // pred_region
        _
      $region80: #{tpu_custom_call.1} parent=11 // pred_fallthru
        _
    $region12: #{tpu_custom_call.1} parent=5 // pred_fallthru
      _
    %p499 = scmp.lt.s32.totalorder %s24, 2
    // Predicated region
    $region81: #{tpu_custom_call.1} parent=5 // pred_check
      %p500 = pneg %p499
    $region82: #{tpu_custom_call.1} parent=5 // pred_check_branch
      %502 = sbr.rel (%p500) target = $region84
    $region83: #{tpu_custom_call.1} parent=5 // pred_region
      // Predicated region
      $region85: #{tpu_custom_call.1} parent=83 // pred_check
        %p503 = pneg %p44
      $region86: #{tpu_custom_call.1} parent=83 // pred_check_branch
        %505 = sbr.rel (%p503) target = $region88
      $region87: #{tpu_custom_call.1} parent=83 // pred_region
        %s506 = smul.u32 4, %s24
        %p507 = scmp.lt.s32.totalorder %s506, 7
        %s508 = scalar_select %p507, %s506, 7
        %s509 = smul.addr %s508, 8
        %s510 = scalar_lea.vmem %s0, %s509
        %s511 = smul.u32 4, %s24
      $region88: #{tpu_custom_call.1} parent=83 // pred_fallthru
        _
    $region84: #{tpu_custom_call.1} parent=5 // pred_fallthru
      _
    %p512 = scmp.le.s32.totalorder 1, %s24
    %p513 = scmp.lt.s32.totalorder %s24, 3
    %p514 = pnand %p512, %p513
    %p515 = pneg %p514
    // Predicated region
    $region89: #{tpu_custom_call.1} parent=5 // pred_check
      _
    $region90: #{tpu_custom_call.1} parent=5 // pred_check_branch
      %517 = sbr.rel (%p514) target = $region92
    $region91: #{tpu_custom_call.1} parent=5 // pred_region
      %s518 = ssub.s32 %s24, 1
      %s519 = smul.u32 4, %s29
      %p520 = scmp.lt.s32.totalorder %s519, 7
      %s521 = scalar_select %p520, %s519, 7
      %s522 = smul.addr %s521, 8
      %s523 = scalar_lea.vmem %s0, %s522
      %p524 = pneg %p50
      %p525 = pneg %p47
      %p526 = pneg %p71
      %p527 = pneg %p68
      %p528 = pneg %p92
      %p529 = pneg %p89
      %p530 = pneg %p113
      %p531 = pneg %p110
      %p532 = pneg %p134
      %p533 = pneg %p131
      %p534 = pneg %p155
      %p535 = pneg %p152
      %p536 = pneg %p176
      %p537 = pneg %p173
      %p538 = pneg %p197
      %p539 = pneg %p194
      %p540 = pneg %p218
      %p541 = pneg %p215
      %p542 = pneg %p239
      %p543 = pneg %p236
      %p544 = pneg %p260
      %p545 = pneg %p257
      %p546 = pneg %p281
      %p547 = pneg %p278
      %p548 = pneg %p302
      %p549 = pneg %p299
      %p550 = pneg %p323
      %p551 = pneg %p320
      %p552 = pneg %p344
      %p553 = pneg %p341
      %p554 = pneg %p365
      %p555 = pneg %p362
      %p556 = pneg %p386
      %p557 = pneg %p383
      %p558 = pneg %p407
      %p559 = pneg %p404
      %p560 = pneg %p433
      %p561 = pneg %p430
      %s562 = smul.u32 4, %s29
      %p563 = scmp.lt.s32.totalorder %s562, 7
      %s564 = scalar_select %p563, %s562, 7
      %s565 = smul.addr %s564, 8
      %s566 = scalar_lea.vmem %s18, %s565
      %s567 = smul.u32 4, %s29
      %p568 = scmp.lt.s32.totalorder %s567, 7
      %s569 = scalar_select %p568, %s567, 7
      %s570 = smul.addr %s569, 8
      %s571 = scalar_lea.vmem %s0, %s570
      %s572 = smul.u32 4, %s29
      %s573 = smul.u32 4, %s29
      %p574 = scmp.lt.s32.totalorder %s573, 7
      %s575 = scalar_select %p574, %s573, 7
      %s576 = smul.addr %s575, 8
      %s577 = scalar_lea.vmem %s18, %s576
      %s578 = smul.u32 4, %s29
      %v579 = vld [vmem:[%s571] sm:$0xff]
      %v580 = vld [vmem:[%s571 + $0x8] sm:$0xff]
      %v581 = vld [vmem:[%s571 + $0x10] sm:$0xff]
      %v582 = vld [vmem:[%s571 + $0x18] sm:$0xff]
      %v583 = vlaneseq
      %v584 = vshrl.u32 %v583, 7
      %v585 = vadd.s32 %v584, 8
      %v586 = vadd.s32 %v584, 16
      %v587 = vadd.s32 %v584, 24
      %vm588 = vcmp.lt.s32.totalorder %v584, 0
      %v589 = vsub.s32 0, %v584
      %v590 = vsel %vm588, %v589, %v584
      %v591 = vshrl.u32 %v590, 4
      %v592 = vand.u32 %v590, 15
      %v593 = vsub.s32 0, %v592
      %v594 = vsel %vm588, %v593, %v592
      %vm595 = vcmp.lt.s32.totalorder %v585, 0
      %v596 = vsub.s32 0, %v585
      %v597 = vsel %vm595, %v596, %v585
      %v598 = vshrl.u32 %v597, 4
      %v599 = vand.u32 %v597, 15
      %v600 = vsub.s32 0, %v599
      %v601 = vsel %vm595, %v600, %v599
      %vm602 = vcmp.lt.s32.totalorder %v586, 0
      %v603 = vsub.s32 0, %v586
      %v604 = vsel %vm602, %v603, %v586
      %v605 = vshrl.u32 %v604, 4
      %v606 = vand.u32 %v604, 15
      %v607 = vsub.s32 0, %v606
      %v608 = vsel %vm602, %v607, %v606
      %vm609 = vcmp.lt.s32.totalorder %v587, 0
      %v610 = vsub.s32 0, %v587
      %v611 = vsel %vm609, %v610, %v587
      %v612 = vshrl.u32 %v611, 4
      %v613 = vand.u32 %v611, 15
      %v614 = vsub.s32 0, %v613
      %v615 = vsel %vm609, %v614, %v613
      %vm616 = vcmp.ne.s32.totalorder %v594, 0
      %vm617 = vcmp.ne.s32.totalorder %v601, 0
      %vm618 = vcmp.ne.s32.totalorder %v608, 0
      %vm619 = vcmp.ne.s32.totalorder %v615, 0
      %vm620 = vcmp.lt.s32.totalorder %v594, 0
      %vm621 = vcmp.lt.s32.totalorder %v601, 0
      %vm622 = vcmp.lt.s32.totalorder %v608, 0
      %vm623 = vcmp.lt.s32.totalorder %v615, 0
      %vm624 = vmand %vm620, %vm616
      %vm625 = vmand %vm621, %vm617
      %vm626 = vmand %vm622, %vm618
      %vm627 = vmand %vm623, %vm619
      %v628 = vadd.s32 %v594, 16
      %v629 = vadd.s32 %v601, 16
      %v630 = vadd.s32 %v608, 16
      %v631 = vadd.s32 %v615, 16
      %v632 = vsel %vm624, %v628, %v594
      %v633 = vsel %vm625, %v629, %v601
      %v634 = vsel %vm626, %v630, %v608
      %v635 = vsel %vm627, %v631, %v615
      %v636 = vrot.slane %v579, 7
      %v637 = vrot.slane %v580, 7
      %v638 = vrot.slane %v581, 7
      %v639 = vrot.slane %v582, 7
      %vm640 = vcmp.lt.s32.totalorder %v584, 1
      %v641 = vsel %vm640, %v638, %v639
      %v642 = vsel %vm640, %v637, %v638
      %v643 = vsel %vm640, %v636, %v637
      %v644 = vsel %vm640, %v639, %v636
      %v645 = vadd.s32 %v632, 4294967295
      %v646 = vadd.s32 %v633, 4294967295
      %v647 = vadd.s32 %v634, 4294967295
      %v648 = vadd.s32 %v635, 4294967295
      %vm649 = vcmp.ge.s32.totalorder %v645, 0
      %vm650 = vcmp.ge.s32.totalorder %v646, 0
      %vm651 = vcmp.ge.s32.totalorder %v647, 0
      %vm652 = vcmp.ge.s32.totalorder %v648, 0
      %vm653 = vcmp.lt.s32.totalorder %v645, 16
      %vm654 = vcmp.lt.s32.totalorder %v646, 16
      %vm655 = vcmp.lt.s32.totalorder %v647, 16
      %vm656 = vcmp.lt.s32.totalorder %v648, 16
      %vm657 = vmand %vm649, %vm653
      %vm658 = vmand %vm650, %vm654
      %vm659 = vmand %vm651, %vm655
      %vm660 = vmand %vm652, %vm656
      %v661 = vsel %vm657, 1, 0
      %v662 = vsel %vm658, 1, 0
      %v663 = vsel %vm659, 1, 0
      %v664 = vsel %vm660, 1, 0
      %vm665 = vcmp.eq.s32.totalorder %v661, 1
      %vm666 = vcmp.eq.s32.totalorder %v662, 1
      %vm667 = vcmp.eq.s32.totalorder %v663, 1
      %vm668 = vcmp.eq.s32.totalorder %v664, 1
      %v669 = vsel %vm665, %v644, 0.0
      %v670 = vsel %vm666, %v643, 0.0
      %v671 = vsel %vm667, %v642, 0.0
      %v672 = vsel %vm668, %v641, 0.0
      %v673 = vld [vmem:[%s4] sm:$0xff]
      %v674 = vld [vmem:[%s4 + $0x8] sm:$0xff]
      %vm675 = vcmask 64512
      %v677 = vsel %vm675, %v579, 0
      %v680 = vsel %vm675, %v580, 0
      %v683 = vsel %vm675, %v581, 0
      %v686 = vsel %vm675, %v582, 0
      %688 = vmatprep.subr.mxu0 0.0
      %689 = vmatpush1.msra.mxu0 0.0
      %690 = vmatprep.subr.mxu0 0.0
      %691 = vmatpush1.msra.mxu0 0.0
      %692 = vmatprep.subr.mxu0 0.0
      %693 = vmatpush1.msra.mxu0 0.0
      %694 = vmatprep.subr.mxu0 0.0
      %695 = vmatpush1.msra.mxu0 0.0
      %696 = vmatprep.subr.mxu0 0.0
      %697 = vmatpush1.msra.mxu0 0.0
      %698 = vmatprep.subr.mxu0 0.0
      %699 = vmatpush1.msra.mxu0 0.0
      %700 = vmatprep.subr.mxu0 0.0
      %701 = vmatpush1.msra.mxu0 0.0
      %702 = vmatprep.subr.mxu0 0.0
      %703 = vmatpush1.msra.mxu0 0.0
      %704 = vmatprep.subr.mxu0 0.0
      %705 = vmatpush1.msra.mxu0 0.0
      %706 = vmatprep.subr.mxu0 0.0
      %707 = vmatpush1.msra.mxu0 0.0
      %708 = vmatprep.subr.mxu0 0.0
      %709 = vmatpush1.msra.mxu0 0.0
      %710 = vmatprep.subr.mxu0 0.0
      %711 = vmatpush1.msra.mxu0 0.0
      %712 = vmatprep.subr.mxu0 0.0
      %713 = vmatpush1.msra.mxu0 0.0
      %714 = vmatprep.subr.mxu0 0.0
      %715 = vmatpush1.msra.mxu0 0.0
      %716 = vmatprep.subr.mxu0 0.0
      %717 = vmatpush1.msra.mxu0 0.0
      %718 = vmatprep.subr.mxu0 0.0
      %719 = vmatpush1.msra.mxu0 %v674
      %720 = vmatprep.subr.mxu0 0.0
      %721 = vmatpush2.msra.mxu0 0.0
      %722 = vmatprep.subr.mxu0 0.0
      %723 = vmatpush2.msra.mxu0 0.0
      %724 = vmatprep.subr.mxu0 0.0
      %725 = vmatpush2.msra.mxu0 0.0
      %726 = vmatprep.subr.mxu0 0.0
      %727 = vmatpush2.msra.mxu0 0.0
      %728 = vmatprep.subr.mxu0 0.0
      %729 = vmatpush2.msra.mxu0 0.0
      %730 = vmatprep.subr.mxu0 0.0
      %731 = vmatpush2.msra.mxu0 0.0
      %732 = vmatprep.subr.mxu0 0.0
      %733 = vmatpush2.msra.mxu0 0.0
      %734 = vmatprep.subr.mxu0 0.0
      %735 = vmatpush2.msra.mxu0 0.0
      %736 = vmatprep.subr.mxu0 0.0
      %737 = vmatpush2.msra.mxu0 0.0
      %738 = vmatprep.subr.mxu0 0.0
      %739 = vmatpush2.msra.mxu0 0.0
      %740 = vmatprep.subr.mxu0 0.0
      %741 = vmatpush2.msra.mxu0 0.0
      %742 = vmatprep.subr.mxu0 0.0
      %743 = vmatpush2.msra.mxu0 0.0
      %744 = vmatprep.subr.mxu0 0.0
      %745 = vmatpush2.msra.mxu0 0.0
      %746 = vmatprep.subr.mxu0 0.0
      %747 = vmatpush2.msra.mxu0 0.0
      %748 = vmatprep.subr.mxu0 0.0
      %749 = vmatpush2.msra.mxu0 0.0
      %750 = vmatprep.subr.mxu0 0.0
      %751 = vmatpush2.msra.mxu0 0.0
      %752 = vmatprep.mubr.f32.mxu0 0.0
      %753 = vmatmul.mubr.f32.gmra.mxu0 %v677
      %v754 = vpop.f32.mrf.mxu0
      %v755 = vadd.f32 0.0, %v754
      %v756 = vpop.f32.mrf.mxu0
      %757 = vmatprep.mubr.f32.mxu0 0.0
      %758 = vmatmul.mubr.f32.gmra.mxu0 %v680
      %v759 = vpop.f32.mrf.mxu0
      %v760 = vadd.f32 0.0, %v759
      %v761 = vpop.f32.mrf.mxu0
      %762 = vmatprep.mubr.f32.mxu0 0.0
      %763 = vmatmul.mubr.f32.gmra.mxu0 %v683
      %v764 = vpop.f32.mrf.mxu0
      %v765 = vadd.f32 0.0, %v764
      %v766 = vpop.f32.mrf.mxu0
      %767 = vmatprep.mubr.f32.mxu0 0.0
      %768 = vmatmul.mubr.f32.gmra.mxu0 %v686
      %v769 = vpop.f32.mrf.mxu0
      %v770 = vadd.f32 0.0, %v769
      %v771 = vpop.f32.mrf.mxu0
      %772 = vdwg.mxu0
      %v774 = vsel %vm675, %v669, 0
      %v777 = vsel %vm675, %v670, 0
      %v780 = vsel %vm675, %v671, 0
      %v783 = vsel %vm675, %v672, 0
      %785 = vmatprep.subr.mxu0 0.0
      %786 = vmatpush1.msra.mxu0 0.0
      %787 = vmatprep.subr.mxu0 0.0
      %788 = vmatpush1.msra.mxu0 0.0
      %789 = vmatprep.subr.mxu0 0.0
      %790 = vmatpush1.msra.mxu0 0.0
      %791 = vmatprep.subr.mxu0 0.0
      %792 = vmatpush1.msra.mxu0 0.0
      %793 = vmatprep.subr.mxu0 0.0
      %794 = vmatpush1.msra.mxu0 0.0
      %795 = vmatprep.subr.mxu0 0.0
      %796 = vmatpush1.msra.mxu0 0.0
      %797 = vmatprep.subr.mxu0 0.0
      %798 = vmatpush1.msra.mxu0 0.0
      %799 = vmatprep.subr.mxu0 0.0
      %800 = vmatpush1.msra.mxu0 0.0
      %801 = vmatprep.subr.mxu0 0.0
      %802 = vmatpush1.msra.mxu0 0.0
      %803 = vmatprep.subr.mxu0 0.0
      %804 = vmatpush1.msra.mxu0 0.0
      %805 = vmatprep.subr.mxu0 0.0
      %806 = vmatpush1.msra.mxu0 0.0
      %807 = vmatprep.subr.mxu0 0.0
      %808 = vmatpush1.msra.mxu0 0.0
      %809 = vmatprep.subr.mxu0 0.0
      %810 = vmatpush1.msra.mxu0 0.0
      %811 = vmatprep.subr.mxu0 0.0
      %812 = vmatpush1.msra.mxu0 0.0
      %813 = vmatprep.subr.mxu0 0.0
      %814 = vmatpush1.msra.mxu0 0.0
      %815 = vmatprep.subr.mxu0 0.0
      %816 = vmatpush1.msra.mxu0 %v673
      %817 = vmatprep.subr.mxu0 0.0
      %818 = vmatpush2.msra.mxu0 0.0
      %819 = vmatprep.subr.mxu0 0.0
      %820 = vmatpush2.msra.mxu0 0.0
      %821 = vmatprep.subr.mxu0 0.0
      %822 = vmatpush2.msra.mxu0 0.0
      %823 = vmatprep.subr.mxu0 0.0
      %824 = vmatpush2.msra.mxu0 0.0
      %825 = vmatprep.subr.mxu0 0.0
      %826 = vmatpush2.msra.mxu0 0.0
      %827 = vmatprep.subr.mxu0 0.0
      %828 = vmatpush2.msra.mxu0 0.0
      %829 = vmatprep.subr.mxu0 0.0
      %830 = vmatpush2.msra.mxu0 0.0
      %831 = vmatprep.subr.mxu0 0.0
      %832 = vmatpush2.msra.mxu0 0.0
      %833 = vmatprep.subr.mxu0 0.0
      %834 = vmatpush2.msra.mxu0 0.0
      %835 = vmatprep.subr.mxu0 0.0
      %836 = vmatpush2.msra.mxu0 0.0
      %837 = vmatprep.subr.mxu0 0.0
      %838 = vmatpush2.msra.mxu0 0.0
      %839 = vmatprep.subr.mxu0 0.0
      %840 = vmatpush2.msra.mxu0 0.0
      %841 = vmatprep.subr.mxu0 0.0
      %842 = vmatpush2.msra.mxu0 0.0
      %843 = vmatprep.subr.mxu0 0.0
      %844 = vmatpush2.msra.mxu0 0.0
      %845 = vmatprep.subr.mxu0 0.0
      %846 = vmatpush2.msra.mxu0 0.0
      %847 = vmatprep.subr.mxu0 0.0
      %848 = vmatpush2.msra.mxu0 0.0
      %849 = vmatprep.mubr.f32.mxu0 0.0
      %850 = vmatmul.mubr.f32.gmra.mxu0 %v774
      %v851 = vpop.f32.mrf.mxu0
      %v852 = vadd.f32 %v755, %v851
      %v853 = vpop.f32.mrf.mxu0
      %854 = vmatprep.mubr.f32.mxu0 0.0
      %855 = vmatmul.mubr.f32.gmra.mxu0 %v777
      %v856 = vpop.f32.mrf.mxu0
      %v857 = vadd.f32 %v760, %v856
      %v858 = vpop.f32.mrf.mxu0
      %859 = vmatprep.mubr.f32.mxu0 0.0
      %860 = vmatmul.mubr.f32.gmra.mxu0 %v780
      %v861 = vpop.f32.mrf.mxu0
      %v862 = vadd.f32 %v765, %v861
      %v863 = vpop.f32.mrf.mxu0
      %864 = vmatprep.mubr.f32.mxu0 0.0
      %865 = vmatmul.mubr.f32.gmra.mxu0 %v783
      %v866 = vpop.f32.mrf.mxu0
      %v867 = vadd.f32 %v770, %v866
      %v868 = vpop.f32.mrf.mxu0
      %869 = vdwg.mxu0
      %v870 = vrot.slane %v579, 1
      %v871 = vrot.slane %v580, 1
      %v872 = vrot.slane %v581, 1
      %v873 = vrot.slane %v582, 1
      %vm874 = vcmp.lt.s32.totalorder %v584, 7
      %v875 = vsel %vm874, %v872, %v873
      %v876 = vsel %vm874, %v871, %v872
      %v877 = vsel %vm874, %v870, %v871
      %v878 = vsel %vm874, %v873, %v870
      %v879 = vadd.s32 %v632, 1
      %v880 = vadd.s32 %v633, 1
      %v881 = vadd.s32 %v634, 1
      %v882 = vadd.s32 %v635, 1
      %vm883 = vcmp.ge.s32.totalorder %v879, 0
      %vm884 = vcmp.ge.s32.totalorder %v880, 0
      %vm885 = vcmp.ge.s32.totalorder %v881, 0
      %vm886 = vcmp.ge.s32.totalorder %v882, 0
      %vm887 = vcmp.lt.s32.totalorder %v879, 16
      %vm888 = vcmp.lt.s32.totalorder %v880, 16
      %vm889 = vcmp.lt.s32.totalorder %v881, 16
      %vm890 = vcmp.lt.s32.totalorder %v882, 16
      %vm891 = vmand %vm883, %vm887
      %vm892 = vmand %vm884, %vm888
      %vm893 = vmand %vm885, %vm889
      %vm894 = vmand %vm886, %vm890
      %v895 = vsel %vm891, 1, 0
      %v896 = vsel %vm892, 1, 0
      %v897 = vsel %vm893, 1, 0
      %v898 = vsel %vm894, 1, 0
      %vm899 = vcmp.eq.s32.totalorder %v895, 1
      %vm900 = vcmp.eq.s32.totalorder %v896, 1
      %vm901 = vcmp.eq.s32.totalorder %v897, 1
      %vm902 = vcmp.eq.s32.totalorder %v898, 1
      %v903 = vsel %vm899, %v877, 0.0
      %v904 = vsel %vm900, %v876, 0.0
      %v905 = vsel %vm901, %v875, 0.0
      %v906 = vsel %vm902, %v878, 0.0
      %v907 = vld [vmem:[%s4 + $0x10] sm:$0xff]
      %v909 = vsel %vm675, %v903, 0
      %v912 = vsel %vm675, %v904, 0
      %v915 = vsel %vm675, %v905, 0
      %v918 = vsel %vm675, %v906, 0
      %920 = vmatprep.subr.mxu0 0.0
      %921 = vmatpush1.msra.mxu0 0.0
      %922 = vmatprep.subr.mxu0 0.0
      %923 = vmatpush1.msra.mxu0 0.0
      %924 = vmatprep.subr.mxu0 0.0
      %925 = vmatpush1.msra.mxu0 0.0
      %926 = vmatprep.subr.mxu0 0.0
      %927 = vmatpush1.msra.mxu0 0.0
      %928 = vmatprep.subr.mxu0 0.0
      %929 = vmatpush1.msra.mxu0 0.0
      %930 = vmatprep.subr.mxu0 0.0
      %931 = vmatpush1.msra.mxu0 0.0
      %932 = vmatprep.subr.mxu0 0.0
      %933 = vmatpush1.msra.mxu0 0.0
      %934 = vmatprep.subr.mxu0 0.0
      %935 = vmatpush1.msra.mxu0 0.0
      %936 = vmatprep.subr.mxu0 0.0
      %937 = vmatpush1.msra.mxu0 0.0
      %938 = vmatprep.subr.mxu0 0.0
      %939 = vmatpush1.msra.mxu0 0.0
      %940 = vmatprep.subr.mxu0 0.0
      %941 = vmatpush1.msra.mxu0 0.0
      %942 = vmatprep.subr.mxu0 0.0
      %943 = vmatpush1.msra.mxu0 0.0
      %944 = vmatprep.subr.mxu0 0.0
      %945 = vmatpush1.msra.mxu0 0.0
      %946 = vmatprep.subr.mxu0 0.0
      %947 = vmatpush1.msra.mxu0 0.0
      %948 = vmatprep.subr.mxu0 0.0
      %949 = vmatpush1.msra.mxu0 0.0
      %950 = vmatprep.subr.mxu0 0.0
      %951 = vmatpush1.msra.mxu0 %v907
      %952 = vmatprep.subr.mxu0 0.0
      %953 = vmatpush2.msra.mxu0 0.0
      %954 = vmatprep.subr.mxu0 0.0
      %955 = vmatpush2.msra.mxu0 0.0
      %956 = vmatprep.subr.mxu0 0.0
      %957 = vmatpush2.msra.mxu0 0.0
      %958 = vmatprep.subr.mxu0 0.0
      %959 = vmatpush2.msra.mxu0 0.0
      %960 = vmatprep.subr.mxu0 0.0
      %961 = vmatpush2.msra.mxu0 0.0
      %962 = vmatprep.subr.mxu0 0.0
      %963 = vmatpush2.msra.mxu0 0.0
      %964 = vmatprep.subr.mxu0 0.0
      %965 = vmatpush2.msra.mxu0 0.0
      %966 = vmatprep.subr.mxu0 0.0
      %967 = vmatpush2.msra.mxu0 0.0
      %968 = vmatprep.subr.mxu0 0.0
      %969 = vmatpush2.msra.mxu0 0.0
      %970 = vmatprep.subr.mxu0 0.0
      %971 = vmatpush2.msra.mxu0 0.0
      %972 = vmatprep.subr.mxu0 0.0
      %973 = vmatpush2.msra.mxu0 0.0
      %974 = vmatprep.subr.mxu0 0.0
      %975 = vmatpush2.msra.mxu0 0.0
      %976 = vmatprep.subr.mxu0 0.0
      %977 = vmatpush2.msra.mxu0 0.0
      %978 = vmatprep.subr.mxu0 0.0
      %979 = vmatpush2.msra.mxu0 0.0
      %980 = vmatprep.subr.mxu0 0.0
      %981 = vmatpush2.msra.mxu0 0.0
      %982 = vmatprep.subr.mxu0 0.0
      %983 = vmatpush2.msra.mxu0 0.0
      %984 = vmatprep.mubr.f32.mxu0 0.0
      %985 = vmatmul.mubr.f32.gmra.mxu0 %v909
      %v986 = vpop.f32.mrf.mxu0
      %v987 = vadd.f32 0.0, %v986
      %v988 = vpop.f32.mrf.mxu0
      %989 = vmatprep.mubr.f32.mxu0 0.0
      %990 = vmatmul.mubr.f32.gmra.mxu0 %v912
      %v991 = vpop.f32.mrf.mxu0
      %v992 = vadd.f32 0.0, %v991
      %v993 = vpop.f32.mrf.mxu0
      %994 = vmatprep.mubr.f32.mxu0 0.0
      %995 = vmatmul.mubr.f32.gmra.mxu0 %v915
      %v996 = vpop.f32.mrf.mxu0
      %v997 = vadd.f32 0.0, %v996
      %v998 = vpop.f32.mrf.mxu0
      %999 = vmatprep.mubr.f32.mxu0 0.0
      %1000 = vmatmul.mubr.f32.gmra.mxu0 %v918
      %v1001 = vpop.f32.mrf.mxu0
      %v1002 = vadd.f32 0.0, %v1001
      %v1003 = vpop.f32.mrf.mxu0
      %1004 = vdwg.mxu0
      %v1005 = vadd.f32 %v852, %v987
      %v1006 = vadd.f32 %v857, %v992
      %v1007 = vadd.f32 %v862, %v997
      %v1008 = vadd.f32 %v867, %v1002
      %v1009 = vld [vmem:[%s5] sm:$0x1]
      %v1011 = vlaneseq
      %v1012 = vshrl.u32 %v1011, 7
      %v1013 = vsub.s32 0, %v1012
      %v1014 = vrot.slane %v1009, %v1013
      %v1016 = vadd.f32 %v1005, %v1014
      %v1017 = vadd.f32 %v1006, %v1014
      %v1018 = vadd.f32 %v1007, %v1014
      %v1019 = vadd.f32 %v1008, %v1014
      %vm1020 = vcmask 130048
      %v1021 = vsel %vm1020, %v1016, 0.0
      %v1022 = vsel %vm1020, %v1017, 0.0
      %v1023 = vadd.f32 %v1021, %v1022
      %v1024 = vrot.slane %v1023, 4
      %v1025 = vadd.f32 %v1023, %v1024
      %v1026 = vrot.slane %v1025, 2
      %v1027 = vadd.f32 %v1025, %v1026
      %v1028 = vrot.slane %v1027, 1
      %v1029 = vadd.f32 %v1027, %v1028
      %v1030 = vsel %vm1020, %v1018, 0.0
      %v1031 = vsel %vm1020, %v1019, 0.0
      %v1032 = vadd.f32 %v1030, %v1031
      %v1033 = vrot.slane %v1032, 4
      %v1034 = vadd.f32 %v1032, %v1033
      %v1035 = vrot.slane %v1034, 2
      %v1036 = vadd.f32 %v1034, %v1035
      %v1037 = vrot.slane %v1036, 1
      %v1038 = vadd.f32 %v1036, %v1037
      %v1039 = vmul.f32 %v1016, %v1016
      %v1040 = vmul.f32 %v1017, %v1017
      %v1041 = vmul.f32 %v1018, %v1018
      %v1042 = vmul.f32 %v1019, %v1019
      %v1043 = vsel %vm1020, %v1039, 0.0
      %v1044 = vsel %vm1020, %v1040, 0.0
      %v1045 = vadd.f32 %v1043, %v1044
      %v1046 = vrot.slane %v1045, 4
      %v1047 = vadd.f32 %v1045, %v1046
      %v1048 = vrot.slane %v1047, 2
      %v1049 = vadd.f32 %v1047, %v1048
      %v1050 = vrot.slane %v1049, 1
      %v1051 = vadd.f32 %v1049, %v1050
      %v1052 = vsel %vm1020, %v1041, 0.0
      %v1053 = vsel %vm1020, %v1042, 0.0
      %v1054 = vadd.f32 %v1052, %v1053
      %v1055 = vrot.slane %v1054, 4
      %v1056 = vadd.f32 %v1054, %v1055
      %v1057 = vrot.slane %v1056, 2
      %v1058 = vadd.f32 %v1056, %v1057
      %v1059 = vrot.slane %v1058, 1
      %v1060 = vadd.f32 %v1058, %v1059
      %vm1063 = vcmask 1041409
      %v1064 = vsel %vm1063, %v1038, %v1029
      %vm1068 = vcmask 1043459
      %v1069 = vsel %vm1068, %v1060, %v1051
      %vm1071 = vcmask 1041408
      %v1072 = vsel %vm1071, %v1064, %v1069
      %v1073 = vld [vmem:[%s2] sm:$0xff]
      %v1074 = vld [vmem:[%s2 + $0x8] sm:$0xff]
      %v1076 = vsel %vm1020, %v1072, 0
      %1078 = vmatprep.subr.mxu0 0.0
      %1079 = vmatpush1.msra.mxu0 0.0
      %1080 = vmatprep.subr.mxu0 0.0
      %1081 = vmatpush1.msra.mxu0 0.0
      %1082 = vmatprep.subr.mxu0 0.0
      %1083 = vmatpush1.msra.mxu0 0.0
      %1084 = vmatprep.subr.mxu0 0.0
      %1085 = vmatpush1.msra.mxu0 0.0
      %1086 = vmatprep.subr.mxu0 0.0
      %1087 = vmatpush1.msra.mxu0 0.0
      %1088 = vmatprep.subr.mxu0 0.0
      %1089 = vmatpush1.msra.mxu0 0.0
      %1090 = vmatprep.subr.mxu0 0.0
      %1091 = vmatpush1.msra.mxu0 0.0
      %1092 = vmatprep.subr.mxu0 0.0
      %1093 = vmatpush1.msra.mxu0 0.0
      %1094 = vmatprep.subr.mxu0 0.0
      %1095 = vmatpush1.msra.mxu0 0.0
      %1096 = vmatprep.subr.mxu0 0.0
      %1097 = vmatpush1.msra.mxu0 0.0
      %1098 = vmatprep.subr.mxu0 0.0
      %1099 = vmatpush1.msra.mxu0 0.0
      %1100 = vmatprep.subr.mxu0 0.0
      %1101 = vmatpush1.msra.mxu0 0.0
      %1102 = vmatprep.subr.mxu0 0.0
      %1103 = vmatpush1.msra.mxu0 0.0
      %1104 = vmatprep.subr.mxu0 0.0
      %1105 = vmatpush1.msra.mxu0 0.0
      %1106 = vmatprep.subr.mxu0 0.0
      %1107 = vmatpush1.msra.mxu0 %v1074
      %1108 = vmatprep.subr.mxu0 0.0
      %1109 = vmatpush1.msra.mxu0 %v1073
      %1110 = vmatprep.subr.mxu0 0.0
      %1111 = vmatpush2.msra.mxu0 0.0
      %1112 = vmatprep.subr.mxu0 0.0
      %1113 = vmatpush2.msra.mxu0 0.0
      %1114 = vmatprep.subr.mxu0 0.0
      %1115 = vmatpush2.msra.mxu0 0.0
      %1116 = vmatprep.subr.mxu0 0.0
      %1117 = vmatpush2.msra.mxu0 0.0
      %1118 = vmatprep.subr.mxu0 0.0
      %1119 = vmatpush2.msra.mxu0 0.0
      %1120 = vmatprep.subr.mxu0 0.0
      %1121 = vmatpush2.msra.mxu0 0.0
      %1122 = vmatprep.subr.mxu0 0.0
      %1123 = vmatpush2.msra.mxu0 0.0
      %1124 = vmatprep.subr.mxu0 0.0
      %1125 = vmatpush2.msra.mxu0 0.0
      %1126 = vmatprep.subr.mxu0 0.0
      %1127 = vmatpush2.msra.mxu0 0.0
      %1128 = vmatprep.subr.mxu0 0.0
      %1129 = vmatpush2.msra.mxu0 0.0
      %1130 = vmatprep.subr.mxu0 0.0
      %1131 = vmatpush2.msra.mxu0 0.0
      %1132 = vmatprep.subr.mxu0 0.0
      %1133 = vmatpush2.msra.mxu0 0.0
      %1134 = vmatprep.subr.mxu0 0.0
      %1135 = vmatpush2.msra.mxu0 0.0
      %1136 = vmatprep.subr.mxu0 0.0
      %1137 = vmatpush2.msra.mxu0 0.0
      %1138 = vmatprep.subr.mxu0 0.0
      %1139 = vmatpush2.msra.mxu0 0.0
      %1140 = vmatprep.subr.mxu0 0.0
      %1141 = vmatpush2.msra.mxu0 0.0
      %1142 = vmatprep.mubr.f32.mxu0 0.0
      %1143 = vmatmul.mubr.f32.gmra.mxu0 %v1076
      %v1144 = vpop.f32.mrf.mxu0
      %v1145 = vadd.f32 0.0, %v1144
      %v1146 = vpop.f32.mrf.mxu0
      %1147 = vdwg.mxu0
      %v1148 = vmul.f32 %v1145, 0.03125
      %v1149 = vmul.f32 %v1148, %v1148
      %v1151 = vrot.slane %v1149, 6
      %v1153 = vsub.f32 %v1148, %v1151
      %v1154 = vmax.f32 %v1153, 0.0
      %v1155 = vadd.f32 %v1154, 1e-05
      %v1156 = vrsqrt.pop %v1155
      %v1157 = vsub.f32 0.0, %v1148
      %v1159 = vrot.slane %v1156, 2
      %v1161 = vmul.f32 %v1157, %v1159
      %v1163 = vrot.slane %v1161, 6
      %v1165 = vsel %vm1071, %v1159, %v1163
      %v1166 = vld [vmem:[%s3] sm:$0xff]
      %v1168 = vsel %vm675, %v1165, 0
      %1170 = vmatprep.subr.mxu0 0.0
      %1171 = vmatpush1.msra.mxu0 0.0
      %1172 = vmatprep.subr.mxu0 0.0
      %1173 = vmatpush1.msra.mxu0 0.0
      %1174 = vmatprep.subr.mxu0 0.0
      %1175 = vmatpush1.msra.mxu0 0.0
      %1176 = vmatprep.subr.mxu0 0.0
      %1177 = vmatpush1.msra.mxu0 0.0
      %1178 = vmatprep.subr.mxu0 0.0
      %1179 = vmatpush1.msra.mxu0 0.0
      %1180 = vmatprep.subr.mxu0 0.0
      %1181 = vmatpush1.msra.mxu0 0.0
      %1182 = vmatprep.subr.mxu0 0.0
      %1183 = vmatpush1.msra.mxu0 0.0
      %1184 = vmatprep.subr.mxu0 0.0
      %1185 = vmatpush1.msra.mxu0 0.0
      %1186 = vmatprep.subr.mxu0 0.0
      %1187 = vmatpush1.msra.mxu0 0.0
      %1188 = vmatprep.subr.mxu0 0.0
      %1189 = vmatpush1.msra.mxu0 0.0
      %1190 = vmatprep.subr.mxu0 0.0
      %1191 = vmatpush1.msra.mxu0 0.0
      %1192 = vmatprep.subr.mxu0 0.0
      %1193 = vmatpush1.msra.mxu0 0.0
      %1194 = vmatprep.subr.mxu0 0.0
      %1195 = vmatpush1.msra.mxu0 0.0
      %1196 = vmatprep.subr.mxu0 0.0
      %1197 = vmatpush1.msra.mxu0 0.0
      %1198 = vmatprep.subr.mxu0 0.0
      %1199 = vmatpush1.msra.mxu0 0.0
      %1200 = vmatprep.subr.mxu0 0.0
      %1201 = vmatpush1.msra.mxu0 %v1166
      %1202 = vmatprep.subr.mxu0 0.0
      %1203 = vmatpush2.msra.mxu0 0.0
      %1204 = vmatprep.subr.mxu0 0.0
      %1205 = vmatpush2.msra.mxu0 0.0
      %1206 = vmatprep.subr.mxu0 0.0
      %1207 = vmatpush2.msra.mxu0 0.0
      %1208 = vmatprep.subr.mxu0 0.0
      %1209 = vmatpush2.msra.mxu0 0.0
      %1210 = vmatprep.subr.mxu0 0.0
      %1211 = vmatpush2.msra.mxu0 0.0
      %1212 = vmatprep.subr.mxu0 0.0
      %1213 = vmatpush2.msra.mxu0 0.0
      %1214 = vmatprep.subr.mxu0 0.0
      %1215 = vmatpush2.msra.mxu0 0.0
      %1216 = vmatprep.subr.mxu0 0.0
      %1217 = vmatpush2.msra.mxu0 0.0
      %1218 = vmatprep.subr.mxu0 0.0
      %1219 = vmatpush2.msra.mxu0 0.0
      %1220 = vmatprep.subr.mxu0 0.0
      %1221 = vmatpush2.msra.mxu0 0.0
      %1222 = vmatprep.subr.mxu0 0.0
      %1223 = vmatpush2.msra.mxu0 0.0
      %1224 = vmatprep.subr.mxu0 0.0
      %1225 = vmatpush2.msra.mxu0 0.0
      %1226 = vmatprep.subr.mxu0 0.0
      %1227 = vmatpush2.msra.mxu0 0.0
      %1228 = vmatprep.subr.mxu0 0.0
      %1229 = vmatpush2.msra.mxu0 0.0
      %1230 = vmatprep.subr.mxu0 0.0
      %1231 = vmatpush2.msra.mxu0 0.0
      %1232 = vmatprep.subr.mxu0 0.0
      %1233 = vmatpush2.msra.mxu0 0.0
      %1234 = vmatprep.mubr.f32.mxu0 0.0
      %1235 = vmatmul.mubr.f32.gmra.mxu0 %v1168
      %v1236 = vpop.f32.mrf.mxu0
      %v1237 = vadd.f32 0.0, %v1236
      %v1238 = vpop.f32.mrf.mxu0
      %1239 = vdwg.mxu0
      %v1240 = vld [vmem:[%s6] sm:$0x1]
      %v1241 = vld [vmem:[%s7] sm:$0x1]
      %v1243 = vlaneseq
      %v1244 = vshrl.u32 %v1243, 7
      %v1245 = vsub.s32 0, %v1244
      %v1246 = vrot.slane %v1240, %v1245
      %v1248 = vmul.f32 %v1237, %v1246
      %v1251 = vunpack.c.l.s4 1966171168
      %v1252 = vunpack.c.0.s8 %v1251
      %v1253 = vlaneseq
      %v1254 = vshrl.u32 %v1253, 7
      %v1255 = vsub.s32 %v1252, %v1254
      %v1256 = vrot.slane %v1248, %v1255
      %v1257 = vcombine.high %v1256, %v1256
      %v1259 = vunpack.c.l.s4 1966171168
      %v1260 = vunpack.c.0.s8 %v1259
      %v1261 = vlaneseq
      %v1262 = vshrl.u32 %v1261, 7
      %v1263 = vsub.s32 %v1260, %v1262
      %v1264 = vrot.slane %v1256, %v1263
      %v1266 = vunpack.c.l.s4 1966171168
      %v1267 = vunpack.c.0.s8 %v1266
      %v1268 = vlaneseq
      %v1269 = vshrl.u32 %v1268, 7
      %v1270 = vsub.s32 %v1267, %v1269
      %v1271 = vrot.slane %v1257, %v1270
      %v1273 = vlaneseq
      %v1274 = vshrl.u32 %v1273, 7
      %v1275 = vsub.s32 0, %v1274
      %v1276 = vrot.slane %v1241, %v1275
      %v1278 = vadd.f32 %v1248, %v1276
      %v1281 = vunpack.c.l.s4 1966171168
      %v1282 = vunpack.c.0.s8 %v1281
      %v1283 = vlaneseq
      %v1284 = vshrl.u32 %v1283, 7
      %v1285 = vsub.s32 %v1282, %v1284
      %v1286 = vrot.slane %v1278, %v1285
      %v1287 = vcombine.high %v1286, %v1286
      %v1289 = vunpack.c.l.s4 1966171168
      %v1290 = vunpack.c.0.s8 %v1289
      %v1291 = vlaneseq
      %v1292 = vshrl.u32 %v1291, 7
      %v1293 = vsub.s32 %v1290, %v1292
      %v1294 = vrot.slane %v1286, %v1293
      %v1296 = vunpack.c.l.s4 1966171168
      %v1297 = vunpack.c.0.s8 %v1296
      %v1298 = vlaneseq
      %v1299 = vshrl.u32 %v1298, 7
      %v1300 = vsub.s32 %v1297, %v1299
      %v1301 = vrot.slane %v1287, %v1300
      %v1302 = vcombine.high %v1294, %v1294
      %v1303 = vcombine.high %v1301, %v1301
      %v1304 = vlaneseq
      %v1305 = vshrl.u32 %v1304, 7
      %v1306 = vsub.s32 0, %v1305
      %v1307 = vrot.slane %v1264, %v1306
      %v1308 = vlaneseq
      %v1309 = vshrl.u32 %v1308, 7
      %v1310 = vsub.s32 0, %v1309
      %v1311 = vrot.slane %v1271, %v1310
      %v1314 = vmul.f32 %v1016, %v1307
      %v1315 = vmul.f32 %v1017, %v1307
      %v1316 = vmul.f32 %v1018, %v1311
      %v1317 = vmul.f32 %v1019, %v1311
      %v1318 = vlaneseq
      %v1319 = vshrl.u32 %v1318, 7
      %v1320 = vsub.s32 0, %v1319
      %v1321 = vrot.slane %v1302, %v1320
      %v1322 = vlaneseq
      %v1323 = vshrl.u32 %v1322, 7
      %v1324 = vsub.s32 0, %v1323
      %v1325 = vrot.slane %v1303, %v1324
      %v1328 = vadd.f32 %v1314, %v1321
      %v1329 = vadd.f32 %v1315, %v1321
      %v1330 = vadd.f32 %v1316, %v1325
      %v1331 = vadd.f32 %v1317, %v1325
      %v1332 = vmin.f32 %v1328, 20.0
      %v1333 = vmin.f32 %v1329, 20.0
      %v1334 = vmin.f32 %v1330, 20.0
      %v1335 = vmin.f32 %v1331, 20.0
      %v1336 = vmul.f32 %v1332, 1.442695
      %v1337 = vpow.pop %v1336
      %v1338 = vmul.f32 %v1333, 1.442695
      %v1339 = vpow.pop %v1338
      %v1340 = vmul.f32 %v1334, 1.442695
      %v1341 = vpow.pop %v1340
      %v1342 = vmul.f32 %v1335, 1.442695
      %v1343 = vpow.pop %v1342
      %v1344 = vadd.f32 %v1337, 1.0
      %v1345 = vadd.f32 %v1339, 1.0
      %v1346 = vadd.f32 %v1341, 1.0
      %v1347 = vadd.f32 %v1343, 1.0
      %v1348 = vmul.f32 %v1344, %v1344
      %v1349 = vmul.f32 %v1345, %v1345
      %v1350 = vmul.f32 %v1346, %v1346
      %v1351 = vmul.f32 %v1347, %v1347
      %v1352 = vadd.f32 %v1348, 1.0
      %v1353 = vadd.f32 %v1349, 1.0
      %v1354 = vadd.f32 %v1350, 1.0
      %v1355 = vadd.f32 %v1351, 1.0
      %v1356 = vrcp.pop %v1352
      %v1357 = vrcp.pop %v1353
      %v1358 = vrcp.pop %v1354
      %v1359 = vrcp.pop %v1355
      %v1360 = vmul.f32 %v1352, %v1356
      %v1361 = vmul.f32 %v1353, %v1357
      %v1362 = vmul.f32 %v1354, %v1358
      %v1363 = vmul.f32 %v1355, %v1359
      %v1364 = vsub.f32 2.0, %v1360
      %v1365 = vsub.f32 2.0, %v1361
      %v1366 = vsub.f32 2.0, %v1362
      %v1367 = vsub.f32 2.0, %v1363
      %v1368 = vmul.f32 %v1356, %v1364
      %v1369 = vmul.f32 %v1357, %v1365
      %v1370 = vmul.f32 %v1358, %v1366
      %v1371 = vmul.f32 %v1359, %v1367
      %v1372 = vsub.f32 %v1348, 1.0
      %v1373 = vsub.f32 %v1349, 1.0
      %v1374 = vsub.f32 %v1350, 1.0
      %v1375 = vsub.f32 %v1351, 1.0
      %v1376 = vmul.f32 %v1328, %v1372
      %v1377 = vmul.f32 %v1329, %v1373
      %v1378 = vmul.f32 %v1330, %v1374
      %v1379 = vmul.f32 %v1331, %v1375
      %v1380 = vmul.f32 %v1376, %v1368
      %v1381 = vmul.f32 %v1377, %v1369
      %v1382 = vmul.f32 %v1378, %v1370
      %v1383 = vmul.f32 %v1379, %v1371
      %v1384 = vlaneseq
      %v1385 = vand.u32 %v1384, 127
      %s1386 = smul.u32 %s29, 2
      %v1387 = vstv %s1386
      %v1388 = vadd.s32 %v584, %v1387
      %vm1389 = vcmp.eq.s32.totalorder %v1385, %v1388
      %v1390 = vsel %vm1389, 1, 0
      %v1391 = vcvt.s32.f32 %v1390
      %v1392 = vld [vmem:[%s1] sm:$0xf]
      %vm1393 = vcmask 31744
      %v1395 = vsel %vm1393, %v1391, 0
      %vm1397 = vcmask 1043456
      %v1399 = vsel %vm1397, %v1392, 0
      %1401 = vmatprep.subr.mxu0 0.0
      %1402 = vmatpush1.msra.mxu0 0.0
      %1403 = vmatprep.subr.mxu0 0.0
      %1404 = vmatpush1.msra.mxu0 0.0
      %1405 = vmatprep.subr.mxu0 0.0
      %1406 = vmatpush1.msra.mxu0 0.0
      %1407 = vmatprep.subr.mxu0 0.0
      %1408 = vmatpush1.msra.mxu0 0.0
      %1409 = vmatprep.subr.mxu0 0.0
      %1410 = vmatpush1.msra.mxu0 0.0
      %1411 = vmatprep.subr.mxu0 0.0
      %1412 = vmatpush1.msra.mxu0 0.0
      %1413 = vmatprep.subr.mxu0 0.0
      %1414 = vmatpush1.msra.mxu0 0.0
      %1415 = vmatprep.subr.mxu0 0.0
      %1416 = vmatpush1.msra.mxu0 0.0
      %1417 = vmatprep.subr.mxu0 0.0
      %1418 = vmatpush1.msra.mxu0 0.0
      %1419 = vmatprep.subr.mxu0 0.0
      %1420 = vmatpush1.msra.mxu0 0.0
      %1421 = vmatprep.subr.mxu0 0.0
      %1422 = vmatpush1.msra.mxu0 0.0
      %1423 = vmatprep.subr.mxu0 0.0
      %1424 = vmatpush1.msra.mxu0 0.0
      %1425 = vmatprep.subr.mxu0 0.0
      %1426 = vmatpush1.msra.mxu0 0.0
      %1427 = vmatprep.subr.mxu0 0.0
      %1428 = vmatpush1.msra.mxu0 0.0
      %1429 = vmatprep.subr.mxu0 0.0
      %1430 = vmatpush1.msra.mxu0 0.0
      %1431 = vmatprep.subr.mxu0 0.0
      %1432 = vmatpush1.msra.mxu0 %v1399
      %1433 = vmatprep.subr.mxu0 0.0
      %1434 = vmatpush2.msra.mxu0 0.0
      %1435 = vmatprep.subr.mxu0 0.0
      %1436 = vmatpush2.msra.mxu0 0.0
      %1437 = vmatprep.subr.mxu0 0.0
      %1438 = vmatpush2.msra.mxu0 0.0
      %1439 = vmatprep.subr.mxu0 0.0
      %1440 = vmatpush2.msra.mxu0 0.0
      %1441 = vmatprep.subr.mxu0 0.0
      %1442 = vmatpush2.msra.mxu0 0.0
      %1443 = vmatprep.subr.mxu0 0.0
      %1444 = vmatpush2.msra.mxu0 0.0
      %1445 = vmatprep.subr.mxu0 0.0
      %1446 = vmatpush2.msra.mxu0 0.0
      %1447 = vmatprep.subr.mxu0 0.0
      %1448 = vmatpush2.msra.mxu0 0.0
      %1449 = vmatprep.subr.mxu0 0.0
      %1450 = vmatpush2.msra.mxu0 0.0
      %1451 = vmatprep.subr.mxu0 0.0
      %1452 = vmatpush2.msra.mxu0 0.0
      %1453 = vmatprep.subr.mxu0 0.0
      %1454 = vmatpush2.msra.mxu0 0.0
      %1455 = vmatprep.subr.mxu0 0.0
      %1456 = vmatpush2.msra.mxu0 0.0
      %1457 = vmatprep.subr.mxu0 0.0
      %1458 = vmatpush2.msra.mxu0 0.0
      %1459 = vmatprep.subr.mxu0 0.0
      %1460 = vmatpush2.msra.mxu0 0.0
      %1461 = vmatprep.subr.mxu0 0.0
      %1462 = vmatpush2.msra.mxu0 0.0
      %1463 = vmatprep.subr.mxu0 0.0
      %1464 = vmatpush2.msra.mxu0 0.0
      %1465 = vmatprep.mubr.f32.mxu0 0.0
      %1466 = vmatmul.mubr.f32.gmra.mxu0 %v1395
      %v1467 = vpop.f32.mrf.mxu0
      %v1468 = vadd.f32 0.0, %v1467
      %v1469 = vpop.f32.mrf.mxu0
      %1470 = vdwg.mxu0
      %v1471 = vmin.f32 %v1468, 20.0
      %v1472 = vmul.f32 %v1471, 1.442695
      %v1473 = vpow.pop %v1472
      %v1474 = vadd.f32 %v1473, 1.0
      %v1475 = vmul.f32 %v1474, %v1474
      %v1476 = vadd.f32 %v1475, 1.0
      %v1477 = vrcp.pop %v1476
      %v1478 = vmul.f32 %v1476, %v1477
      %v1479 = vsub.f32 2.0, %v1478
      %v1480 = vmul.f32 %v1477, %v1479
      %v1481 = vsub.f32 %v1475, 1.0
      %v1482 = vmul.f32 %v1468, %v1481
      %v1483 = vmul.f32 %v1482, %v1480
      %v1484 = vld [vmem:[%s12] sm:$0xff]
      %v1485 = vld [vmem:[%s12 + $0x8] sm:$0xf]
      %v1486 = vld [vmem:[%s14] sm:$0xff]
      %v1487 = vld [vmem:[%s14 + $0x8] sm:$0xf]
      %v1488 = vld [vmem:[%s13] sm:$0x1]
      %v1490 = vlaneseq
      %v1491 = vshrl.u32 %v1490, 7
      %v1492 = vsub.s32 0, %v1491
      %v1493 = vrot.slane %v1488, %v1492
      %vm1495 = vcmask 97280
      %v1497 = vsel %vm1495, %v1483, 0
      %v1500 = vsel %vm1397, %v1485, 0
      %1502 = vmatprep.subr.mxu0 0.0
      %1503 = vmatpush1.msra.mxu0 0.0
      %1504 = vmatprep.subr.mxu0 0.0
      %1505 = vmatpush1.msra.mxu0 0.0
      %1506 = vmatprep.subr.mxu0 0.0
      %1507 = vmatpush1.msra.mxu0 0.0
      %1508 = vmatprep.subr.mxu0 0.0
      %1509 = vmatpush1.msra.mxu0 0.0
      %1510 = vmatprep.subr.mxu0 0.0
      %1511 = vmatpush1.msra.mxu0 0.0
      %1512 = vmatprep.subr.mxu0 0.0
      %1513 = vmatpush1.msra.mxu0 0.0
      %1514 = vmatprep.subr.mxu0 0.0
      %1515 = vmatpush1.msra.mxu0 0.0
      %1516 = vmatprep.subr.mxu0 0.0
      %1517 = vmatpush1.msra.mxu0 0.0
      %1518 = vmatprep.subr.mxu0 0.0
      %1519 = vmatpush1.msra.mxu0 0.0
      %1520 = vmatprep.subr.mxu0 0.0
      %1521 = vmatpush1.msra.mxu0 0.0
      %1522 = vmatprep.subr.mxu0 0.0
      %1523 = vmatpush1.msra.mxu0 0.0
      %1524 = vmatprep.subr.mxu0 0.0
      %1525 = vmatpush1.msra.mxu0 0.0
      %1526 = vmatprep.subr.mxu0 0.0
      %1527 = vmatpush1.msra.mxu0 0.0
      %1528 = vmatprep.subr.mxu0 0.0
      %1529 = vmatpush1.msra.mxu0 0.0
      %1530 = vmatprep.subr.mxu0 0.0
      %1531 = vmatpush1.msra.mxu0 %v1500
      %1532 = vmatprep.subr.mxu0 0.0
      %1533 = vmatpush1.msra.mxu0 %v1484
      %1534 = vmatprep.subr.mxu0 0.0
      %1535 = vmatpush2.msra.mxu0 0.0
      %1536 = vmatprep.subr.mxu0 0.0
      %1537 = vmatpush2.msra.mxu0 0.0
      %1538 = vmatprep.subr.mxu0 0.0
      %1539 = vmatpush2.msra.mxu0 0.0
      %1540 = vmatprep.subr.mxu0 0.0
      %1541 = vmatpush2.msra.mxu0 0.0
      %1542 = vmatprep.subr.mxu0 0.0
      %1543 = vmatpush2.msra.mxu0 0.0
      %1544 = vmatprep.subr.mxu0 0.0
      %1545 = vmatpush2.msra.mxu0 0.0
      %1546 = vmatprep.subr.mxu0 0.0
      %1547 = vmatpush2.msra.mxu0 0.0
      %1548 = vmatprep.subr.mxu0 0.0
      %1549 = vmatpush2.msra.mxu0 0.0
      %1550 = vmatprep.subr.mxu0 0.0
      %1551 = vmatpush2.msra.mxu0 0.0
      %1552 = vmatprep.subr.mxu0 0.0
      %1553 = vmatpush2.msra.mxu0 0.0
      %1554 = vmatprep.subr.mxu0 0.0
      %1555 = vmatpush2.msra.mxu0 0.0
      %1556 = vmatprep.subr.mxu0 0.0
      %1557 = vmatpush2.msra.mxu0 0.0
      %1558 = vmatprep.subr.mxu0 0.0
      %1559 = vmatpush2.msra.mxu0 0.0
      %1560 = vmatprep.subr.mxu0 0.0
      %1561 = vmatpush2.msra.mxu0 0.0
      %1562 = vmatprep.subr.mxu0 0.0
      %1563 = vmatpush2.msra.mxu0 0.0
      %1564 = vmatprep.subr.mxu0 0.0
      %1565 = vmatpush2.msra.mxu0 0.0
      %1566 = vmatprep.mubr.f32.mxu0 0.0
      %1567 = vmatmul.mubr.f32.gmra.mxu0 %v1497
      %v1568 = vpop.f32.mrf.mxu0
      %v1569 = vadd.f32 %v1493, %v1568
      %v1570 = vpop.f32.mrf.mxu0
      %1571 = vdwg.mxu0
      %v1572 = vld [vmem:[%s15] sm:$0x1]
      %v1574 = vlaneseq
      %v1575 = vshrl.u32 %v1574, 7
      %v1576 = vsub.s32 0, %v1575
      %v1577 = vrot.slane %v1572, %v1576
      %v1580 = vsel %vm1397, %v1487, 0
      %1582 = vmatprep.subr.mxu0 0.0
      %1583 = vmatpush1.msra.mxu0 0.0
      %1584 = vmatprep.subr.mxu0 0.0
      %1585 = vmatpush1.msra.mxu0 0.0
      %1586 = vmatprep.subr.mxu0 0.0
      %1587 = vmatpush1.msra.mxu0 0.0
      %1588 = vmatprep.subr.mxu0 0.0
      %1589 = vmatpush1.msra.mxu0 0.0
      %1590 = vmatprep.subr.mxu0 0.0
      %1591 = vmatpush1.msra.mxu0 0.0
      %1592 = vmatprep.subr.mxu0 0.0
      %1593 = vmatpush1.msra.mxu0 0.0
      %1594 = vmatprep.subr.mxu0 0.0
      %1595 = vmatpush1.msra.mxu0 0.0
      %1596 = vmatprep.subr.mxu0 0.0
      %1597 = vmatpush1.msra.mxu0 0.0
      %1598 = vmatprep.subr.mxu0 0.0
      %1599 = vmatpush1.msra.mxu0 0.0
      %1600 = vmatprep.subr.mxu0 0.0
      %1601 = vmatpush1.msra.mxu0 0.0
      %1602 = vmatprep.subr.mxu0 0.0
      %1603 = vmatpush1.msra.mxu0 0.0
      %1604 = vmatprep.subr.mxu0 0.0
      %1605 = vmatpush1.msra.mxu0 0.0
      %1606 = vmatprep.subr.mxu0 0.0
      %1607 = vmatpush1.msra.mxu0 0.0
      %1608 = vmatprep.subr.mxu0 0.0
      %1609 = vmatpush1.msra.mxu0 0.0
      %1610 = vmatprep.subr.mxu0 0.0
      %1611 = vmatpush1.msra.mxu0 %v1580
      %1612 = vmatprep.subr.mxu0 0.0
      %1613 = vmatpush1.msra.mxu0 %v1486
      %1614 = vmatprep.subr.mxu0 0.0
      %1615 = vmatpush2.msra.mxu0 0.0
      %1616 = vmatprep.subr.mxu0 0.0
      %1617 = vmatpush2.msra.mxu0 0.0
      %1618 = vmatprep.subr.mxu0 0.0
      %1619 = vmatpush2.msra.mxu0 0.0
      %1620 = vmatprep.subr.mxu0 0.0
      %1621 = vmatpush2.msra.mxu0 0.0
      %1622 = vmatprep.subr.mxu0 0.0
      %1623 = vmatpush2.msra.mxu0 0.0
      %1624 = vmatprep.subr.mxu0 0.0
      %1625 = vmatpush2.msra.mxu0 0.0
      %1626 = vmatprep.subr.mxu0 0.0
      %1627 = vmatpush2.msra.mxu0 0.0
      %1628 = vmatprep.subr.mxu0 0.0
      %1629 = vmatpush2.msra.mxu0 0.0
      %1630 = vmatprep.subr.mxu0 0.0
      %1631 = vmatpush2.msra.mxu0 0.0
      %1632 = vmatprep.subr.mxu0 0.0
      %1633 = vmatpush2.msra.mxu0 0.0
      %1634 = vmatprep.subr.mxu0 0.0
      %1635 = vmatpush2.msra.mxu0 0.0
      %1636 = vmatprep.subr.mxu0 0.0
      %1637 = vmatpush2.msra.mxu0 0.0
      %1638 = vmatprep.subr.mxu0 0.0
      %1639 = vmatpush2.msra.mxu0 0.0
      %1640 = vmatprep.subr.mxu0 0.0
      %1641 = vmatpush2.msra.mxu0 0.0
      %1642 = vmatprep.subr.mxu0 0.0
      %1643 = vmatpush2.msra.mxu0 0.0
      %1644 = vmatprep.subr.mxu0 0.0
      %1645 = vmatpush2.msra.mxu0 0.0
      %1646 = vmatprep.mubr.f32.mxu0 0.0
      %1647 = vmatmul.mubr.f32.gmra.mxu0 %v1497
      %v1648 = vpop.f32.mrf.mxu0
      %v1649 = vadd.f32 %v1577, %v1648
      %v1650 = vpop.f32.mrf.mxu0
      %1651 = vdwg.mxu0
      %v1654 = vunpack.c.l.s4 1966171168
      %v1655 = vunpack.c.0.s8 %v1654
      %v1656 = vlaneseq
      %v1657 = vshrl.u32 %v1656, 7
      %v1658 = vsub.s32 %v1655, %v1657
      %v1659 = vrot.slane %v1569, %v1658
      %v1660 = vcombine.high %v1659, %v1659
      %v1662 = vunpack.c.l.s4 1966171168
      %v1663 = vunpack.c.0.s8 %v1662
      %v1664 = vlaneseq
      %v1665 = vshrl.u32 %v1664, 7
      %v1666 = vsub.s32 %v1663, %v1665
      %v1667 = vrot.slane %v1659, %v1666
      %v1669 = vunpack.c.l.s4 1966171168
      %v1670 = vunpack.c.0.s8 %v1669
      %v1671 = vlaneseq
      %v1672 = vshrl.u32 %v1671, 7
      %v1673 = vsub.s32 %v1670, %v1672
      %v1674 = vrot.slane %v1660, %v1673
      %v1675 = vlaneseq
      %v1676 = vshrl.u32 %v1675, 7
      %v1677 = vsub.s32 0, %v1676
      %v1678 = vrot.slane %v1667, %v1677
      %v1679 = vlaneseq
      %v1680 = vshrl.u32 %v1679, 7
      %v1681 = vsub.s32 0, %v1680
      %v1682 = vrot.slane %v1674, %v1681
      %v1685 = vmul.f32 %v1380, %v1678
      %v1686 = vmul.f32 %v1381, %v1678
      %v1687 = vmul.f32 %v1382, %v1682
      %v1688 = vmul.f32 %v1383, %v1682
      %v1691 = vunpack.c.l.s4 1966171168
      %v1692 = vunpack.c.0.s8 %v1691
      %v1693 = vlaneseq
      %v1694 = vshrl.u32 %v1693, 7
      %v1695 = vsub.s32 %v1692, %v1694
      %v1696 = vrot.slane %v1649, %v1695
      %v1697 = vcombine.high %v1696, %v1696
      %v1699 = vunpack.c.l.s4 1966171168
      %v1700 = vunpack.c.0.s8 %v1699
      %v1701 = vlaneseq
      %v1702 = vshrl.u32 %v1701, 7
      %v1703 = vsub.s32 %v1700, %v1702
      %v1704 = vrot.slane %v1696, %v1703
      %v1706 = vunpack.c.l.s4 1966171168
      %v1707 = vunpack.c.0.s8 %v1706
      %v1708 = vlaneseq
      %v1709 = vshrl.u32 %v1708, 7
      %v1710 = vsub.s32 %v1707, %v1709
      %v1711 = vrot.slane %v1697, %v1710
      %v1712 = vlaneseq
      %v1713 = vshrl.u32 %v1712, 7
      %v1714 = vsub.s32 0, %v1713
      %v1715 = vrot.slane %v1704, %v1714
      %v1716 = vlaneseq
      %v1717 = vshrl.u32 %v1716, 7
      %v1718 = vsub.s32 0, %v1717
      %v1719 = vrot.slane %v1711, %v1718
      %v1722 = vadd.f32 %v1685, %v1715
      %v1723 = vadd.f32 %v1686, %v1715
      %v1724 = vadd.f32 %v1687, %v1719
      %v1725 = vadd.f32 %v1688, %v1719
      %v1726 = vrot.slane %v1722, 7
      %v1727 = vrot.slane %v1723, 7
      %v1728 = vrot.slane %v1724, 7
      %v1729 = vrot.slane %v1725, 7
      %v1730 = vsel %vm640, %v1728, %v1729
      %v1731 = vsel %vm640, %v1727, %v1728
      %v1732 = vsel %vm640, %v1726, %v1727
      %v1733 = vsel %vm640, %v1729, %v1726
      %v1734 = vsel %vm665, %v1733, 0.0
      %v1735 = vsel %vm666, %v1732, 0.0
      %v1736 = vsel %vm667, %v1731, 0.0
      %v1737 = vsel %vm668, %v1730, 0.0
      %v1738 = vld [vmem:[%s8] sm:$0xff]
      %v1739 = vld [vmem:[%s8 + $0x8] sm:$0xff]
      %v1740 = vld [vmem:[%s8 + $0x10] sm:$0xff]
      %v1741 = vld [vmem:[%s8 + $0x18] sm:$0xff]
      %v1743 = vsel %vm1020, %v1722, 0
      %v1746 = vsel %vm1020, %v1723, 0
      %v1749 = vsel %vm1020, %v1724, 0
      %v1752 = vsel %vm1020, %v1725, 0
      %1754 = vmatprep.subr.mxu0 0.0
      %1755 = vmatpush1.msra.mxu0 0.0
      %1756 = vmatprep.subr.mxu0 0.0
      %1757 = vmatpush1.msra.mxu0 0.0
      %1758 = vmatprep.subr.mxu0 0.0
      %1759 = vmatpush1.msra.mxu0 0.0
      %1760 = vmatprep.subr.mxu0 0.0
      %1761 = vmatpush1.msra.mxu0 0.0
      %1762 = vmatprep.subr.mxu0 0.0
      %1763 = vmatpush1.msra.mxu0 0.0
      %1764 = vmatprep.subr.mxu0 0.0
      %1765 = vmatpush1.msra.mxu0 0.0
      %1766 = vmatprep.subr.mxu0 0.0
      %1767 = vmatpush1.msra.mxu0 0.0
      %1768 = vmatprep.subr.mxu0 0.0
      %1769 = vmatpush1.msra.mxu0 0.0
      %1770 = vmatprep.subr.mxu0 0.0
      %1771 = vmatpush1.msra.mxu0 0.0
      %1772 = vmatprep.subr.mxu0 0.0
      %1773 = vmatpush1.msra.mxu0 0.0
      %1774 = vmatprep.subr.mxu0 0.0
      %1775 = vmatpush1.msra.mxu0 0.0
      %1776 = vmatprep.subr.mxu0 0.0
      %1777 = vmatpush1.msra.mxu0 0.0
      %1778 = vmatprep.subr.mxu0 0.0
      %1779 = vmatpush1.msra.mxu0 0.0
      %1780 = vmatprep.subr.mxu0 0.0
      %1781 = vmatpush1.msra.mxu0 0.0
      %1782 = vmatprep.subr.mxu0 0.0
      %1783 = vmatpush1.msra.mxu0 %v1741
      %1784 = vmatprep.subr.mxu0 0.0
      %1785 = vmatpush1.msra.mxu0 %v1740
      %1786 = vmatprep.subr.mxu0 0.0
      %1787 = vmatpush2.msra.mxu0 0.0
      %1788 = vmatprep.subr.mxu0 0.0
      %1789 = vmatpush2.msra.mxu0 0.0
      %1790 = vmatprep.subr.mxu0 0.0
      %1791 = vmatpush2.msra.mxu0 0.0
      %1792 = vmatprep.subr.mxu0 0.0
      %1793 = vmatpush2.msra.mxu0 0.0
      %1794 = vmatprep.subr.mxu0 0.0
      %1795 = vmatpush2.msra.mxu0 0.0
      %1796 = vmatprep.subr.mxu0 0.0
      %1797 = vmatpush2.msra.mxu0 0.0
      %1798 = vmatprep.subr.mxu0 0.0
      %1799 = vmatpush2.msra.mxu0 0.0
      %1800 = vmatprep.subr.mxu0 0.0
      %1801 = vmatpush2.msra.mxu0 0.0
      %1802 = vmatprep.subr.mxu0 0.0
      %1803 = vmatpush2.msra.mxu0 0.0
      %1804 = vmatprep.subr.mxu0 0.0
      %1805 = vmatpush2.msra.mxu0 0.0
      %1806 = vmatprep.subr.mxu0 0.0
      %1807 = vmatpush2.msra.mxu0 0.0
      %1808 = vmatprep.subr.mxu0 0.0
      %1809 = vmatpush2.msra.mxu0 0.0
      %1810 = vmatprep.subr.mxu0 0.0
      %1811 = vmatpush2.msra.mxu0 0.0
      %1812 = vmatprep.subr.mxu0 0.0
      %1813 = vmatpush2.msra.mxu0 0.0
      %1814 = vmatprep.subr.mxu0 0.0
      %1815 = vmatpush2.msra.mxu0 0.0
      %1816 = vmatprep.subr.mxu0 0.0
      %1817 = vmatpush2.msra.mxu0 0.0
      %1818 = vmatprep.mubr.f32.mxu0 0.0
      %1819 = vmatmul.mubr.f32.gmra.mxu0 %v1743
      %v1820 = vpop.f32.mrf.mxu0
      %v1821 = vadd.f32 0.0, %v1820
      %v1822 = vpop.f32.mrf.mxu0
      %1823 = vmatprep.mubr.f32.mxu0 0.0
      %1824 = vmatmul.mubr.f32.gmra.mxu0 %v1746
      %v1825 = vpop.f32.mrf.mxu0
      %v1826 = vadd.f32 0.0, %v1825
      %v1827 = vpop.f32.mrf.mxu0
      %1828 = vmatprep.mubr.f32.mxu0 0.0
      %1829 = vmatmul.mubr.f32.gmra.mxu0 %v1749
      %v1830 = vpop.f32.mrf.mxu0
      %v1831 = vadd.f32 0.0, %v1830
      %v1832 = vpop.f32.mrf.mxu0
      %1833 = vmatprep.mubr.f32.mxu0 0.0
      %1834 = vmatmul.mubr.f32.gmra.mxu0 %v1752
      %v1835 = vpop.f32.mrf.mxu0
      %v1836 = vadd.f32 0.0, %v1835
      %v1837 = vpop.f32.mrf.mxu0
      %1838 = vdwg.mxu0
      %v1840 = vsel %vm1020, %v1734, 0
      %v1843 = vsel %vm1020, %v1735, 0
      %v1846 = vsel %vm1020, %v1736, 0
      %v1849 = vsel %vm1020, %v1737, 0
      %1851 = vmatprep.subr.mxu0 0.0
      %1852 = vmatpush1.msra.mxu0 0.0
      %1853 = vmatprep.subr.mxu0 0.0
      %1854 = vmatpush1.msra.mxu0 0.0
      %1855 = vmatprep.subr.mxu0 0.0
      %1856 = vmatpush1.msra.mxu0 0.0
      %1857 = vmatprep.subr.mxu0 0.0
      %1858 = vmatpush1.msra.mxu0 0.0
      %1859 = vmatprep.subr.mxu0 0.0
      %1860 = vmatpush1.msra.mxu0 0.0
      %1861 = vmatprep.subr.mxu0 0.0
      %1862 = vmatpush1.msra.mxu0 0.0
      %1863 = vmatprep.subr.mxu0 0.0
      %1864 = vmatpush1.msra.mxu0 0.0
      %1865 = vmatprep.subr.mxu0 0.0
      %1866 = vmatpush1.msra.mxu0 0.0
      %1867 = vmatprep.subr.mxu0 0.0
      %1868 = vmatpush1.msra.mxu0 0.0
      %1869 = vmatprep.subr.mxu0 0.0
      %1870 = vmatpush1.msra.mxu0 0.0
      %1871 = vmatprep.subr.mxu0 0.0
      %1872 = vmatpush1.msra.mxu0 0.0
      %1873 = vmatprep.subr.mxu0 0.0
      %1874 = vmatpush1.msra.mxu0 0.0
      %1875 = vmatprep.subr.mxu0 0.0
      %1876 = vmatpush1.msra.mxu0 0.0
      %1877 = vmatprep.subr.mxu0 0.0
      %1878 = vmatpush1.msra.mxu0 0.0
      %1879 = vmatprep.subr.mxu0 0.0
      %1880 = vmatpush1.msra.mxu0 %v1739
      %1881 = vmatprep.subr.mxu0 0.0
      %1882 = vmatpush1.msra.mxu0 %v1738
      %1883 = vmatprep.subr.mxu0 0.0
      %1884 = vmatpush2.msra.mxu0 0.0
      %1885 = vmatprep.subr.mxu0 0.0
      %1886 = vmatpush2.msra.mxu0 0.0
      %1887 = vmatprep.subr.mxu0 0.0
      %1888 = vmatpush2.msra.mxu0 0.0
      %1889 = vmatprep.subr.mxu0 0.0
      %1890 = vmatpush2.msra.mxu0 0.0
      %1891 = vmatprep.subr.mxu0 0.0
      %1892 = vmatpush2.msra.mxu0 0.0
      %1893 = vmatprep.subr.mxu0 0.0
      %1894 = vmatpush2.msra.mxu0 0.0
      %1895 = vmatprep.subr.mxu0 0.0
      %1896 = vmatpush2.msra.mxu0 0.0
      %1897 = vmatprep.subr.mxu0 0.0
      %1898 = vmatpush2.msra.mxu0 0.0
      %1899 = vmatprep.subr.mxu0 0.0
      %1900 = vmatpush2.msra.mxu0 0.0
      %1901 = vmatprep.subr.mxu0 0.0
      %1902 = vmatpush2.msra.mxu0 0.0
      %1903 = vmatprep.subr.mxu0 0.0
      %1904 = vmatpush2.msra.mxu0 0.0
      %1905 = vmatprep.subr.mxu0 0.0
      %1906 = vmatpush2.msra.mxu0 0.0
      %1907 = vmatprep.subr.mxu0 0.0
      %1908 = vmatpush2.msra.mxu0 0.0
      %1909 = vmatprep.subr.mxu0 0.0
      %1910 = vmatpush2.msra.mxu0 0.0
      %1911 = vmatprep.subr.mxu0 0.0
      %1912 = vmatpush2.msra.mxu0 0.0
      %1913 = vmatprep.subr.mxu0 0.0
      %1914 = vmatpush2.msra.mxu0 0.0
      %1915 = vmatprep.mubr.f32.mxu0 0.0
      %1916 = vmatmul.mubr.f32.gmra.mxu0 %v1840
      %v1917 = vpop.f32.mrf.mxu0
      %v1918 = vadd.f32 %v1821, %v1917
      %v1919 = vpop.f32.mrf.mxu0
      %1920 = vmatprep.mubr.f32.mxu0 0.0
      %1921 = vmatmul.mubr.f32.gmra.mxu0 %v1843
      %v1922 = vpop.f32.mrf.mxu0
      %v1923 = vadd.f32 %v1826, %v1922
      %v1924 = vpop.f32.mrf.mxu0
      %1925 = vmatprep.mubr.f32.mxu0 0.0
      %1926 = vmatmul.mubr.f32.gmra.mxu0 %v1846
      %v1927 = vpop.f32.mrf.mxu0
      %v1928 = vadd.f32 %v1831, %v1927
      %v1929 = vpop.f32.mrf.mxu0
      %1930 = vmatprep.mubr.f32.mxu0 0.0
      %1931 = vmatmul.mubr.f32.gmra.mxu0 %v1849
      %v1932 = vpop.f32.mrf.mxu0
      %v1933 = vadd.f32 %v1836, %v1932
      %v1934 = vpop.f32.mrf.mxu0
      %1935 = vdwg.mxu0
      %v1936 = vrot.slane %v1722, 1
      %v1937 = vrot.slane %v1723, 1
      %v1938 = vrot.slane %v1724, 1
      %v1939 = vrot.slane %v1725, 1
      %v1940 = vsel %vm874, %v1938, %v1939
      %v1941 = vsel %vm874, %v1937, %v1938
      %v1942 = vsel %vm874, %v1936, %v1937
      %v1943 = vsel %vm874, %v1939, %v1936
      %v1944 = vsel %vm899, %v1942, 0.0
      %v1945 = vsel %vm900, %v1941, 0.0
      %v1946 = vsel %vm901, %v1940, 0.0
      %v1947 = vsel %vm902, %v1943, 0.0
      %v1948 = vld [vmem:[%s8 + $0x20] sm:$0xff]
      %v1949 = vld [vmem:[%s8 + $0x28] sm:$0xff]
      %v1951 = vsel %vm1020, %v1944, 0
      %v1954 = vsel %vm1020, %v1945, 0
      %v1957 = vsel %vm1020, %v1946, 0
      %v1960 = vsel %vm1020, %v1947, 0
      %1962 = vmatprep.subr.mxu0 0.0
      %1963 = vmatpush1.msra.mxu0 0.0
      %1964 = vmatprep.subr.mxu0 0.0
      %1965 = vmatpush1.msra.mxu0 0.0
      %1966 = vmatprep.subr.mxu0 0.0
      %1967 = vmatpush1.msra.mxu0 0.0
      %1968 = vmatprep.subr.mxu0 0.0
      %1969 = vmatpush1.msra.mxu0 0.0
      %1970 = vmatprep.subr.mxu0 0.0
      %1971 = vmatpush1.msra.mxu0 0.0
      %1972 = vmatprep.subr.mxu0 0.0
      %1973 = vmatpush1.msra.mxu0 0.0
      %1974 = vmatprep.subr.mxu0 0.0
      %1975 = vmatpush1.msra.mxu0 0.0
      %1976 = vmatprep.subr.mxu0 0.0
      %1977 = vmatpush1.msra.mxu0 0.0
      %1978 = vmatprep.subr.mxu0 0.0
      %1979 = vmatpush1.msra.mxu0 0.0
      %1980 = vmatprep.subr.mxu0 0.0
      %1981 = vmatpush1.msra.mxu0 0.0
      %1982 = vmatprep.subr.mxu0 0.0
      %1983 = vmatpush1.msra.mxu0 0.0
      %1984 = vmatprep.subr.mxu0 0.0
      %1985 = vmatpush1.msra.mxu0 0.0
      %1986 = vmatprep.subr.mxu0 0.0
      %1987 = vmatpush1.msra.mxu0 0.0
      %1988 = vmatprep.subr.mxu0 0.0
      %1989 = vmatpush1.msra.mxu0 0.0
      %1990 = vmatprep.subr.mxu0 0.0
      %1991 = vmatpush1.msra.mxu0 %v1949
      %1992 = vmatprep.subr.mxu0 0.0
      %1993 = vmatpush1.msra.mxu0 %v1948
      %1994 = vmatprep.subr.mxu0 0.0
      %1995 = vmatpush2.msra.mxu0 0.0
      %1996 = vmatprep.subr.mxu0 0.0
      %1997 = vmatpush2.msra.mxu0 0.0
      %1998 = vmatprep.subr.mxu0 0.0
      %1999 = vmatpush2.msra.mxu0 0.0
      %2000 = vmatprep.subr.mxu0 0.0
      %2001 = vmatpush2.msra.mxu0 0.0
      %2002 = vmatprep.subr.mxu0 0.0
      %2003 = vmatpush2.msra.mxu0 0.0
      %2004 = vmatprep.subr.mxu0 0.0
      %2005 = vmatpush2.msra.mxu0 0.0
      %2006 = vmatprep.subr.mxu0 0.0
      %2007 = vmatpush2.msra.mxu0 0.0
      %2008 = vmatprep.subr.mxu0 0.0
      %2009 = vmatpush2.msra.mxu0 0.0
      %2010 = vmatprep.subr.mxu0 0.0
      %2011 = vmatpush2.msra.mxu0 0.0
      %2012 = vmatprep.subr.mxu0 0.0
      %2013 = vmatpush2.msra.mxu0 0.0
      %2014 = vmatprep.subr.mxu0 0.0
      %2015 = vmatpush2.msra.mxu0 0.0
      %2016 = vmatprep.subr.mxu0 0.0
      %2017 = vmatpush2.msra.mxu0 0.0
      %2018 = vmatprep.subr.mxu0 0.0
      %2019 = vmatpush2.msra.mxu0 0.0
      %2020 = vmatprep.subr.mxu0 0.0
      %2021 = vmatpush2.msra.mxu0 0.0
      %2022 = vmatprep.subr.mxu0 0.0
      %2023 = vmatpush2.msra.mxu0 0.0
      %2024 = vmatprep.subr.mxu0 0.0
      %2025 = vmatpush2.msra.mxu0 0.0
      %2026 = vmatprep.mubr.f32.mxu0 0.0
      %2027 = vmatmul.mubr.f32.gmra.mxu0 %v1951
      %v2028 = vpop.f32.mrf.mxu0
      %v2029 = vadd.f32 0.0, %v2028
      %v2030 = vpop.f32.mrf.mxu0
      %2031 = vmatprep.mubr.f32.mxu0 0.0
      %2032 = vmatmul.mubr.f32.gmra.mxu0 %v1954
      %v2033 = vpop.f32.mrf.mxu0
      %v2034 = vadd.f32 0.0, %v2033
      %v2035 = vpop.f32.mrf.mxu0
      %2036 = vmatprep.mubr.f32.mxu0 0.0
      %2037 = vmatmul.mubr.f32.gmra.mxu0 %v1957
      %v2038 = vpop.f32.mrf.mxu0
      %v2039 = vadd.f32 0.0, %v2038
      %v2040 = vpop.f32.mrf.mxu0
      %2041 = vmatprep.mubr.f32.mxu0 0.0
      %2042 = vmatmul.mubr.f32.gmra.mxu0 %v1960
      %v2043 = vpop.f32.mrf.mxu0
      %v2044 = vadd.f32 0.0, %v2043
      %v2045 = vpop.f32.mrf.mxu0
      %2046 = vdwg.mxu0
      %v2047 = vadd.f32 %v1918, %v2029
      %v2048 = vadd.f32 %v1923, %v2034
      %v2049 = vadd.f32 %v1928, %v2039
      %v2050 = vadd.f32 %v1933, %v2044
      %v2051 = vld [vmem:[%s9] sm:$0x1]
      %v2053 = vlaneseq
      %v2054 = vshrl.u32 %v2053, 7
      %v2055 = vsub.s32 0, %v2054
      %v2056 = vrot.slane %v2051, %v2055
      %v2058 = vadd.f32 %v2047, %v2056
      %v2059 = vadd.f32 %v2048, %v2056
      %v2060 = vadd.f32 %v2049, %v2056
      %v2061 = vadd.f32 %v2050, %v2056
      %v2062 = vsel %vm1020, %v2058, 0.0
      %v2063 = vsel %vm1020, %v2059, 0.0
      %v2064 = vadd.f32 %v2062, %v2063
      %v2065 = vrot.slane %v2064, 4
      %v2066 = vadd.f32 %v2064, %v2065
      %v2067 = vrot.slane %v2066, 2
      %v2068 = vadd.f32 %v2066, %v2067
      %v2069 = vrot.slane %v2068, 1
      %v2070 = vadd.f32 %v2068, %v2069
      %v2071 = vsel %vm1020, %v2060, 0.0
      %v2072 = vsel %vm1020, %v2061, 0.0
      %v2073 = vadd.f32 %v2071, %v2072
      %v2074 = vrot.slane %v2073, 4
      %v2075 = vadd.f32 %v2073, %v2074
      %v2076 = vrot.slane %v2075, 2
      %v2077 = vadd.f32 %v2075, %v2076
      %v2078 = vrot.slane %v2077, 1
      %v2079 = vadd.f32 %v2077, %v2078
      %v2080 = vmul.f32 %v2058, %v2058
      %v2081 = vmul.f32 %v2059, %v2059
      %v2082 = vmul.f32 %v2060, %v2060
      %v2083 = vmul.f32 %v2061, %v2061
      %v2084 = vsel %vm1020, %v2080, 0.0
      %v2085 = vsel %vm1020, %v2081, 0.0
      %v2086 = vadd.f32 %v2084, %v2085
      %v2087 = vrot.slane %v2086, 4
      %v2088 = vadd.f32 %v2086, %v2087
      %v2089 = vrot.slane %v2088, 2
      %v2090 = vadd.f32 %v2088, %v2089
      %v2091 = vrot.slane %v2090, 1
      %v2092 = vadd.f32 %v2090, %v2091
      %v2093 = vsel %vm1020, %v2082, 0.0
      %v2094 = vsel %vm1020, %v2083, 0.0
      %v2095 = vadd.f32 %v2093, %v2094
      %v2096 = vrot.slane %v2095, 4
      %v2097 = vadd.f32 %v2095, %v2096
      %v2098 = vrot.slane %v2097, 2
      %v2099 = vadd.f32 %v2097, %v2098
      %v2100 = vrot.slane %v2099, 1
      %v2101 = vadd.f32 %v2099, %v2100
      %v2104 = vsel %vm1063, %v2079, %v2070
      %v2108 = vsel %vm1068, %v2101, %v2092
      %v2110 = vsel %vm1071, %v2104, %v2108
      %v2112 = vsel %vm1020, %v2110, 0
      %2114 = vmatprep.subr.mxu0 0.0
      %2115 = vmatpush1.msra.mxu0 0.0
      %2116 = vmatprep.subr.mxu0 0.0
      %2117 = vmatpush1.msra.mxu0 0.0
      %2118 = vmatprep.subr.mxu0 0.0
      %2119 = vmatpush1.msra.mxu0 0.0
      %2120 = vmatprep.subr.mxu0 0.0
      %2121 = vmatpush1.msra.mxu0 0.0
      %2122 = vmatprep.subr.mxu0 0.0
      %2123 = vmatpush1.msra.mxu0 0.0
      %2124 = vmatprep.subr.mxu0 0.0
      %2125 = vmatpush1.msra.mxu0 0.0
      %2126 = vmatprep.subr.mxu0 0.0
      %2127 = vmatpush1.msra.mxu0 0.0
      %2128 = vmatprep.subr.mxu0 0.0
      %2129 = vmatpush1.msra.mxu0 0.0
      %2130 = vmatprep.subr.mxu0 0.0
      %2131 = vmatpush1.msra.mxu0 0.0
      %2132 = vmatprep.subr.mxu0 0.0
      %2133 = vmatpush1.msra.mxu0 0.0
      %2134 = vmatprep.subr.mxu0 0.0
      %2135 = vmatpush1.msra.mxu0 0.0
      %2136 = vmatprep.subr.mxu0 0.0
      %2137 = vmatpush1.msra.mxu0 0.0
      %2138 = vmatprep.subr.mxu0 0.0
      %2139 = vmatpush1.msra.mxu0 0.0
      %2140 = vmatprep.subr.mxu0 0.0
      %2141 = vmatpush1.msra.mxu0 0.0
      %2142 = vmatprep.subr.mxu0 0.0
      %2143 = vmatpush1.msra.mxu0 %v1074
      %2144 = vmatprep.subr.mxu0 0.0
      %2145 = vmatpush1.msra.mxu0 %v1073
      %2146 = vmatprep.subr.mxu0 0.0
      %2147 = vmatpush2.msra.mxu0 0.0
      %2148 = vmatprep.subr.mxu0 0.0
      %2149 = vmatpush2.msra.mxu0 0.0
      %2150 = vmatprep.subr.mxu0 0.0
      %2151 = vmatpush2.msra.mxu0 0.0
      %2152 = vmatprep.subr.mxu0 0.0
      %2153 = vmatpush2.msra.mxu0 0.0
      %2154 = vmatprep.subr.mxu0 0.0
      %2155 = vmatpush2.msra.mxu0 0.0
      %2156 = vmatprep.subr.mxu0 0.0
      %2157 = vmatpush2.msra.mxu0 0.0
      %2158 = vmatprep.subr.mxu0 0.0
      %2159 = vmatpush2.msra.mxu0 0.0
      %2160 = vmatprep.subr.mxu0 0.0
      %2161 = vmatpush2.msra.mxu0 0.0
      %2162 = vmatprep.subr.mxu0 0.0
      %2163 = vmatpush2.msra.mxu0 0.0
      %2164 = vmatprep.subr.mxu0 0.0
      %2165 = vmatpush2.msra.mxu0 0.0
      %2166 = vmatprep.subr.mxu0 0.0
      %2167 = vmatpush2.msra.mxu0 0.0
      %2168 = vmatprep.subr.mxu0 0.0
      %2169 = vmatpush2.msra.mxu0 0.0
      %2170 = vmatprep.subr.mxu0 0.0
      %2171 = vmatpush2.msra.mxu0 0.0
      %2172 = vmatprep.subr.mxu0 0.0
      %2173 = vmatpush2.msra.mxu0 0.0
      %2174 = vmatprep.subr.mxu0 0.0
      %2175 = vmatpush2.msra.mxu0 0.0
      %2176 = vmatprep.subr.mxu0 0.0
      %2177 = vmatpush2.msra.mxu0 0.0
      %2178 = vmatprep.mubr.f32.mxu0 0.0
      %2179 = vmatmul.mubr.f32.gmra.mxu0 %v2112
      %v2180 = vpop.f32.mrf.mxu0
      %v2181 = vadd.f32 0.0, %v2180
      %v2182 = vpop.f32.mrf.mxu0
      %2183 = vdwg.mxu0
      %v2184 = vmul.f32 %v2181, 0.03125
      %v2185 = vmul.f32 %v2184, %v2184
      %v2187 = vrot.slane %v2185, 6
      %v2189 = vsub.f32 %v2184, %v2187
      %v2190 = vmax.f32 %v2189, 0.0
      %v2191 = vadd.f32 %v2190, 1e-05
      %v2192 = vrsqrt.pop %v2191
      %v2193 = vsub.f32 0.0, %v2184
      %v2195 = vrot.slane %v2192, 2
      %v2197 = vmul.f32 %v2193, %v2195
      %v2199 = vrot.slane %v2197, 6
      %v2201 = vsel %vm1071, %v2195, %v2199
      %v2203 = vsel %vm675, %v2201, 0
      %2205 = vmatprep.subr.mxu0 0.0
      %2206 = vmatpush1.msra.mxu0 0.0
      %2207 = vmatprep.subr.mxu0 0.0
      %2208 = vmatpush1.msra.mxu0 0.0
      %2209 = vmatprep.subr.mxu0 0.0
      %2210 = vmatpush1.msra.mxu0 0.0
      %2211 = vmatprep.subr.mxu0 0.0
      %2212 = vmatpush1.msra.mxu0 0.0
      %2213 = vmatprep.subr.mxu0 0.0
      %2214 = vmatpush1.msra.mxu0 0.0
      %2215 = vmatprep.subr.mxu0 0.0
      %2216 = vmatpush1.msra.mxu0 0.0
      %2217 = vmatprep.subr.mxu0 0.0
      %2218 = vmatpush1.msra.mxu0 0.0
      %2219 = vmatprep.subr.mxu0 0.0
      %2220 = vmatpush1.msra.mxu0 0.0
      %2221 = vmatprep.subr.mxu0 0.0
      %2222 = vmatpush1.msra.mxu0 0.0
      %2223 = vmatprep.subr.mxu0 0.0
      %2224 = vmatpush1.msra.mxu0 0.0
      %2225 = vmatprep.subr.mxu0 0.0
      %2226 = vmatpush1.msra.mxu0 0.0
      %2227 = vmatprep.subr.mxu0 0.0
      %2228 = vmatpush1.msra.mxu0 0.0
      %2229 = vmatprep.subr.mxu0 0.0
      %2230 = vmatpush1.msra.mxu0 0.0
      %2231 = vmatprep.subr.mxu0 0.0
      %2232 = vmatpush1.msra.mxu0 0.0
      %2233 = vmatprep.subr.mxu0 0.0
      %2234 = vmatpush1.msra.mxu0 0.0
      %2235 = vmatprep.subr.mxu0 0.0
      %2236 = vmatpush1.msra.mxu0 %v1166
      %2237 = vmatprep.subr.mxu0 0.0
      %2238 = vmatpush2.msra.mxu0 0.0
      %2239 = vmatprep.subr.mxu0 0.0
      %2240 = vmatpush2.msra.mxu0 0.0
      %2241 = vmatprep.subr.mxu0 0.0
      %2242 = vmatpush2.msra.mxu0 0.0
      %2243 = vmatprep.subr.mxu0 0.0
      %2244 = vmatpush2.msra.mxu0 0.0
      %2245 = vmatprep.subr.mxu0 0.0
      %2246 = vmatpush2.msra.mxu0 0.0
      %2247 = vmatprep.subr.mxu0 0.0
      %2248 = vmatpush2.msra.mxu0 0.0
      %2249 = vmatprep.subr.mxu0 0.0
      %2250 = vmatpush2.msra.mxu0 0.0
      %2251 = vmatprep.subr.mxu0 0.0
      %2252 = vmatpush2.msra.mxu0 0.0
      %2253 = vmatprep.subr.mxu0 0.0
      %2254 = vmatpush2.msra.mxu0 0.0
      %2255 = vmatprep.subr.mxu0 0.0
      %2256 = vmatpush2.msra.mxu0 0.0
      %2257 = vmatprep.subr.mxu0 0.0
      %2258 = vmatpush2.msra.mxu0 0.0
      %2259 = vmatprep.subr.mxu0 0.0
      %2260 = vmatpush2.msra.mxu0 0.0
      %2261 = vmatprep.subr.mxu0 0.0
      %2262 = vmatpush2.msra.mxu0 0.0
      %2263 = vmatprep.subr.mxu0 0.0
      %2264 = vmatpush2.msra.mxu0 0.0
      %2265 = vmatprep.subr.mxu0 0.0
      %2266 = vmatpush2.msra.mxu0 0.0
      %2267 = vmatprep.subr.mxu0 0.0
      %2268 = vmatpush2.msra.mxu0 0.0
      %2269 = vmatprep.mubr.f32.mxu0 0.0
      %2270 = vmatmul.mubr.f32.gmra.mxu0 %v2203
      %v2271 = vpop.f32.mrf.mxu0
      %v2272 = vadd.f32 0.0, %v2271
      %v2273 = vpop.f32.mrf.mxu0
      %2274 = vdwg.mxu0
      %v2275 = vld [vmem:[%s10] sm:$0x1]
      %v2276 = vld [vmem:[%s11] sm:$0x1]
      %v2278 = vlaneseq
      %v2279 = vshrl.u32 %v2278, 7
      %v2280 = vsub.s32 0, %v2279
      %v2281 = vrot.slane %v2275, %v2280
      %v2283 = vmul.f32 %v2272, %v2281
      %v2286 = vunpack.c.l.s4 1966171168
      %v2287 = vunpack.c.0.s8 %v2286
      %v2288 = vlaneseq
      %v2289 = vshrl.u32 %v2288, 7
      %v2290 = vsub.s32 %v2287, %v2289
      %v2291 = vrot.slane %v2283, %v2290
      %v2292 = vcombine.high %v2291, %v2291
      %v2294 = vunpack.c.l.s4 1966171168
      %v2295 = vunpack.c.0.s8 %v2294
      %v2296 = vlaneseq
      %v2297 = vshrl.u32 %v2296, 7
      %v2298 = vsub.s32 %v2295, %v2297
      %v2299 = vrot.slane %v2291, %v2298
      %v2301 = vunpack.c.l.s4 1966171168
      %v2302 = vunpack.c.0.s8 %v2301
      %v2303 = vlaneseq
      %v2304 = vshrl.u32 %v2303, 7
      %v2305 = vsub.s32 %v2302, %v2304
      %v2306 = vrot.slane %v2292, %v2305
      %v2308 = vlaneseq
      %v2309 = vshrl.u32 %v2308, 7
      %v2310 = vsub.s32 0, %v2309
      %v2311 = vrot.slane %v2276, %v2310
      %v2313 = vadd.f32 %v2283, %v2311
      %v2316 = vunpack.c.l.s4 1966171168
      %v2317 = vunpack.c.0.s8 %v2316
      %v2318 = vlaneseq
      %v2319 = vshrl.u32 %v2318, 7
      %v2320 = vsub.s32 %v2317, %v2319
      %v2321 = vrot.slane %v2313, %v2320
      %v2322 = vcombine.high %v2321, %v2321
      %v2324 = vunpack.c.l.s4 1966171168
      %v2325 = vunpack.c.0.s8 %v2324
      %v2326 = vlaneseq
      %v2327 = vshrl.u32 %v2326, 7
      %v2328 = vsub.s32 %v2325, %v2327
      %v2329 = vrot.slane %v2321, %v2328
      %v2331 = vunpack.c.l.s4 1966171168
      %v2332 = vunpack.c.0.s8 %v2331
      %v2333 = vlaneseq
      %v2334 = vshrl.u32 %v2333, 7
      %v2335 = vsub.s32 %v2332, %v2334
      %v2336 = vrot.slane %v2322, %v2335
      %v2337 = vcombine.high %v2329, %v2329
      %v2338 = vcombine.high %v2336, %v2336
      %v2339 = vlaneseq
      %v2340 = vshrl.u32 %v2339, 7
      %v2341 = vsub.s32 0, %v2340
      %v2342 = vrot.slane %v2299, %v2341
      %v2343 = vlaneseq
      %v2344 = vshrl.u32 %v2343, 7
      %v2345 = vsub.s32 0, %v2344
      %v2346 = vrot.slane %v2306, %v2345
      %v2349 = vmul.f32 %v2058, %v2342
      %v2350 = vmul.f32 %v2059, %v2342
      %v2351 = vmul.f32 %v2060, %v2346
      %v2352 = vmul.f32 %v2061, %v2346
      %v2353 = vlaneseq
      %v2354 = vshrl.u32 %v2353, 7
      %v2355 = vsub.s32 0, %v2354
      %v2356 = vrot.slane %v2337, %v2355
      %v2357 = vlaneseq
      %v2358 = vshrl.u32 %v2357, 7
      %v2359 = vsub.s32 0, %v2358
      %v2360 = vrot.slane %v2338, %v2359
      %v2363 = vadd.f32 %v2349, %v2356
      %v2364 = vadd.f32 %v2350, %v2356
      %v2365 = vadd.f32 %v2351, %v2360
      %v2366 = vadd.f32 %v2352, %v2360
      %v2367 = vmin.f32 %v2363, 20.0
      %v2368 = vmin.f32 %v2364, 20.0
      %v2369 = vmin.f32 %v2365, 20.0
      %v2370 = vmin.f32 %v2366, 20.0
      %v2371 = vmul.f32 %v2367, 1.442695
      %v2372 = vpow.pop %v2371
      %v2373 = vmul.f32 %v2368, 1.442695
      %v2374 = vpow.pop %v2373
      %v2375 = vmul.f32 %v2369, 1.442695
      %v2376 = vpow.pop %v2375
      %v2377 = vmul.f32 %v2370, 1.442695
      %v2378 = vpow.pop %v2377
      %v2379 = vadd.f32 %v2372, 1.0
      %v2380 = vadd.f32 %v2374, 1.0
      %v2381 = vadd.f32 %v2376, 1.0
      %v2382 = vadd.f32 %v2378, 1.0
      %v2383 = vmul.f32 %v2379, %v2379
      %v2384 = vmul.f32 %v2380, %v2380
      %v2385 = vmul.f32 %v2381, %v2381
      %v2386 = vmul.f32 %v2382, %v2382
      %v2387 = vadd.f32 %v2383, 1.0
      %v2388 = vadd.f32 %v2384, 1.0
      %v2389 = vadd.f32 %v2385, 1.0
      %v2390 = vadd.f32 %v2386, 1.0
      %v2391 = vrcp.pop %v2387
      %v2392 = vrcp.pop %v2388
      %v2393 = vrcp.pop %v2389
      %v2394 = vrcp.pop %v2390
      %v2395 = vmul.f32 %v2387, %v2391
      %v2396 = vmul.f32 %v2388, %v2392
      %v2397 = vmul.f32 %v2389, %v2393
      %v2398 = vmul.f32 %v2390, %v2394
      %v2399 = vsub.f32 2.0, %v2395
      %v2400 = vsub.f32 2.0, %v2396
      %v2401 = vsub.f32 2.0, %v2397
      %v2402 = vsub.f32 2.0, %v2398
      %v2403 = vmul.f32 %v2391, %v2399
      %v2404 = vmul.f32 %v2392, %v2400
      %v2405 = vmul.f32 %v2393, %v2401
      %v2406 = vmul.f32 %v2394, %v2402
      %v2407 = vsub.f32 %v2383, 1.0
      %v2408 = vsub.f32 %v2384, 1.0
      %v2409 = vsub.f32 %v2385, 1.0
      %v2410 = vsub.f32 %v2386, 1.0
      %v2411 = vmul.f32 %v2363, %v2407
      %v2412 = vmul.f32 %v2364, %v2408
      %v2413 = vmul.f32 %v2365, %v2409
      %v2414 = vmul.f32 %v2366, %v2410
      %v2415 = vmul.f32 %v2411, %v2403
      %v2416 = vmul.f32 %v2412, %v2404
      %v2417 = vmul.f32 %v2413, %v2405
      %v2418 = vmul.f32 %v2414, %v2406
      %v2419 = vld [vmem:[%s16] sm:$0xff]
      %v2420 = vld [vmem:[%s17] sm:$0x1]
      %v2422 = vlaneseq
      %v2423 = vshrl.u32 %v2422, 7
      %v2424 = vsub.s32 0, %v2423
      %v2425 = vrot.slane %v2420, %v2424
      %2427 = vmatprep.subr.mxu0 0.0
      %2428 = vmatpush1.msra.mxu0 0.0
      %2429 = vmatprep.subr.mxu0 0.0
      %2430 = vmatpush1.msra.mxu0 0.0
      %2431 = vmatprep.subr.mxu0 0.0
      %2432 = vmatpush1.msra.mxu0 0.0
      %2433 = vmatprep.subr.mxu0 0.0
      %2434 = vmatpush1.msra.mxu0 0.0
      %2435 = vmatprep.subr.mxu0 0.0
      %2436 = vmatpush1.msra.mxu0 0.0
      %2437 = vmatprep.subr.mxu0 0.0
      %2438 = vmatpush1.msra.mxu0 0.0
      %2439 = vmatprep.subr.mxu0 0.0
      %2440 = vmatpush1.msra.mxu0 0.0
      %2441 = vmatprep.subr.mxu0 0.0
      %2442 = vmatpush1.msra.mxu0 0.0
      %2443 = vmatprep.subr.mxu0 0.0
      %2444 = vmatpush1.msra.mxu0 0.0
      %2445 = vmatprep.subr.mxu0 0.0
      %2446 = vmatpush1.msra.mxu0 0.0
      %2447 = vmatprep.subr.mxu0 0.0
      %2448 = vmatpush1.msra.mxu0 0.0
      %2449 = vmatprep.subr.mxu0 0.0
      %2450 = vmatpush1.msra.mxu0 0.0
      %2451 = vmatprep.subr.mxu0 0.0
      %2452 = vmatpush1.msra.mxu0 0.0
      %2453 = vmatprep.subr.mxu0 0.0
      %2454 = vmatpush1.msra.mxu0 0.0
      %2455 = vmatprep.subr.mxu0 0.0
      %2456 = vmatpush1.msra.mxu0 0.0
      %2457 = vmatprep.subr.mxu0 0.0
      %2458 = vmatpush1.msra.mxu0 %v2419
      %2459 = vmatprep.subr.mxu0 0.0
      %2460 = vmatpush2.msra.mxu0 0.0
      %2461 = vmatprep.subr.mxu0 0.0
      %2462 = vmatpush2.msra.mxu0 0.0
      %2463 = vmatprep.subr.mxu0 0.0
      %2464 = vmatpush2.msra.mxu0 0.0
      %2465 = vmatprep.subr.mxu0 0.0
      %2466 = vmatpush2.msra.mxu0 0.0
      %2467 = vmatprep.subr.mxu0 0.0
      %2468 = vmatpush2.msra.mxu0 0.0
      %2469 = vmatprep.subr.mxu0 0.0
      %2470 = vmatpush2.msra.mxu0 0.0
      %2471 = vmatprep.subr.mxu0 0.0
      %2472 = vmatpush2.msra.mxu0 0.0
      %2473 = vmatprep.subr.mxu0 0.0
      %2474 = vmatpush2.msra.mxu0 0.0
      %2475 = vmatprep.subr.mxu0 0.0
      %2476 = vmatpush2.msra.mxu0 0.0
      %2477 = vmatprep.subr.mxu0 0.0
      %2478 = vmatpush2.msra.mxu0 0.0
      %2479 = vmatprep.subr.mxu0 0.0
      %2480 = vmatpush2.msra.mxu0 0.0
      %2481 = vmatprep.subr.mxu0 0.0
      %2482 = vmatpush2.msra.mxu0 0.0
      %2483 = vmatprep.subr.mxu0 0.0
      %2484 = vmatpush2.msra.mxu0 0.0
      %2485 = vmatprep.subr.mxu0 0.0
      %2486 = vmatpush2.msra.mxu0 0.0
      %2487 = vmatprep.subr.mxu0 0.0
      %2488 = vmatpush2.msra.mxu0 0.0
      %2489 = vmatprep.subr.mxu0 0.0
      %2490 = vmatpush2.msra.mxu0 0.0
      %2491 = vmatprep.mubr.f32.mxu0 0.0
      %2492 = vmatmul.mubr.f32.gmra.mxu0 %v677
      %v2493 = vpop.f32.mrf.mxu0
      %v2494 = vadd.f32 %v2425, %v2493
      %v2495 = vpop.f32.mrf.mxu0
      %2496 = vmatprep.mubr.f32.mxu0 0.0
      %2497 = vmatmul.mubr.f32.gmra.mxu0 %v680
      %v2498 = vpop.f32.mrf.mxu0
      %v2499 = vadd.f32 %v2425, %v2498
      %v2500 = vpop.f32.mrf.mxu0
      %2501 = vmatprep.mubr.f32.mxu0 0.0
      %2502 = vmatmul.mubr.f32.gmra.mxu0 %v683
      %v2503 = vpop.f32.mrf.mxu0
      %v2504 = vadd.f32 %v2425, %v2503
      %v2505 = vpop.f32.mrf.mxu0
      %2506 = vmatprep.mubr.f32.mxu0 0.0
      %2507 = vmatmul.mubr.f32.gmra.mxu0 %v686
      %v2508 = vpop.f32.mrf.mxu0
      %v2509 = vadd.f32 %v2425, %v2508
      %v2510 = vpop.f32.mrf.mxu0
      %2511 = vdwg.mxu0
      %v2512 = vadd.f32 %v2415, %v2494
      %v2513 = vadd.f32 %v2416, %v2499
      %v2514 = vadd.f32 %v2417, %v2504
      %v2515 = vadd.f32 %v2418, %v2509
      %2516 = vst.msk [vmem:[%s577] sm:$0xff] %vm1020, %v2512
      %2517 = vst.msk [vmem:[%s577 + $0x8] sm:$0xff] %vm1020, %v2513
      %2518 = vst.msk [vmem:[%s577 + $0x10] sm:$0xff] %vm1020, %v2514
      %2519 = vst.msk [vmem:[%s577 + $0x18] sm:$0xff] %vm1020, %v2515
      %s2520 = smul.u32 4, %s29
      %p2521 = scmp.lt.s32.totalorder %s2520, 7
      %s2522 = scalar_select %p2521, %s2520, 7
      %s2523 = smul.addr %s2522, 8
      %s2524 = scalar_lea.vmem %s18, %s2523
      // Predicated region
      $region93: #{tpu_custom_call.1} parent=91 // pred_check
        %p2525 = pneg %p430
      $region94: #{tpu_custom_call.1} parent=91 // pred_check_branch
        %2527 = sbr.rel (%p2525) target = $region96
      $region95: #{tpu_custom_call.1} parent=91 // pred_region
        %s2528 = smul.u32 4, %s29
      $region96: #{tpu_custom_call.1} parent=91 // pred_fallthru
        _
    $region92: #{tpu_custom_call.1} parent=5 // pred_fallthru
      _
    %p2529 = scmp.le.s32.totalorder 2, %s24
    // Predicated region
    $region97: #{tpu_custom_call.1} parent=5 // pred_check
      %p2530 = pneg %p2529
    $region98: #{tpu_custom_call.1} parent=5 // pred_check_branch
      %2532 = sbr.rel (%p2530) target = $region100
    $region99: #{tpu_custom_call.1} parent=5 // pred_region
      %s2533 = ssub.s32 %s24, 2
      // Predicated region
      $region101: #{tpu_custom_call.1} parent=99 // pred_check
        %p2534 = pneg %p436
      $region102: #{tpu_custom_call.1} parent=99 // pred_check_branch
        %2536 = sbr.rel (%p2534) target = $region104
      $region103: #{tpu_custom_call.1} parent=99 // pred_region
        %s2537 = smul.u32 4, %s30
        %p2538 = scmp.lt.s32.totalorder %s2537, 7
        %s2539 = scalar_select %p2538, %s2537, 7
        %s2540 = smul.addr %s2539, 8
        %s2541 = scalar_lea.vmem %s18, %s2540
      $region104: #{tpu_custom_call.1} parent=99 // pred_fallthru
        _
    $region100: #{tpu_custom_call.1} parent=5 // pred_fallthru
      _
  $region6: #{tpu_custom_call.1} parent=0 // loop_footer
    %s28 = sadd.s32 1, %s24
  $region7: #{tpu_custom_call.1} parent=0 // loop_footer_branch
    %23 = sbr.rel target = $region3
  $region8: #{tpu_custom_call.1} parent=0 // loop_exit
    _

</llo_original>
